<compile_context>
chip_gen: v7x
topology: tpu7x:2x2x1
jax: 0.10.0
libtpu: 0.0.40
codegen_flags: <defaults>
</compile_context>

<pallas_src>
import functools

import jax
import jax.numpy as jnp
from jax.experimental import pallas as pl
from jax.experimental.pallas import tpu as pltpu

LANE = 128        # lane width: channel-ish dims padded to a multiple of this
STAT_ROWS = 8     # per-tile stats slab: row 0 = focal partials, row 1 = L1


def _round_up(x, m):
    return ((x + m - 1) // m) * m


def _pad2(x, rows, cols):
    r, c = x.shape
    return jnp.pad(x, ((0, rows - r), (0, cols - c)))


# ----------------------------------------------------------------------------
# Fused kernel: conv-as-matmul + ReLU + packed heads + per-tile loss partials
# ----------------------------------------------------------------------------

def _fused_kernel(num_classes, cols_ref, gt_ref, mask_ref, wc_ref, bc_ref,
                  wh_ref, bh_ref, head_ref, stats_ref):
    # 3x3 conv (im2col matmul, unpadded K) + bias + ReLU. bf16 MXU, f32 acc.
    feat = jnp.dot(cols_ref[...], wc_ref[...],
                   preferred_element_type=jnp.float32)
    feat = jnp.maximum(feat + bc_ref[...], 0.0)

    # Both 1x1 heads fused into one lane-dense (hidden_p, 128) weight:
    #   lanes [0, C) = 'hm' logits, [C, C+2) = 'reg', rest = zero padding.
    x = jnp.dot(feat.astype(jnp.bfloat16), wh_ref[...],
                preferred_element_type=jnp.float32) + bh_ref[...]
    head_ref[...] = x.astype(head_ref.dtype)

    # ---- loss partial sums (f32, lane-dense, channel-masked via iota) ------
    gt = gt_ref[...].astype(jnp.float32)               # packed [hm | reg | 0]
    ch = jax.lax.broadcasted_iota(jnp.int32, gt.shape, 1)
    is_hm = ch < num_classes
    hm_f = is_hm.astype(jnp.float32)
    reg_f = ((ch >= num_classes) & (ch < num_classes + 2)).astype(jnp.float32)

    lse = jnp.log(1.0 + jnp.exp(-jnp.abs(x)))           # softplus(-|x|)
    log_p = jnp.minimum(x, 0.0) - lse                   # log(sigmoid(x))
    log_q = -jnp.maximum(x, 0.0) - lse                  # log(1 - sigmoid(x))
    pred = jnp.exp(log_p)                               # sigmoid(x), reuses lse

    pos = jnp.where((gt >= 1.0) & is_hm, 1.0, 0.0)      # exact-peak indicator
    neg = hm_f - pos
    om = 1.0 - gt
    neg_w = (om * om) * (om * om)                       # (1 - gt)^4

    one_m_p = 1.0 - pred
    focal = -(log_p * one_m_p * one_m_p * pos
              + log_q * pred * pred * neg_w * neg)
    rw = mask_ref[...] * reg_f                          # (TM,1)*(TM,128) bcast
    l1 = jnp.abs(x - gt) * rw

    # Per-tile, per-lane partial sums -> one lane-dense (8,128) slab per tile.
    focal_rows = jnp.sum(focal, axis=0, keepdims=True)
    l1_rows = jnp.sum(l1, axis=0, keepdims=True)
    zeros = jnp.zeros((STAT_ROWS - 2, focal.shape[1]), jnp.float32)
    stats_ref[...] = jnp.concatenate([focal_rows, l1_rows, zeros], axis=0)


def fused_forward(cols, gt, mask, wc, bc, wh, bh, num_classes, tm):
    m, k9 = cols.shape
    cp = gt.shape[1]
    hp = wc.shape[1]
    nt = m // tm
    kern = functools.partial(_fused_kernel, num_classes)
    return pl.pallas_call(
        kern,
        out_shape=(
            jax.ShapeDtypeStruct((m, cp), jnp.bfloat16),            # logits
            jax.ShapeDtypeStruct((nt * STAT_ROWS, cp), jnp.float32),  # partials
        ),
        grid_spec=pltpu.PrefetchScalarGridSpec(
            num_scalar_prefetch=0,
            grid=(nt,),
            in_specs=[
                pl.BlockSpec((tm, k9), lambda i: (i, 0)),   # im2col slab (bf16)
                pl.BlockSpec((tm, cp), lambda i: (i, 0)),   # packed gt (bf16)
                pl.BlockSpec((tm, 1), lambda i: (i, 0)),    # object mask (f32)
                pl.BlockSpec((k9, hp), lambda i: (0, 0)),   # conv weight
                pl.BlockSpec((1, hp), lambda i: (0, 0)),    # conv bias
                pl.BlockSpec((hp, cp), lambda i: (0, 0)),   # packed head W
                pl.BlockSpec((1, cp), lambda i: (0, 0)),    # packed head b
            ],
            out_specs=(
                pl.BlockSpec((tm, cp), lambda i: (i, 0)),
                pl.BlockSpec((STAT_ROWS, cp), lambda i: (i, 0)),
            ),
        ),
        compiler_params=pltpu.CompilerParams(
            # Every grid step writes disjoint output blocks and carries no
            # cross-step state, so the row axis can shard across v7x's two
            # TensorCores; single-TC chips just run it sequentially.
            dimension_semantics=("parallel",),
            vmem_limit_bytes=32 * 1024 * 1024,
        ),
    )(cols, gt, mask, wc, bc, wh, bh)


# ----------------------------------------------------------------------------
# XLA-side glue: im2col, target packing, the ModelWithLoss forward
# ----------------------------------------------------------------------------

def im2col3x3(x_nhwc):
    # x: (N, H, W, C), 3x3 conv, stride 1, pad 1 -> (N*H*W, 9*C)
    n, h, w, c = x_nhwc.shape
    xp = jnp.pad(x_nhwc, ((0, 0), (1, 1), (1, 1), (0, 0)))
    cols = []
    for dy in range(3):
        for dx in range(3):
            cols.append(xp[:, dy:dy + h, dx:dx + w, :])
    return jnp.concatenate(cols, axis=-1).reshape(n * h * w, 9 * c)


def _pick_tile(m, tm):
    # Largest multiple-of-8 divisor of m that is <= tm; fall back to the full
    # extent (always a legal block) for awkward M.
    tm = min(tm, m)
    while tm > 8 and m % tm != 0:
        tm -= 8
    if m % tm != 0:
        tm = m
    return tm


def model_with_loss_forward(batch, params, hm_weight=1.0, off_weight=1.0,
                            tm=1024):
    """Equivalent of ModelWithLoss.forward(batch, phase)."""
    img = batch["image"]                       # (N, H, W, Cin)  NHWC
    n, h, w, _ = img.shape
    m = n * h * w
    c = params["num_classes"]
    cp = params["w_heads"].shape[1]

    # ---- model inputs (unpadded K keeps the im2col stream small) ----------
    # TODO(synk): build the 3x3 taps inside the kernel (halo DMA + per-tap
    # accumulate) instead of materializing the im2col slab in HBM.
    cols = im2col3x3(img).astype(jnp.bfloat16)                     # (M, 9*Cin)

    # ---- loss targets packed into one lane-dense bf16 slab + (M,1) mask ---
    hm_gt = batch["hm"].reshape(m, c)
    reg_gt = batch["reg"].reshape(m, 2)
    mask = batch["mask"].reshape(m, 1)                             # f32
    pad = jnp.zeros((m, cp - c - 2), jnp.float32)
    gt_pack = jnp.concatenate([hm_gt, reg_gt, pad], axis=1).astype(jnp.bfloat16)

    # Cheap scalar stats on the small targets (keeps the kernel to two
    # per-tile reductions; consistent with the in-kernel bf16 peak test).
    num_pos = jnp.sum((gt_pack[:, :c] >= 1.0).astype(jnp.float32))
    mask_sum = 2.0 * jnp.sum(mask)

    tm = _pick_tile(m, tm)
    head, stats = fused_forward(cols, gt_pack, mask,
                                params["w_conv"], params["b_conv"],
                                params["w_heads"], params["b_heads"],
                                c, tm)

    stats = stats.reshape(m // tm, STAT_ROWS, cp)
    focal_sum = jnp.sum(stats[:, 0, :])
    l1_sum = jnp.sum(stats[:, 1, :])

    # CenterNet focal: (pos+neg)/num_pos if num_pos>0 else neg; the pos part
    # is exactly zero when num_pos == 0, so one division covers both cases.
    hm_loss = focal_sum / jnp.maximum(num_pos, 1.0)
    reg_loss = l1_sum / (mask_sum + 1e-4)
    total_loss = hm_weight * hm_loss + off_weight * reg_loss

    # outputs[-1]: head dict of the last (only) stack, back in PyTorch NCHW.
    head = head.astype(jnp.float32)
    out_hm = head[:, :c].reshape(n, h, w, c).transpose(0, 3, 1, 2)
    out_reg = head[:, c:c + 2].reshape(n, h, w, 2).transpose(0, 3, 1, 2)
    outputs_last = {"hm": out_hm, "reg": out_reg}

    loss_stats = {"tot": total_loss, "hm": hm_loss, "reg": reg_loss}
    return outputs_last, total_loss, loss_stats


# ----------------------------------------------------------------------------
# Deterministic parameter construction (padded / packed for the MXU)
# ----------------------------------------------------------------------------

def make_params(key, in_ch, hidden, num_classes):
    k = jax.random.split(key, 6)
    w_conv = 0.1 * jax.random.normal(k[0], (9 * in_ch, hidden), jnp.float32)
    b_conv = 0.01 * jax.random.normal(k[1], (1, hidden), jnp.float32)
    w_hm = 0.1 * jax.random.normal(k[2], (hidden, num_classes), jnp.float32)
    b_hm = jnp.full((1, num_classes), -2.19, jnp.float32)   # focal bias init
    w_reg = 0.1 * jax.random.normal(k[4], (hidden, 2), jnp.float32)
    b_reg = 0.01 * jax.random.normal(k[5], (1, 2), jnp.float32)

    hp = _round_up(hidden, LANE)
    cp = _round_up(num_classes + 2, LANE)

    w_heads = jnp.concatenate([w_hm, w_reg], axis=1)         # (hidden, C+2)
    b_heads = jnp.concatenate([b_hm, b_reg], axis=1)         # (1, C+2)

    # Zero padding keeps the math identical to the unpadded model.
    return {
        "num_classes": num_classes,
        "w_conv": _pad2(w_conv, 9 * in_ch, hp).astype(jnp.bfloat16),
        "b_conv": _pad2(b_conv, 1, hp),
        "w_heads": _pad2(w_heads, hp, cp).astype(jnp.bfloat16),
        "b_heads": _pad2(b_heads, 1, cp),
    }


if __name__ == "__main__":
    N, Cin, H, W = 2, 4, 16, 16
    hidden, num_classes = 32, 2

    root = jax.random.PRNGKey(0)
    k_img, k_hm, k_reg, k_par = jax.random.split(root, 4)

    # image in NHWC (PyTorch input would be NCHW (2, 4, 16, 16)).
    image = jax.random.normal(k_img, (N, H, W, Cin), jnp.float32)

    # ground-truth heatmap with two exact peaks, offset targets, peak mask.
    hm_gt = 0.9 * jax.random.uniform(k_hm, (N, H, W, num_classes), jnp.float32)
    hm_gt = hm_gt.at[0, 3, 5, 0].set(1.0).at[1, 10, 7, 1].set(1.0)
    reg_gt = jax.random.uniform(k_reg, (N, H, W, 2), jnp.float32)
    mask = jnp.zeros((N, H, W, 1), jnp.float32)
    mask = mask.at[0, 3, 5, 0].set(1.0).at[1, 10, 7, 0].set(1.0)

    batch = {"image": image, "hm": hm_gt, "reg": reg_gt, "mask": mask}
    params = make_params(k_par, Cin, hidden, num_classes)

    outputs_last, loss, loss_stats = model_with_loss_forward(batch, params)
    jax.block_until_ready((outputs_last, loss, loss_stats))

    assert outputs_last["hm"].shape == (N, num_classes, H, W)
    assert outputs_last["reg"].shape == (N, 2, H, W)
    assert bool(jnp.isfinite(loss))
    print("KERNEL_OK")
</pallas_src>

<mosaic_0001>
module attributes {stable_mosaic.version = 11 : i64} {
  func.func @_fused_kernel(%arg0: i32, %arg1: memref<512x36xbf16, #tpu.memory_space<vmem>>, %arg2: memref<512x128xbf16, #tpu.memory_space<vmem>>, %arg3: memref<512x1xf32, #tpu.memory_space<vmem>>, %arg4: memref<36x128xbf16, #tpu.memory_space<vmem>>, %arg5: memref<1x128xf32, #tpu.memory_space<vmem>>, %arg6: memref<128x128xbf16, #tpu.memory_space<vmem>>, %arg7: memref<1x128xf32, #tpu.memory_space<vmem>>, %arg8: memref<512x128xbf16, #tpu.memory_space<vmem>>, %arg9: memref<8x128xf32, #tpu.memory_space<vmem>>) attributes {dimension_semantics = [#tpu.dimension_semantics<parallel>], iteration_bounds = array<i64: 1>, scalar_prefetch = 0 : i64, scratch_operands = 0 : i64, tpu.core_type = #tpu.core_type<tc>, window_params = [{transform_indices = @transform_0, window_bounds = array<i64: 512, 36>}, {transform_indices = @transform_1, window_bounds = array<i64: 512, 128>}, {transform_indices = @transform_2, window_bounds = array<i64: 512, 1>}, {pipeline_mode = #tpu.pipeline_mode<synchronous>, transform_indices = @transform_3, window_bounds = array<i64: 36, 128>}, {pipeline_mode = #tpu.pipeline_mode<synchronous>, transform_indices = @transform_4, window_bounds = array<i64: 1, 128>}, {pipeline_mode = #tpu.pipeline_mode<synchronous>, transform_indices = @transform_5, window_bounds = array<i64: 128, 128>}, {pipeline_mode = #tpu.pipeline_mode<synchronous>, transform_indices = @transform_6, window_bounds = array<i64: 1, 128>}, {transform_indices = @transform_7, window_bounds = array<i64: 512, 128>}, {transform_indices = @transform_8, window_bounds = array<i64: 8, 128>}]} {
    %c0 = arith.constant 0 : index
    %c0_0 = arith.constant 0 : index
    %0 = vector.load %arg1[%c0, %c0_0] : memref<512x36xbf16, #tpu.memory_space<vmem>>, vector<512x36xbf16>
    %c0_1 = arith.constant 0 : index
    %c0_2 = arith.constant 0 : index
    %1 = vector.load %arg4[%c0_1, %c0_2] : memref<36x128xbf16, #tpu.memory_space<vmem>>, vector<36x128xbf16>
    %cst = arith.constant dense<0.000000e+00> : vector<512x128xf32>
    %2 = tpu.matmul %0, %1, %cst {dimension_numbers = #tpu.dot_dimension_numbers<[1], [0], [0], [1], [0, 0, 1, 1], [], []>} : vector<512x36xbf16>, vector<36x128xbf16>, vector<512x128xf32> -> vector<512x128xf32>
    %c0_3 = arith.constant 0 : index
    %c0_4 = arith.constant 0 : index
    %3 = vector.load %arg5[%c0_3, %c0_4] : memref<1x128xf32, #tpu.memory_space<vmem>>, vector<1x128xf32>
    %4 = vector.broadcast %3 : vector<1x128xf32> to vector<512x128xf32>
    %5 = arith.addf %2, %4 : vector<512x128xf32>
    %cst_5 = arith.constant 0.000000e+00 : f32
    %6 = vector.broadcast %cst_5 : f32 to vector<512x128xf32>
    %7 = arith.maximumf %5, %6 : vector<512x128xf32>
    %8 = arith.truncf %7 : vector<512x128xf32> to vector<512x128xbf16>
    %c0_6 = arith.constant 0 : index
    %c0_7 = arith.constant 0 : index
    %9 = vector.load %arg6[%c0_6, %c0_7] : memref<128x128xbf16, #tpu.memory_space<vmem>>, vector<128x128xbf16>
    %cst_8 = arith.constant dense<0.000000e+00> : vector<512x128xf32>
    %10 = tpu.matmul %8, %9, %cst_8 {dimension_numbers = #tpu.dot_dimension_numbers<[1], [0], [0], [1], [0, 0, 1, 1], [], []>} : vector<512x128xbf16>, vector<128x128xbf16>, vector<512x128xf32> -> vector<512x128xf32>
    %c0_9 = arith.constant 0 : index
    %c0_10 = arith.constant 0 : index
    %11 = vector.load %arg7[%c0_9, %c0_10] : memref<1x128xf32, #tpu.memory_space<vmem>>, vector<1x128xf32>
    %12 = vector.broadcast %11 : vector<1x128xf32> to vector<512x128xf32>
    %13 = arith.addf %10, %12 : vector<512x128xf32>
    %14 = arith.truncf %13 : vector<512x128xf32> to vector<512x128xbf16>
    %c0_11 = arith.constant 0 : index
    %c0_12 = arith.constant 0 : index
    %15 = vector.load %arg8[%c0_11, %c0_12] : memref<512x128xbf16, #tpu.memory_space<vmem>>, vector<512x128xbf16>
    tpu.vector_store %arg8[%c0_11, %c0_12], %14 {strides = array<i32>} : memref<512x128xbf16, #tpu.memory_space<vmem>>, vector<512x128xbf16>,
    %c0_13 = arith.constant 0 : index
    %c0_14 = arith.constant 0 : index
    %16 = vector.load %arg2[%c0_13, %c0_14] : memref<512x128xbf16, #tpu.memory_space<vmem>>, vector<512x128xbf16>
    %17 = arith.extf %16 : vector<512x128xbf16> to vector<512x128xf32>
    %18 = tpu.iota {dimensions = array<i32: 1>} : vector<512x128xi32>
    %c2_i32 = arith.constant 2 : i32
    %19 = vector.broadcast %c2_i32 : i32 to vector<512x128xi32>
    %20 = arith.cmpi slt, %18, %19 : vector<512x128xi32>
    %21 = arith.extui %20 : vector<512x128xi1> to vector<512x128xi32>
    %22 = arith.sitofp %21 : vector<512x128xi32> to vector<512x128xf32>
    %c2_i32_15 = arith.constant 2 : i32
    %23 = vector.broadcast %c2_i32_15 : i32 to vector<512x128xi32>
    %24 = arith.cmpi sge, %18, %23 : vector<512x128xi32>
    %c4_i32 = arith.constant 4 : i32
    %25 = vector.broadcast %c4_i32 : i32 to vector<512x128xi32>
    %26 = arith.cmpi slt, %18, %25 : vector<512x128xi32>
    %27 = arith.andi %24, %26 : vector<512x128xi1>
    %28 = arith.extui %27 : vector<512x128xi1> to vector<512x128xi32>
    %29 = arith.sitofp %28 : vector<512x128xi32> to vector<512x128xf32>
    %30 = math.absf %13 : vector<512x128xf32>
    %cst_16 = arith.constant 0.000000e+00 : f32
    %31 = vector.broadcast %cst_16 : f32 to vector<512x128xf32>
    %32 = arith.subf %31, %30 : vector<512x128xf32>
    %33 = math.exp %32 : vector<512x128xf32>
    %cst_17 = arith.constant 1.000000e+00 : f32
    %34 = vector.broadcast %cst_17 : f32 to vector<512x128xf32>
    %35 = arith.addf %34, %33 : vector<512x128xf32>
    %36 = math.log %35 : vector<512x128xf32>
    %cst_18 = arith.constant 0.000000e+00 : f32
    %37 = vector.broadcast %cst_18 : f32 to vector<512x128xf32>
    %38 = arith.minimumf %13, %37 : vector<512x128xf32>
    %39 = arith.subf %38, %36 : vector<512x128xf32>
    %cst_19 = arith.constant 0.000000e+00 : f32
    %40 = vector.broadcast %cst_19 : f32 to vector<512x128xf32>
    %41 = arith.maximumf %13, %40 : vector<512x128xf32>
    %cst_20 = arith.constant 0.000000e+00 : f32
    %42 = vector.broadcast %cst_20 : f32 to vector<512x128xf32>
    %43 = arith.subf %42, %41 : vector<512x128xf32>
    %44 = arith.subf %43, %36 : vector<512x128xf32>
    %45 = math.exp %39 : vector<512x128xf32>
    %cst_21 = arith.constant 1.000000e+00 : f32
    %46 = vector.broadcast %cst_21 : f32 to vector<512x128xf32>
    %47 = arith.cmpf oge, %17, %46 : vector<512x128xf32>
    %48 = arith.andi %47, %20 : vector<512x128xi1>
    %cst_22 = arith.constant 1.000000e+00 : f32
    %cst_23 = arith.constant 0.000000e+00 : f32
    %49 = vector.broadcast %cst_22 : f32 to vector<512x128xf32>
    %50 = vector.broadcast %cst_23 : f32 to vector<512x128xf32>
    %51 = arith.select %48, %49, %50 : vector<512x128xi1>, vector<512x128xf32>
    %52 = arith.subf %22, %51 : vector<512x128xf32>
    %cst_24 = arith.constant 1.000000e+00 : f32
    %53 = vector.broadcast %cst_24 : f32 to vector<512x128xf32>
    %54 = arith.subf %53, %17 : vector<512x128xf32>
    %55 = arith.mulf %54, %54 : vector<512x128xf32>
    %56 = arith.mulf %54, %54 : vector<512x128xf32>
    %57 = arith.mulf %55, %56 : vector<512x128xf32>
    %cst_25 = arith.constant 1.000000e+00 : f32
    %58 = vector.broadcast %cst_25 : f32 to vector<512x128xf32>
    %59 = arith.subf %58, %45 : vector<512x128xf32>
    %60 = arith.mulf %39, %59 : vector<512x128xf32>
    %61 = arith.mulf %60, %59 : vector<512x128xf32>
    %62 = arith.mulf %61, %51 : vector<512x128xf32>
    %63 = arith.mulf %44, %45 : vector<512x128xf32>
    %64 = arith.mulf %63, %45 : vector<512x128xf32>
    %65 = arith.mulf %64, %57 : vector<512x128xf32>
    %66 = arith.mulf %65, %52 : vector<512x128xf32>
    %67 = arith.addf %62, %66 : vector<512x128xf32>
    %cst_26 = arith.constant 0.000000e+00 : f32
    %68 = vector.broadcast %cst_26 : f32 to vector<512x128xf32>
    %69 = arith.subf %68, %67 : vector<512x128xf32>
    %c0_27 = arith.constant 0 : index
    %c0_28 = arith.constant 0 : index
    %70 = vector.load %arg3[%c0_27, %c0_28] : memref<512x1xf32, #tpu.memory_space<vmem>>, vector<512x1xf32>
    %71 = vector.broadcast %70 : vector<512x1xf32> to vector<512x128xf32>
    %72 = arith.mulf %71, %29 : vector<512x128xf32>
    %73 = arith.subf %13, %17 : vector<512x128xf32>
    %74 = math.absf %73 : vector<512x128xf32>
    %75 = arith.mulf %74, %72 : vector<512x128xf32>
    %cst_29 = arith.constant dense<0.000000e+00> : vector<128xf32>
    %76 = vector.multi_reduction <add>, %69, %cst_29 [0] : vector<512x128xf32> to vector<128xf32>
    %77 = vector.shape_cast %76 : vector<128xf32> to vector<1x128xf32>
    %cst_30 = arith.constant dense<0.000000e+00> : vector<128xf32>
    %78 = vector.multi_reduction <add>, %75, %cst_30 [0] : vector<512x128xf32> to vector<128xf32>
    %79 = vector.shape_cast %78 : vector<128xf32> to vector<1x128xf32>
    %cst_31 = arith.constant 0.000000e+00 : f32
    %80 = vector.broadcast %cst_31 : f32 to vector<6x128xf32>
    %81 = tpu.concatenate %77, %79, %80 in 0 : vector<1x128xf32>, vector<1x128xf32>, vector<6x128xf32> -> vector<8x128xf32>
    %c0_32 = arith.constant 0 : index
    %c0_33 = arith.constant 0 : index
    %82 = vector.load %arg9[%c0_32, %c0_33] : memref<8x128xf32, #tpu.memory_space<vmem>>, vector<8x128xf32>
    tpu.vector_store %arg9[%c0_32, %c0_33], %81 {strides = array<i32>} : memref<8x128xf32, #tpu.memory_space<vmem>>, vector<8x128xf32>,
    return
  }
  func.func @transform_0(%arg0: i32) -> (i32, i32) {
    %c0_i32 = arith.constant 0 : i32
    %c0_i32_0 = arith.constant 0 : i32
    return %arg0, %c0_i32 : i32, i32
  }
  func.func @transform_1(%arg0: i32) -> (i32, i32) {
    %c0_i32 = arith.constant 0 : i32
    %c0_i32_0 = arith.constant 0 : i32
    return %arg0, %c0_i32 : i32, i32
  }
  func.func @transform_2(%arg0: i32) -> (i32, i32) {
    %c0_i32 = arith.constant 0 : i32
    %c0_i32_0 = arith.constant 0 : i32
    return %arg0, %c0_i32 : i32, i32
  }
  func.func @transform_3(%arg0: i32) -> (i32, i32) {
    %c0_i32 = arith.constant 0 : i32
    %c0_i32_0 = arith.constant 0 : i32
    %c0_i32_1 = arith.constant 0 : i32
    return %c0_i32, %c0_i32_0 : i32, i32
  }
  func.func @transform_4(%arg0: i32) -> (i32, i32) {
    %c0_i32 = arith.constant 0 : i32
    %c0_i32_0 = arith.constant 0 : i32
    %c0_i32_1 = arith.constant 0 : i32
    return %c0_i32, %c0_i32_0 : i32, i32
  }
  func.func @transform_5(%arg0: i32) -> (i32, i32) {
    %c0_i32 = arith.constant 0 : i32
    %c0_i32_0 = arith.constant 0 : i32
    %c0_i32_1 = arith.constant 0 : i32
    return %c0_i32, %c0_i32_0 : i32, i32
  }
  func.func @transform_6(%arg0: i32) -> (i32, i32) {
    %c0_i32 = arith.constant 0 : i32
    %c0_i32_0 = arith.constant 0 : i32
    %c0_i32_1 = arith.constant 0 : i32
    return %c0_i32, %c0_i32_0 : i32, i32
  }
  func.func @transform_7(%arg0: i32) -> (i32, i32) {
    %c0_i32 = arith.constant 0 : i32
    %c0_i32_0 = arith.constant 0 : i32
    return %arg0, %c0_i32 : i32, i32
  }
  func.func @transform_8(%arg0: i32) -> (i32, i32) {
    %c0_i32 = arith.constant 0 : i32
    %c0_i32_0 = arith.constant 0 : i32
    return %arg0, %c0_i32 : i32, i32
  }
}

</mosaic_0001>

<llo_original>
// kernel: tpu_custom_call.1
$region0: #{tpu_custom_call.1}
  #allocation0 [shape = 'u32[]', space=smem, size = 0x4, offset = 0x4, fixed_abs, tag = 'smem constant byte address 0x4 - core index']
  #allocation1 [shape = 'u32[144,128]{1,0:T(1,128)}', space=vmem, size = 0x12000, scoped, tag = 'internal scratch']
  %s0 = inlined_call_operand.vmem [shape: bf16[512,36], index: 0, kind: input, shape index: {}]
  %s1 = inlined_call_operand.vmem [shape: bf16[512,128], index: 1, kind: input, shape index: {}]
  %s2 = inlined_call_operand.vmem [shape: f32[512,1], index: 2, kind: input, shape index: {}]
  %s3 = inlined_call_operand.vmem [shape: bf16[36,128], index: 3, kind: input, shape index: {}]
  %s4 = inlined_call_operand.vmem [shape: f32[1,128], index: 4, kind: input, shape index: {}]
  %s5 = inlined_call_operand.vmem [shape: bf16[128,128], index: 5, kind: input, shape index: {}]
  %s6 = inlined_call_operand.vmem [shape: f32[1,128], index: 6, kind: input, shape index: {}]
  %s7 = inlined_call_operand.hbm [shape: bf16[512,128], index: 7, kind: output, shape index: {0}]
  %s8 = inlined_call_operand.hbm [shape: f32[8,128], index: 8, kind: output, shape index: {1}]
  %9 = xla_tuple %s7, %s8
  %s10 = sld [smem:[#allocation0]]
  $region46: #{tpu_custom_call.1} parent=0
    _
  %s12 = ssub.s32 1, %s10
  %s13 = scalar_select 0, %s12, %s10
  $region1: #{tpu_custom_call.1} parent=0
    #allocation2 [shape = 'u8[131072]{0}', space=vmem, size = 0x20000, scoped, tag = 'output window, operand 0, single buffered']
    #allocation3 [shape = 's32[1]{0}', space=sflag, size = 0x4, scoped, tag = 'scoped memory for tpu_custom_call.1']
    #allocation4 [shape = 'u8[4096]{0}', space=vmem, size = 0x1000, scoped, tag = 'output window, operand 1, single buffered']
    #allocation5 [shape = 's32[1]{0}', space=sflag, size = 0x4, scoped, tag = 'scoped memory for tpu_custom_call.1']
    %14 = vsyncpa [#allocation3], 0
    %15 = vsyncpa [#allocation5], 0
    // Predicated region
    $region2: #{tpu_custom_call.1} parent=1 // pred_check
      _
    $region3: #{tpu_custom_call.1} parent=1 // pred_check_branch
      %17 = sbr.rel (0) target = $region5
    $region4: #{tpu_custom_call.1} parent=1 // pred_region
      _
    $region5: #{tpu_custom_call.1} parent=1 // pred_fallthru
      _
    // Predicated region
    $region6: #{tpu_custom_call.1} parent=1 // pred_check
      _
    $region7: #{tpu_custom_call.1} parent=1 // pred_check_branch
      %19 = sbr.rel (0) target = $region9
    $region8: #{tpu_custom_call.1} parent=1 // pred_region
      _
    $region9: #{tpu_custom_call.1} parent=1 // pred_fallthru
      _
    // Predicated region
    $region10: #{tpu_custom_call.1} parent=1 // pred_check
      _
    $region11: #{tpu_custom_call.1} parent=1 // pred_check_branch
      %21 = sbr.rel (0) target = $region13
    $region12: #{tpu_custom_call.1} parent=1 // pred_region
      _
    $region13: #{tpu_custom_call.1} parent=1 // pred_fallthru
      _
    // Predicated region
    $region14: #{tpu_custom_call.1} parent=1 // pred_check
      _
    $region15: #{tpu_custom_call.1} parent=1 // pred_check_branch
      %23 = sbr.rel (0) target = $region17
    $region16: #{tpu_custom_call.1} parent=1 // pred_region
      _
    $region17: #{tpu_custom_call.1} parent=1 // pred_fallthru
      _
    // Predicated region
    $region18: #{tpu_custom_call.1} parent=1 // pred_check
      _
    $region19: #{tpu_custom_call.1} parent=1 // pred_check_branch
      %25 = sbr.rel (0) target = $region21
    $region20: #{tpu_custom_call.1} parent=1 // pred_region
      _
    $region21: #{tpu_custom_call.1} parent=1 // pred_fallthru
      _
    // Predicated region
    $region22: #{tpu_custom_call.1} parent=1 // pred_check
      _
    $region23: #{tpu_custom_call.1} parent=1 // pred_check_branch
      %27 = sbr.rel (0) target = $region25
    $region24: #{tpu_custom_call.1} parent=1 // pred_region
      _
    $region25: #{tpu_custom_call.1} parent=1 // pred_fallthru
      _
    // Predicated region
    $region26: #{tpu_custom_call.1} parent=1 // pred_check
      _
    $region27: #{tpu_custom_call.1} parent=1 // pred_check_branch
      %29 = sbr.rel (0) target = $region29
    $region28: #{tpu_custom_call.1} parent=1 // pred_region
      _
    $region29: #{tpu_custom_call.1} parent=1 // pred_fallthru
      _
    %v31 = vld [vmem:[%s0] sm:$0xf]
    %v32 = vld [vmem:[%s0 + $0x4] sm:$0xf]
    %v33 = vld [vmem:[%s0 + $0x8] sm:$0xf]
    %v34 = vld [vmem:[%s0 + $0xc] sm:$0xf]
    %v35 = vld [vmem:[%s0 + $0x10] sm:$0xf]
    %v36 = vld [vmem:[%s0 + $0x14] sm:$0xf]
    %v37 = vld [vmem:[%s0 + $0x18] sm:$0xf]
    %v38 = vld [vmem:[%s0 + $0x1c] sm:$0xf]
    %v39 = vld [vmem:[%s0 + $0x20] sm:$0xf]
    %v40 = vld [vmem:[%s0 + $0x24] sm:$0xf]
    %v41 = vld [vmem:[%s0 + $0x28] sm:$0xf]
    %v42 = vld [vmem:[%s0 + $0x2c] sm:$0xf]
    %v43 = vld [vmem:[%s0 + $0x30] sm:$0xf]
    %v44 = vld [vmem:[%s0 + $0x34] sm:$0xf]
    %v45 = vld [vmem:[%s0 + $0x38] sm:$0xf]
    %v46 = vld [vmem:[%s0 + $0x3c] sm:$0xf]
    %v47 = vld [vmem:[%s0 + $0x40] sm:$0xf]
    %v48 = vld [vmem:[%s0 + $0x44] sm:$0xf]
    %v49 = vld [vmem:[%s0 + $0x48] sm:$0xf]
    %v50 = vld [vmem:[%s0 + $0x4c] sm:$0xf]
    %v51 = vld [vmem:[%s0 + $0x50] sm:$0xf]
    %v52 = vld [vmem:[%s0 + $0x54] sm:$0xf]
    %v53 = vld [vmem:[%s0 + $0x58] sm:$0xf]
    %v54 = vld [vmem:[%s0 + $0x5c] sm:$0xf]
    %v55 = vld [vmem:[%s0 + $0x60] sm:$0xf]
    %v56 = vld [vmem:[%s0 + $0x64] sm:$0xf]
    %v57 = vld [vmem:[%s0 + $0x68] sm:$0xf]
    %v58 = vld [vmem:[%s0 + $0x6c] sm:$0xf]
    %v59 = vld [vmem:[%s0 + $0x70] sm:$0xf]
    %v60 = vld [vmem:[%s0 + $0x74] sm:$0xf]
    %v61 = vld [vmem:[%s0 + $0x78] sm:$0xf]
    %v62 = vld [vmem:[%s0 + $0x7c] sm:$0xf]
    %v63 = vld [vmem:[%s0 + $0x80] sm:$0xf]
    %v64 = vld [vmem:[%s0 + $0x84] sm:$0xf]
    %v65 = vld [vmem:[%s0 + $0x88] sm:$0xf]
    %v66 = vld [vmem:[%s0 + $0x8c] sm:$0xf]
    %v67 = vld [vmem:[%s0 + $0x90] sm:$0xf]
    %v68 = vld [vmem:[%s0 + $0x94] sm:$0xf]
    %v69 = vld [vmem:[%s0 + $0x98] sm:$0xf]
    %v70 = vld [vmem:[%s0 + $0x9c] sm:$0xf]
    %v71 = vld [vmem:[%s0 + $0xa0] sm:$0xf]
    %v72 = vld [vmem:[%s0 + $0xa4] sm:$0xf]
    %v73 = vld [vmem:[%s0 + $0xa8] sm:$0xf]
    %v74 = vld [vmem:[%s0 + $0xac] sm:$0xf]
    %v75 = vld [vmem:[%s0 + $0xb0] sm:$0xf]
    %v76 = vld [vmem:[%s0 + $0xb4] sm:$0xf]
    %v77 = vld [vmem:[%s0 + $0xb8] sm:$0xf]
    %v78 = vld [vmem:[%s0 + $0xbc] sm:$0xf]
    %v79 = vld [vmem:[%s0 + $0xc0] sm:$0xf]
    %v80 = vld [vmem:[%s0 + $0xc4] sm:$0xf]
    %v81 = vld [vmem:[%s0 + $0xc8] sm:$0xf]
    %v82 = vld [vmem:[%s0 + $0xcc] sm:$0xf]
    %v83 = vld [vmem:[%s0 + $0xd0] sm:$0xf]
    %v84 = vld [vmem:[%s0 + $0xd4] sm:$0xf]
    %v85 = vld [vmem:[%s0 + $0xd8] sm:$0xf]
    %v86 = vld [vmem:[%s0 + $0xdc] sm:$0xf]
    %v87 = vld [vmem:[%s0 + $0xe0] sm:$0xf]
    %v88 = vld [vmem:[%s0 + $0xe4] sm:$0xf]
    %v89 = vld [vmem:[%s0 + $0xe8] sm:$0xf]
    %v90 = vld [vmem:[%s0 + $0xec] sm:$0xf]
    %v91 = vld [vmem:[%s0 + $0xf0] sm:$0xf]
    %v92 = vld [vmem:[%s0 + $0xf4] sm:$0xf]
    %v93 = vld [vmem:[%s0 + $0xf8] sm:$0xf]
    %v94 = vld [vmem:[%s0 + $0xfc] sm:$0xf]
    %v95 = vld [vmem:[%s3] sm:$0xf]
    %v96 = vld [vmem:[%s3 + $0x4] sm:$0xf]
    %v97 = vld [vmem:[%s3 + $0x8] sm:$0xf]
    %v98 = vld [vmem:[%s3 + $0xc] sm:$0xf]
    %v99 = vld [vmem:[%s3 + $0x10] sm:$0x3]
    %v100 = vld [vmem:[%s4] sm:$0x1]
    %v102 = vlaneseq
    %v103 = vshrl.u32 %v102, 7
    %v104 = vsub.s32 0, %v103
    %v105 = vrot.slane %v100, %v104
    %v171 = vunpack.c.l.b16 %v31
    %v172 = vunpack.c.l.b16 %v32
    %v173 = vunpack.c.l.b16 %v33
    %v174 = vunpack.c.l.b16 %v34
    %v175 = vunpack.c.l.b16 %v35
    %v176 = vunpack.c.l.b16 %v36
    %v177 = vunpack.c.l.b16 %v37
    %v178 = vunpack.c.l.b16 %v38
    %v179 = vunpack.c.l.b16 %v39
    %v180 = vunpack.c.l.b16 %v40
    %v181 = vunpack.c.l.b16 %v41
    %v182 = vunpack.c.l.b16 %v42
    %v183 = vunpack.c.l.b16 %v43
    %v184 = vunpack.c.l.b16 %v44
    %v185 = vunpack.c.l.b16 %v45
    %v186 = vunpack.c.l.b16 %v46
    %v187 = vunpack.c.l.b16 %v47
    %v188 = vunpack.c.l.b16 %v48
    %v189 = vunpack.c.l.b16 %v49
    %v190 = vunpack.c.l.b16 %v50
    %v191 = vunpack.c.l.b16 %v51
    %v192 = vunpack.c.l.b16 %v52
    %v193 = vunpack.c.l.b16 %v53
    %v194 = vunpack.c.l.b16 %v54
    %v195 = vunpack.c.l.b16 %v55
    %v196 = vunpack.c.l.b16 %v56
    %v197 = vunpack.c.l.b16 %v57
    %v198 = vunpack.c.l.b16 %v58
    %v199 = vunpack.c.l.b16 %v59
    %v200 = vunpack.c.l.b16 %v60
    %v201 = vunpack.c.l.b16 %v61
    %v202 = vunpack.c.l.b16 %v62
    %v203 = vunpack.c.l.b16 %v63
    %v204 = vunpack.c.l.b16 %v64
    %v205 = vunpack.c.l.b16 %v65
    %v206 = vunpack.c.l.b16 %v66
    %v207 = vunpack.c.l.b16 %v67
    %v208 = vunpack.c.l.b16 %v68
    %v209 = vunpack.c.l.b16 %v69
    %v210 = vunpack.c.l.b16 %v70
    %v211 = vunpack.c.l.b16 %v71
    %v212 = vunpack.c.l.b16 %v72
    %v213 = vunpack.c.l.b16 %v73
    %v214 = vunpack.c.l.b16 %v74
    %v215 = vunpack.c.l.b16 %v75
    %v216 = vunpack.c.l.b16 %v76
    %v217 = vunpack.c.l.b16 %v77
    %v218 = vunpack.c.l.b16 %v78
    %v219 = vunpack.c.l.b16 %v79
    %v220 = vunpack.c.l.b16 %v80
    %v221 = vunpack.c.l.b16 %v81
    %v222 = vunpack.c.l.b16 %v82
    %v223 = vunpack.c.l.b16 %v83
    %v224 = vunpack.c.l.b16 %v84
    %v225 = vunpack.c.l.b16 %v85
    %v226 = vunpack.c.l.b16 %v86
    %v227 = vunpack.c.l.b16 %v87
    %v228 = vunpack.c.l.b16 %v88
    %v229 = vunpack.c.l.b16 %v89
    %v230 = vunpack.c.l.b16 %v90
    %v231 = vunpack.c.l.b16 %v91
    %v232 = vunpack.c.l.b16 %v92
    %v233 = vunpack.c.l.b16 %v93
    %v234 = vunpack.c.l.b16 %v94
    %v235 = vpack.c.b16 %v172, %v171
    %v236 = vpack.c.b16 %v174, %v173
    %v237 = vpack.c.b16 %v176, %v175
    %v238 = vpack.c.b16 %v178, %v177
    %v239 = vpack.c.b16 %v180, %v179
    %v240 = vpack.c.b16 %v182, %v181
    %v241 = vpack.c.b16 %v184, %v183
    %v242 = vpack.c.b16 %v186, %v185
    %v243 = vpack.c.b16 %v188, %v187
    %v244 = vpack.c.b16 %v190, %v189
    %v245 = vpack.c.b16 %v192, %v191
    %v246 = vpack.c.b16 %v194, %v193
    %v247 = vpack.c.b16 %v196, %v195
    %v248 = vpack.c.b16 %v198, %v197
    %v249 = vpack.c.b16 %v200, %v199
    %v250 = vpack.c.b16 %v202, %v201
    %v251 = vpack.c.b16 %v204, %v203
    %v252 = vpack.c.b16 %v206, %v205
    %v253 = vpack.c.b16 %v208, %v207
    %v254 = vpack.c.b16 %v210, %v209
    %v255 = vpack.c.b16 %v212, %v211
    %v256 = vpack.c.b16 %v214, %v213
    %v257 = vpack.c.b16 %v216, %v215
    %v258 = vpack.c.b16 %v218, %v217
    %v259 = vpack.c.b16 %v220, %v219
    %v260 = vpack.c.b16 %v222, %v221
    %v261 = vpack.c.b16 %v224, %v223
    %v262 = vpack.c.b16 %v226, %v225
    %v263 = vpack.c.b16 %v228, %v227
    %v264 = vpack.c.b16 %v230, %v229
    %v265 = vpack.c.b16 %v232, %v231
    %v266 = vpack.c.b16 %v234, %v233
    %v272 = vunpack.c.l.b16 %v95
    %v273 = vunpack.c.l.b16 %v96
    %v274 = vunpack.c.l.b16 %v97
    %v275 = vunpack.c.l.b16 %v98
    %v276 = vunpack.c.l.b16 %v99
    %v277 = vpack.c.b16 %v273, %v272
    %v278 = vpack.c.b16 %v275, %v274
    %v279 = vpack.c.b16 %v276, %v276
    %vm282 = vcmask 293888
    %v284 = vsel %vm282, %v235, 0
    %v287 = vsel %vm282, %v236, 0
    %v290 = vsel %vm282, %v237, 0
    %v293 = vsel %vm282, %v238, 0
    %v296 = vsel %vm282, %v239, 0
    %v299 = vsel %vm282, %v240, 0
    %v302 = vsel %vm282, %v241, 0
    %v305 = vsel %vm282, %v242, 0
    %v308 = vsel %vm282, %v243, 0
    %v311 = vsel %vm282, %v244, 0
    %v314 = vsel %vm282, %v245, 0
    %v317 = vsel %vm282, %v246, 0
    %v320 = vsel %vm282, %v247, 0
    %v323 = vsel %vm282, %v248, 0
    %v326 = vsel %vm282, %v249, 0
    %v329 = vsel %vm282, %v250, 0
    %v332 = vsel %vm282, %v251, 0
    %v335 = vsel %vm282, %v252, 0
    %v338 = vsel %vm282, %v253, 0
    %v341 = vsel %vm282, %v254, 0
    %v344 = vsel %vm282, %v255, 0
    %v347 = vsel %vm282, %v256, 0
    %v350 = vsel %vm282, %v257, 0
    %v353 = vsel %vm282, %v258, 0
    %v356 = vsel %vm282, %v259, 0
    %v359 = vsel %vm282, %v260, 0
    %v362 = vsel %vm282, %v261, 0
    %v365 = vsel %vm282, %v262, 0
    %v368 = vsel %vm282, %v263, 0
    %v371 = vsel %vm282, %v264, 0
    %v374 = vsel %vm282, %v265, 0
    %v377 = vsel %vm282, %v266, 0
    %vm379 = vcmask 1041408
    %v381 = vsel %vm379, %v279, 0
    %383 = vmatprep.subr.bf16.mxu0 0
    %384 = vmatpush1.bf16.msra.mxu0 %v277
    %385 = vmatprep.subr.bf16.mxu0 0
    %386 = vmatpush1.bf16.msra.mxu0 %v278
    %387 = vmatprep.subr.bf16.mxu0 0
    %388 = vmatpush1.bf16.msra.mxu0 %v381
    %389 = vmatprep.subr.bf16.mxu0 0
    %390 = vmatpush1.bf16.msra.mxu0 0
    %391 = vmatprep.subr.bf16.mxu0 0
    %392 = vmatpush1.bf16.msra.mxu0 0
    %393 = vmatprep.subr.bf16.mxu0 0
    %394 = vmatpush1.bf16.msra.mxu0 0
    %395 = vmatprep.subr.bf16.mxu0 0
    %396 = vmatpush1.bf16.msra.mxu0 0
    %397 = vmatprep.subr.bf16.mxu0 0
    %398 = vmatpush1.bf16.msra.mxu0 0
    %399 = vmatprep.subr.bf16.mxu0 0
    %400 = vmatpush1.bf16.msra.mxu0 0
    %401 = vmatprep.subr.bf16.mxu0 0
    %402 = vmatpush1.bf16.msra.mxu0 0
    %403 = vmatprep.subr.bf16.mxu0 0
    %404 = vmatpush1.bf16.msra.mxu0 0
    %405 = vmatprep.subr.bf16.mxu0 0
    %406 = vmatpush1.bf16.msra.mxu0 0
    %407 = vmatprep.subr.bf16.mxu0 0
    %408 = vmatpush1.bf16.msra.mxu0 0
    %409 = vmatprep.subr.bf16.mxu0 0
    %410 = vmatpush1.bf16.msra.mxu0 0
    %411 = vmatprep.subr.bf16.mxu0 0
    %412 = vmatpush1.bf16.msra.mxu0 0
    %413 = vmatprep.subr.bf16.mxu0 0
    %414 = vmatpush1.bf16.msra.mxu0 0
    %415 = vmatprep.mubr.bf16.mxu0 0
    %416 = vmatmul.mubr.bf16.gmra.mrb[0].mxu0 %v284
    %v417 = vpop.f32.mrb[0].mxu0
    %v418 = vadd.f32 %v105, %v417
    %v419 = vpop.f32.mrb[0].mxu0
    %v420 = vpop.f32.mrb[0].mxu0
    %v421 = vadd.f32 %v105, %v420
    %v422 = vpop.f32.mrb[0].mxu0
    %423 = vmatprep.mubr.bf16.mxu0 0
    %424 = vmatmul.mubr.bf16.gmra.mrb[0].mxu0 %v287
    %v425 = vpop.f32.mrb[0].mxu0
    %v426 = vadd.f32 %v105, %v425
    %v427 = vpop.f32.mrb[0].mxu0
    %v428 = vpop.f32.mrb[0].mxu0
    %v429 = vadd.f32 %v105, %v428
    %v430 = vpop.f32.mrb[0].mxu0
    %431 = vmatprep.mubr.bf16.mxu0 0
    %432 = vmatmul.mubr.bf16.gmra.mrb[0].mxu0 %v290
    %v433 = vpop.f32.mrb[0].mxu0
    %v434 = vadd.f32 %v105, %v433
    %v435 = vpop.f32.mrb[0].mxu0
    %v436 = vpop.f32.mrb[0].mxu0
    %v437 = vadd.f32 %v105, %v436
    %v438 = vpop.f32.mrb[0].mxu0
    %439 = vmatprep.mubr.bf16.mxu0 0
    %440 = vmatmul.mubr.bf16.gmra.mrb[0].mxu0 %v293
    %v441 = vpop.f32.mrb[0].mxu0
    %v442 = vadd.f32 %v105, %v441
    %v443 = vpop.f32.mrb[0].mxu0
    %v444 = vpop.f32.mrb[0].mxu0
    %v445 = vadd.f32 %v105, %v444
    %v446 = vpop.f32.mrb[0].mxu0
    %447 = vmatprep.mubr.bf16.mxu0 0
    %448 = vmatmul.mubr.bf16.gmra.mrb[0].mxu0 %v296
    %v449 = vpop.f32.mrb[0].mxu0
    %v450 = vadd.f32 %v105, %v449
    %v451 = vpop.f32.mrb[0].mxu0
    %v452 = vpop.f32.mrb[0].mxu0
    %v453 = vadd.f32 %v105, %v452
    %v454 = vpop.f32.mrb[0].mxu0
    %455 = vmatprep.mubr.bf16.mxu0 0
    %456 = vmatmul.mubr.bf16.gmra.mrb[0].mxu0 %v299
    %v457 = vpop.f32.mrb[0].mxu0
    %v458 = vadd.f32 %v105, %v457
    %v459 = vpop.f32.mrb[0].mxu0
    %v460 = vpop.f32.mrb[0].mxu0
    %v461 = vadd.f32 %v105, %v460
    %v462 = vpop.f32.mrb[0].mxu0
    %463 = vmatprep.mubr.bf16.mxu0 0
    %464 = vmatmul.mubr.bf16.gmra.mrb[0].mxu0 %v302
    %v465 = vpop.f32.mrb[0].mxu0
    %v466 = vadd.f32 %v105, %v465
    %v467 = vpop.f32.mrb[0].mxu0
    %v468 = vpop.f32.mrb[0].mxu0
    %v469 = vadd.f32 %v105, %v468
    %v470 = vpop.f32.mrb[0].mxu0
    %471 = vmatprep.mubr.bf16.mxu0 0
    %472 = vmatmul.mubr.bf16.gmra.mrb[0].mxu0 %v305
    %v473 = vpop.f32.mrb[0].mxu0
    %v474 = vadd.f32 %v105, %v473
    %v475 = vpop.f32.mrb[0].mxu0
    %v476 = vpop.f32.mrb[0].mxu0
    %v477 = vadd.f32 %v105, %v476
    %v478 = vpop.f32.mrb[0].mxu0
    %479 = vmatprep.mubr.bf16.mxu0 0
    %480 = vmatmul.mubr.bf16.gmra.mrb[0].mxu0 %v308
    %v481 = vpop.f32.mrb[0].mxu0
    %v482 = vadd.f32 %v105, %v481
    %v483 = vpop.f32.mrb[0].mxu0
    %v484 = vpop.f32.mrb[0].mxu0
    %v485 = vadd.f32 %v105, %v484
    %v486 = vpop.f32.mrb[0].mxu0
    %487 = vmatprep.mubr.bf16.mxu0 0
    %488 = vmatmul.mubr.bf16.gmra.mrb[0].mxu0 %v311
    %v489 = vpop.f32.mrb[0].mxu0
    %v490 = vadd.f32 %v105, %v489
    %v491 = vpop.f32.mrb[0].mxu0
    %v492 = vpop.f32.mrb[0].mxu0
    %v493 = vadd.f32 %v105, %v492
    %v494 = vpop.f32.mrb[0].mxu0
    %495 = vmatprep.mubr.bf16.mxu0 0
    %496 = vmatmul.mubr.bf16.gmra.mrb[0].mxu0 %v314
    %v497 = vpop.f32.mrb[0].mxu0
    %v498 = vadd.f32 %v105, %v497
    %v499 = vpop.f32.mrb[0].mxu0
    %v500 = vpop.f32.mrb[0].mxu0
    %v501 = vadd.f32 %v105, %v500
    %v502 = vpop.f32.mrb[0].mxu0
    %503 = vmatprep.mubr.bf16.mxu0 0
    %504 = vmatmul.mubr.bf16.gmra.mrb[0].mxu0 %v317
    %v505 = vpop.f32.mrb[0].mxu0
    %v506 = vadd.f32 %v105, %v505
    %v507 = vpop.f32.mrb[0].mxu0
    %v508 = vpop.f32.mrb[0].mxu0
    %v509 = vadd.f32 %v105, %v508
    %v510 = vpop.f32.mrb[0].mxu0
    %511 = vmatprep.mubr.bf16.mxu0 0
    %512 = vmatmul.mubr.bf16.gmra.mrb[0].mxu0 %v320
    %v513 = vpop.f32.mrb[0].mxu0
    %v514 = vadd.f32 %v105, %v513
    %v515 = vpop.f32.mrb[0].mxu0
    %v516 = vpop.f32.mrb[0].mxu0
    %v517 = vadd.f32 %v105, %v516
    %v518 = vpop.f32.mrb[0].mxu0
    %519 = vmatprep.mubr.bf16.mxu0 0
    %520 = vmatmul.mubr.bf16.gmra.mrb[0].mxu0 %v323
    %v521 = vpop.f32.mrb[0].mxu0
    %v522 = vadd.f32 %v105, %v521
    %v523 = vpop.f32.mrb[0].mxu0
    %v524 = vpop.f32.mrb[0].mxu0
    %v525 = vadd.f32 %v105, %v524
    %v526 = vpop.f32.mrb[0].mxu0
    %527 = vmatprep.mubr.bf16.mxu0 0
    %528 = vmatmul.mubr.bf16.gmra.mrb[0].mxu0 %v326
    %v529 = vpop.f32.mrb[0].mxu0
    %v530 = vadd.f32 %v105, %v529
    %v531 = vpop.f32.mrb[0].mxu0
    %v532 = vpop.f32.mrb[0].mxu0
    %v533 = vadd.f32 %v105, %v532
    %v534 = vpop.f32.mrb[0].mxu0
    %535 = vmatprep.mubr.bf16.mxu0 0
    %536 = vmatmul.mubr.bf16.gmra.mrb[0].mxu0 %v329
    %v537 = vpop.f32.mrb[0].mxu0
    %v538 = vadd.f32 %v105, %v537
    %v539 = vpop.f32.mrb[0].mxu0
    %v540 = vpop.f32.mrb[0].mxu0
    %v541 = vadd.f32 %v105, %v540
    %v542 = vpop.f32.mrb[0].mxu0
    %543 = vmatprep.mubr.bf16.mxu0 0
    %544 = vmatmul.mubr.bf16.gmra.mrb[0].mxu0 %v332
    %v545 = vpop.f32.mrb[0].mxu0
    %v546 = vadd.f32 %v105, %v545
    %v547 = vpop.f32.mrb[0].mxu0
    %v548 = vpop.f32.mrb[0].mxu0
    %v549 = vadd.f32 %v105, %v548
    %v550 = vpop.f32.mrb[0].mxu0
    %551 = vmatprep.mubr.bf16.mxu0 0
    %552 = vmatmul.mubr.bf16.gmra.mrb[0].mxu0 %v335
    %v553 = vpop.f32.mrb[0].mxu0
    %v554 = vadd.f32 %v105, %v553
    %v555 = vpop.f32.mrb[0].mxu0
    %v556 = vpop.f32.mrb[0].mxu0
    %v557 = vadd.f32 %v105, %v556
    %v558 = vpop.f32.mrb[0].mxu0
    %559 = vmatprep.mubr.bf16.mxu0 0
    %560 = vmatmul.mubr.bf16.gmra.mrb[0].mxu0 %v338
    %v561 = vpop.f32.mrb[0].mxu0
    %v562 = vadd.f32 %v105, %v561
    %v563 = vpop.f32.mrb[0].mxu0
    %v564 = vpop.f32.mrb[0].mxu0
    %v565 = vadd.f32 %v105, %v564
    %v566 = vpop.f32.mrb[0].mxu0
    %567 = vmatprep.mubr.bf16.mxu0 0
    %568 = vmatmul.mubr.bf16.gmra.mrb[0].mxu0 %v341
    %v569 = vpop.f32.mrb[0].mxu0
    %v570 = vadd.f32 %v105, %v569
    %v571 = vpop.f32.mrb[0].mxu0
    %v572 = vpop.f32.mrb[0].mxu0
    %v573 = vadd.f32 %v105, %v572
    %v574 = vpop.f32.mrb[0].mxu0
    %575 = vmatprep.mubr.bf16.mxu0 0
    %576 = vmatmul.mubr.bf16.gmra.mrb[0].mxu0 %v344
    %v577 = vpop.f32.mrb[0].mxu0
    %v578 = vadd.f32 %v105, %v577
    %v579 = vpop.f32.mrb[0].mxu0
    %v580 = vpop.f32.mrb[0].mxu0
    %v581 = vadd.f32 %v105, %v580
    %v582 = vpop.f32.mrb[0].mxu0
    %583 = vmatprep.mubr.bf16.mxu0 0
    %584 = vmatmul.mubr.bf16.gmra.mrb[0].mxu0 %v347
    %v585 = vpop.f32.mrb[0].mxu0
    %v586 = vadd.f32 %v105, %v585
    %v587 = vpop.f32.mrb[0].mxu0
    %v588 = vpop.f32.mrb[0].mxu0
    %v589 = vadd.f32 %v105, %v588
    %v590 = vpop.f32.mrb[0].mxu0
    %591 = vmatprep.mubr.bf16.mxu0 0
    %592 = vmatmul.mubr.bf16.gmra.mrb[0].mxu0 %v350
    %v593 = vpop.f32.mrb[0].mxu0
    %v594 = vadd.f32 %v105, %v593
    %v595 = vpop.f32.mrb[0].mxu0
    %v596 = vpop.f32.mrb[0].mxu0
    %v597 = vadd.f32 %v105, %v596
    %v598 = vpop.f32.mrb[0].mxu0
    %599 = vmatprep.mubr.bf16.mxu0 0
    %600 = vmatmul.mubr.bf16.gmra.mrb[0].mxu0 %v353
    %v601 = vpop.f32.mrb[0].mxu0
    %v602 = vadd.f32 %v105, %v601
    %v603 = vpop.f32.mrb[0].mxu0
    %v604 = vpop.f32.mrb[0].mxu0
    %v605 = vadd.f32 %v105, %v604
    %v606 = vpop.f32.mrb[0].mxu0
    %607 = vmatprep.mubr.bf16.mxu0 0
    %608 = vmatmul.mubr.bf16.gmra.mrb[0].mxu0 %v356
    %v609 = vpop.f32.mrb[0].mxu0
    %v610 = vadd.f32 %v105, %v609
    %v611 = vpop.f32.mrb[0].mxu0
    %v612 = vpop.f32.mrb[0].mxu0
    %v613 = vadd.f32 %v105, %v612
    %v614 = vpop.f32.mrb[0].mxu0
    %615 = vmatprep.mubr.bf16.mxu0 0
    %616 = vmatmul.mubr.bf16.gmra.mrb[0].mxu0 %v359
    %v617 = vpop.f32.mrb[0].mxu0
    %v618 = vadd.f32 %v105, %v617
    %v619 = vpop.f32.mrb[0].mxu0
    %v620 = vpop.f32.mrb[0].mxu0
    %v621 = vadd.f32 %v105, %v620
    %v622 = vpop.f32.mrb[0].mxu0
    %623 = vmatprep.mubr.bf16.mxu0 0
    %624 = vmatmul.mubr.bf16.gmra.mrb[0].mxu0 %v362
    %v625 = vpop.f32.mrb[0].mxu0
    %v626 = vadd.f32 %v105, %v625
    %v627 = vpop.f32.mrb[0].mxu0
    %v628 = vpop.f32.mrb[0].mxu0
    %v629 = vadd.f32 %v105, %v628
    %v630 = vpop.f32.mrb[0].mxu0
    %631 = vmatprep.mubr.bf16.mxu0 0
    %632 = vmatmul.mubr.bf16.gmra.mrb[0].mxu0 %v365
    %v633 = vpop.f32.mrb[0].mxu0
    %v634 = vadd.f32 %v105, %v633
    %v635 = vpop.f32.mrb[0].mxu0
    %v636 = vpop.f32.mrb[0].mxu0
    %v637 = vadd.f32 %v105, %v636
    %v638 = vpop.f32.mrb[0].mxu0
    %639 = vmatprep.mubr.bf16.mxu0 0
    %640 = vmatmul.mubr.bf16.gmra.mrb[0].mxu0 %v368
    %v641 = vpop.f32.mrb[0].mxu0
    %v642 = vadd.f32 %v105, %v641
    %v643 = vpop.f32.mrb[0].mxu0
    %v644 = vpop.f32.mrb[0].mxu0
    %v645 = vadd.f32 %v105, %v644
    %v646 = vpop.f32.mrb[0].mxu0
    %647 = vmatprep.mubr.bf16.mxu0 0
    %648 = vmatmul.mubr.bf16.gmra.mrb[0].mxu0 %v371
    %v649 = vpop.f32.mrb[0].mxu0
    %v650 = vadd.f32 %v105, %v649
    %v651 = vpop.f32.mrb[0].mxu0
    %v652 = vpop.f32.mrb[0].mxu0
    %v653 = vadd.f32 %v105, %v652
    %v654 = vpop.f32.mrb[0].mxu0
    %655 = vmatprep.mubr.bf16.mxu0 0
    %656 = vmatmul.mubr.bf16.gmra.mrb[0].mxu0 %v374
    %v657 = vpop.f32.mrb[0].mxu0
    %v658 = vadd.f32 %v105, %v657
    %v659 = vpop.f32.mrb[0].mxu0
    %v660 = vpop.f32.mrb[0].mxu0
    %v661 = vadd.f32 %v105, %v660
    %v662 = vpop.f32.mrb[0].mxu0
    %663 = vmatprep.mubr.bf16.mxu0 0
    %664 = vmatmul.mubr.bf16.gmra.mrb[0].mxu0 %v377
    %v665 = vpop.f32.mrb[0].mxu0
    %v666 = vadd.f32 %v105, %v665
    %v667 = vpop.f32.mrb[0].mxu0
    %v668 = vpop.f32.mrb[0].mxu0
    %v669 = vadd.f32 %v105, %v668
    %v670 = vpop.f32.mrb[0].mxu0
    %671 = vdwg.mxu0
    %v672 = vmax.f32 %v418, 0.0
    %v673 = vmax.f32 %v421, 0.0
    %v674 = vmax.f32 %v426, 0.0
    %v675 = vmax.f32 %v429, 0.0
    %v676 = vmax.f32 %v434, 0.0
    %v677 = vmax.f32 %v437, 0.0
    %v678 = vmax.f32 %v442, 0.0
    %v679 = vmax.f32 %v445, 0.0
    %v680 = vmax.f32 %v450, 0.0
    %v681 = vmax.f32 %v453, 0.0
    %v682 = vmax.f32 %v458, 0.0
    %v683 = vmax.f32 %v461, 0.0
    %v684 = vmax.f32 %v466, 0.0
    %v685 = vmax.f32 %v469, 0.0
    %v686 = vmax.f32 %v474, 0.0
    %v687 = vmax.f32 %v477, 0.0
    %v688 = vmax.f32 %v482, 0.0
    %v689 = vmax.f32 %v485, 0.0
    %v690 = vmax.f32 %v490, 0.0
    %v691 = vmax.f32 %v493, 0.0
    %v692 = vmax.f32 %v498, 0.0
    %v693 = vmax.f32 %v501, 0.0
    %v694 = vmax.f32 %v506, 0.0
    %v695 = vmax.f32 %v509, 0.0
    %v696 = vmax.f32 %v514, 0.0
    %v697 = vmax.f32 %v517, 0.0
    %v698 = vmax.f32 %v522, 0.0
    %v699 = vmax.f32 %v525, 0.0
    %v700 = vmax.f32 %v530, 0.0
    %v701 = vmax.f32 %v533, 0.0
    %v702 = vmax.f32 %v538, 0.0
    %v703 = vmax.f32 %v541, 0.0
    %v704 = vmax.f32 %v546, 0.0
    %v705 = vmax.f32 %v549, 0.0
    %v706 = vmax.f32 %v554, 0.0
    %v707 = vmax.f32 %v557, 0.0
    %v708 = vmax.f32 %v562, 0.0
    %v709 = vmax.f32 %v565, 0.0
    %v710 = vmax.f32 %v570, 0.0
    %v711 = vmax.f32 %v573, 0.0
    %v712 = vmax.f32 %v578, 0.0
    %v713 = vmax.f32 %v581, 0.0
    %v714 = vmax.f32 %v586, 0.0
    %v715 = vmax.f32 %v589, 0.0
    %v716 = vmax.f32 %v594, 0.0
    %v717 = vmax.f32 %v597, 0.0
    %v718 = vmax.f32 %v602, 0.0
    %v719 = vmax.f32 %v605, 0.0
    %v720 = vmax.f32 %v610, 0.0
    %v721 = vmax.f32 %v613, 0.0
    %v722 = vmax.f32 %v618, 0.0
    %v723 = vmax.f32 %v621, 0.0
    %v724 = vmax.f32 %v626, 0.0
    %v725 = vmax.f32 %v629, 0.0
    %v726 = vmax.f32 %v634, 0.0
    %v727 = vmax.f32 %v637, 0.0
    %v728 = vmax.f32 %v642, 0.0
    %v729 = vmax.f32 %v645, 0.0
    %v730 = vmax.f32 %v650, 0.0
    %v731 = vmax.f32 %v653, 0.0
    %v732 = vmax.f32 %v658, 0.0
    %v733 = vmax.f32 %v661, 0.0
    %v734 = vmax.f32 %v666, 0.0
    %v735 = vmax.f32 %v669, 0.0
    %v736 = vpack.c.bf16 %v673, %v672
    %v737 = vpack.c.bf16 %v675, %v674
    %v738 = vpack.c.bf16 %v677, %v676
    %v739 = vpack.c.bf16 %v679, %v678
    %v740 = vpack.c.bf16 %v681, %v680
    %v741 = vpack.c.bf16 %v683, %v682
    %v742 = vpack.c.bf16 %v685, %v684
    %v743 = vpack.c.bf16 %v687, %v686
    %v744 = vpack.c.bf16 %v689, %v688
    %v745 = vpack.c.bf16 %v691, %v690
    %v746 = vpack.c.bf16 %v693, %v692
    %v747 = vpack.c.bf16 %v695, %v694
    %v748 = vpack.c.bf16 %v697, %v696
    %v749 = vpack.c.bf16 %v699, %v698
    %v750 = vpack.c.bf16 %v701, %v700
    %v751 = vpack.c.bf16 %v703, %v702
    %v752 = vpack.c.bf16 %v705, %v704
    %v753 = vpack.c.bf16 %v707, %v706
    %v754 = vpack.c.bf16 %v709, %v708
    %v755 = vpack.c.bf16 %v711, %v710
    %v756 = vpack.c.bf16 %v713, %v712
    %v757 = vpack.c.bf16 %v715, %v714
    %v758 = vpack.c.bf16 %v717, %v716
    %v759 = vpack.c.bf16 %v719, %v718
    %v760 = vpack.c.bf16 %v721, %v720
    %v761 = vpack.c.bf16 %v723, %v722
    %v762 = vpack.c.bf16 %v725, %v724
    %v763 = vpack.c.bf16 %v727, %v726
    %v764 = vpack.c.bf16 %v729, %v728
    %v765 = vpack.c.bf16 %v731, %v730
    %v766 = vpack.c.bf16 %v733, %v732
    %v767 = vpack.c.bf16 %v735, %v734
    %v768 = vld [vmem:[%s5] sm:$0xf]
    %v769 = vld [vmem:[%s5 + $0x4] sm:$0xf]
    %v770 = vld [vmem:[%s5 + $0x8] sm:$0xf]
    %v771 = vld [vmem:[%s5 + $0xc] sm:$0xf]
    %v772 = vld [vmem:[%s5 + $0x10] sm:$0xf]
    %v773 = vld [vmem:[%s5 + $0x14] sm:$0xf]
    %v774 = vld [vmem:[%s5 + $0x18] sm:$0xf]
    %v775 = vld [vmem:[%s5 + $0x1c] sm:$0xf]
    %v776 = vld [vmem:[%s5 + $0x20] sm:$0xf]
    %v777 = vld [vmem:[%s5 + $0x24] sm:$0xf]
    %v778 = vld [vmem:[%s5 + $0x28] sm:$0xf]
    %v779 = vld [vmem:[%s5 + $0x2c] sm:$0xf]
    %v780 = vld [vmem:[%s5 + $0x30] sm:$0xf]
    %v781 = vld [vmem:[%s5 + $0x34] sm:$0xf]
    %v782 = vld [vmem:[%s5 + $0x38] sm:$0xf]
    %v783 = vld [vmem:[%s5 + $0x3c] sm:$0xf]
    %v784 = vld [vmem:[%s6] sm:$0x1]
    %v786 = vlaneseq
    %v787 = vshrl.u32 %v786, 7
    %v788 = vsub.s32 0, %v787
    %v789 = vrot.slane %v784, %v788
    %v807 = vunpack.c.l.b16 %v768
    %v808 = vunpack.c.l.b16 %v769
    %v809 = vunpack.c.l.b16 %v770
    %v810 = vunpack.c.l.b16 %v771
    %v811 = vunpack.c.l.b16 %v772
    %v812 = vunpack.c.l.b16 %v773
    %v813 = vunpack.c.l.b16 %v774
    %v814 = vunpack.c.l.b16 %v775
    %v815 = vunpack.c.l.b16 %v776
    %v816 = vunpack.c.l.b16 %v777
    %v817 = vunpack.c.l.b16 %v778
    %v818 = vunpack.c.l.b16 %v779
    %v819 = vunpack.c.l.b16 %v780
    %v820 = vunpack.c.l.b16 %v781
    %v821 = vunpack.c.l.b16 %v782
    %v822 = vunpack.c.l.b16 %v783
    %v823 = vpack.c.b16 %v808, %v807
    %v824 = vpack.c.b16 %v810, %v809
    %v825 = vpack.c.b16 %v812, %v811
    %v826 = vpack.c.b16 %v814, %v813
    %v827 = vpack.c.b16 %v816, %v815
    %v828 = vpack.c.b16 %v818, %v817
    %v829 = vpack.c.b16 %v820, %v819
    %v830 = vpack.c.b16 %v822, %v821
    %839 = vmatprep.subr.bf16.mxu0 0
    %840 = vmatpush1.bf16.msra.mxu0 %v823
    %841 = vmatprep.subr.bf16.mxu0 0
    %842 = vmatpush1.bf16.msra.mxu0 %v824
    %843 = vmatprep.subr.bf16.mxu0 0
    %844 = vmatpush1.bf16.msra.mxu0 %v825
    %845 = vmatprep.subr.bf16.mxu0 0
    %846 = vmatpush1.bf16.msra.mxu0 %v826
    %847 = vmatprep.subr.bf16.mxu0 0
    %848 = vmatpush1.bf16.msra.mxu0 %v827
    %849 = vmatprep.subr.bf16.mxu0 0
    %850 = vmatpush1.bf16.msra.mxu0 %v828
    %851 = vmatprep.subr.bf16.mxu0 0
    %852 = vmatpush1.bf16.msra.mxu0 %v829
    %853 = vmatprep.subr.bf16.mxu0 0
    %854 = vmatpush1.bf16.msra.mxu0 %v830
    %855 = vmatprep.subr.bf16.mxu0 0
    %856 = vmatpush1.bf16.msra.mxu0 0
    %857 = vmatprep.subr.bf16.mxu0 0
    %858 = vmatpush1.bf16.msra.mxu0 0
    %859 = vmatprep.subr.bf16.mxu0 0
    %860 = vmatpush1.bf16.msra.mxu0 0
    %861 = vmatprep.subr.bf16.mxu0 0
    %862 = vmatpush1.bf16.msra.mxu0 0
    %863 = vmatprep.subr.bf16.mxu0 0
    %864 = vmatpush1.bf16.msra.mxu0 0
    %865 = vmatprep.subr.bf16.mxu0 0
    %866 = vmatpush1.bf16.msra.mxu0 0
    %867 = vmatprep.subr.bf16.mxu0 0
    %868 = vmatpush1.bf16.msra.mxu0 0
    %869 = vmatprep.subr.bf16.mxu0 0
    %870 = vmatpush1.bf16.msra.mxu0 0
    %871 = vmatprep.mubr.bf16.mxu0 0
    %872 = vmatmul.mubr.bf16.gmra.mrb[0].mxu0 %v736
    %v873 = vpop.f32.mrb[0].mxu0
    %v874 = vadd.f32 %v789, %v873
    %v875 = vpop.f32.mrb[0].mxu0
    %v876 = vpop.f32.mrb[0].mxu0
    %v877 = vadd.f32 %v789, %v876
    %v878 = vpop.f32.mrb[0].mxu0
    %879 = vmatprep.mubr.bf16.mxu0 0
    %880 = vmatmul.mubr.bf16.gmra.mrb[0].mxu0 %v737
    %v881 = vpop.f32.mrb[0].mxu0
    %v882 = vadd.f32 %v789, %v881
    %v883 = vpop.f32.mrb[0].mxu0
    %v884 = vpop.f32.mrb[0].mxu0
    %v885 = vadd.f32 %v789, %v884
    %v886 = vpop.f32.mrb[0].mxu0
    %887 = vmatprep.mubr.bf16.mxu0 0
    %888 = vmatmul.mubr.bf16.gmra.mrb[0].mxu0 %v738
    %v889 = vpop.f32.mrb[0].mxu0
    %v890 = vadd.f32 %v789, %v889
    %v891 = vpop.f32.mrb[0].mxu0
    %v892 = vpop.f32.mrb[0].mxu0
    %v893 = vadd.f32 %v789, %v892
    %v894 = vpop.f32.mrb[0].mxu0
    %895 = vmatprep.mubr.bf16.mxu0 0
    %896 = vmatmul.mubr.bf16.gmra.mrb[0].mxu0 %v739
    %v897 = vpop.f32.mrb[0].mxu0
    %v898 = vadd.f32 %v789, %v897
    %v899 = vpop.f32.mrb[0].mxu0
    %v900 = vpop.f32.mrb[0].mxu0
    %v901 = vadd.f32 %v789, %v900
    %v902 = vpop.f32.mrb[0].mxu0
    %903 = vmatprep.mubr.bf16.mxu0 0
    %904 = vmatmul.mubr.bf16.gmra.mrb[0].mxu0 %v740
    %v905 = vpop.f32.mrb[0].mxu0
    %v906 = vadd.f32 %v789, %v905
    %v907 = vpop.f32.mrb[0].mxu0
    %v908 = vpop.f32.mrb[0].mxu0
    %v909 = vadd.f32 %v789, %v908
    %v910 = vpop.f32.mrb[0].mxu0
    %911 = vmatprep.mubr.bf16.mxu0 0
    %912 = vmatmul.mubr.bf16.gmra.mrb[0].mxu0 %v741
    %v913 = vpop.f32.mrb[0].mxu0
    %v914 = vadd.f32 %v789, %v913
    %v915 = vpop.f32.mrb[0].mxu0
    %v916 = vpop.f32.mrb[0].mxu0
    %v917 = vadd.f32 %v789, %v916
    %v918 = vpop.f32.mrb[0].mxu0
    %919 = vmatprep.mubr.bf16.mxu0 0
    %920 = vmatmul.mubr.bf16.gmra.mrb[0].mxu0 %v742
    %v921 = vpop.f32.mrb[0].mxu0
    %v922 = vadd.f32 %v789, %v921
    %v923 = vpop.f32.mrb[0].mxu0
    %v924 = vpop.f32.mrb[0].mxu0
    %v925 = vadd.f32 %v789, %v924
    %v926 = vpop.f32.mrb[0].mxu0
    %927 = vmatprep.mubr.bf16.mxu0 0
    %928 = vmatmul.mubr.bf16.gmra.mrb[0].mxu0 %v743
    %v929 = vpop.f32.mrb[0].mxu0
    %v930 = vadd.f32 %v789, %v929
    %v931 = vpop.f32.mrb[0].mxu0
    %v932 = vpop.f32.mrb[0].mxu0
    %v933 = vadd.f32 %v789, %v932
    %v934 = vpop.f32.mrb[0].mxu0
    %935 = vmatprep.mubr.bf16.mxu0 0
    %936 = vmatmul.mubr.bf16.gmra.mrb[0].mxu0 %v744
    %v937 = vpop.f32.mrb[0].mxu0
    %v938 = vadd.f32 %v789, %v937
    %v939 = vpop.f32.mrb[0].mxu0
    %v940 = vpop.f32.mrb[0].mxu0
    %v941 = vadd.f32 %v789, %v940
    %v942 = vpop.f32.mrb[0].mxu0
    %943 = vmatprep.mubr.bf16.mxu0 0
    %944 = vmatmul.mubr.bf16.gmra.mrb[0].mxu0 %v745
    %v945 = vpop.f32.mrb[0].mxu0
    %v946 = vadd.f32 %v789, %v945
    %v947 = vpop.f32.mrb[0].mxu0
    %v948 = vpop.f32.mrb[0].mxu0
    %v949 = vadd.f32 %v789, %v948
    %v950 = vpop.f32.mrb[0].mxu0
    %951 = vmatprep.mubr.bf16.mxu0 0
    %952 = vmatmul.mubr.bf16.gmra.mrb[0].mxu0 %v746
    %v953 = vpop.f32.mrb[0].mxu0
    %v954 = vadd.f32 %v789, %v953
    %v955 = vpop.f32.mrb[0].mxu0
    %v956 = vpop.f32.mrb[0].mxu0
    %v957 = vadd.f32 %v789, %v956
    %v958 = vpop.f32.mrb[0].mxu0
    %959 = vmatprep.mubr.bf16.mxu0 0
    %960 = vmatmul.mubr.bf16.gmra.mrb[0].mxu0 %v747
    %v961 = vpop.f32.mrb[0].mxu0
    %v962 = vadd.f32 %v789, %v961
    %v963 = vpop.f32.mrb[0].mxu0
    %v964 = vpop.f32.mrb[0].mxu0
    %v965 = vadd.f32 %v789, %v964
    %v966 = vpop.f32.mrb[0].mxu0
    %967 = vmatprep.mubr.bf16.mxu0 0
    %968 = vmatmul.mubr.bf16.gmra.mrb[0].mxu0 %v748
    %v969 = vpop.f32.mrb[0].mxu0
    %v970 = vadd.f32 %v789, %v969
    %v971 = vpop.f32.mrb[0].mxu0
    %v972 = vpop.f32.mrb[0].mxu0
    %v973 = vadd.f32 %v789, %v972
    %v974 = vpop.f32.mrb[0].mxu0
    %975 = vmatprep.mubr.bf16.mxu0 0
    %976 = vmatmul.mubr.bf16.gmra.mrb[0].mxu0 %v749
    %v977 = vpop.f32.mrb[0].mxu0
    %v978 = vadd.f32 %v789, %v977
    %v979 = vpop.f32.mrb[0].mxu0
    %v980 = vpop.f32.mrb[0].mxu0
    %v981 = vadd.f32 %v789, %v980
    %v982 = vpop.f32.mrb[0].mxu0
    %983 = vmatprep.mubr.bf16.mxu0 0
    %984 = vmatmul.mubr.bf16.gmra.mrb[0].mxu0 %v750
    %v985 = vpop.f32.mrb[0].mxu0
    %v986 = vadd.f32 %v789, %v985
    %v987 = vpop.f32.mrb[0].mxu0
    %v988 = vpop.f32.mrb[0].mxu0
    %v989 = vadd.f32 %v789, %v988
    %v990 = vpop.f32.mrb[0].mxu0
    %991 = vmatprep.mubr.bf16.mxu0 0
    %992 = vmatmul.mubr.bf16.gmra.mrb[0].mxu0 %v751
    %v993 = vpop.f32.mrb[0].mxu0
    %v994 = vadd.f32 %v789, %v993
    %v995 = vpop.f32.mrb[0].mxu0
    %v996 = vpop.f32.mrb[0].mxu0
    %v997 = vadd.f32 %v789, %v996
    %v998 = vpop.f32.mrb[0].mxu0
    %999 = vmatprep.mubr.bf16.mxu0 0
    %1000 = vmatmul.mubr.bf16.gmra.mrb[0].mxu0 %v752
    %v1001 = vpop.f32.mrb[0].mxu0
    %v1002 = vadd.f32 %v789, %v1001
    %v1003 = vpop.f32.mrb[0].mxu0
    %v1004 = vpop.f32.mrb[0].mxu0
    %v1005 = vadd.f32 %v789, %v1004
    %v1006 = vpop.f32.mrb[0].mxu0
    %1007 = vmatprep.mubr.bf16.mxu0 0
    %1008 = vmatmul.mubr.bf16.gmra.mrb[0].mxu0 %v753
    %v1009 = vpop.f32.mrb[0].mxu0
    %v1010 = vadd.f32 %v789, %v1009
    %v1011 = vpop.f32.mrb[0].mxu0
    %v1012 = vpop.f32.mrb[0].mxu0
    %v1013 = vadd.f32 %v789, %v1012
    %v1014 = vpop.f32.mrb[0].mxu0
    %1015 = vmatprep.mubr.bf16.mxu0 0
    %1016 = vmatmul.mubr.bf16.gmra.mrb[0].mxu0 %v754
    %v1017 = vpop.f32.mrb[0].mxu0
    %v1018 = vadd.f32 %v789, %v1017
    %v1019 = vpop.f32.mrb[0].mxu0
    %v1020 = vpop.f32.mrb[0].mxu0
    %v1021 = vadd.f32 %v789, %v1020
    %v1022 = vpop.f32.mrb[0].mxu0
    %1023 = vmatprep.mubr.bf16.mxu0 0
    %1024 = vmatmul.mubr.bf16.gmra.mrb[0].mxu0 %v755
    %v1025 = vpop.f32.mrb[0].mxu0
    %v1026 = vadd.f32 %v789, %v1025
    %v1027 = vpop.f32.mrb[0].mxu0
    %v1028 = vpop.f32.mrb[0].mxu0
    %v1029 = vadd.f32 %v789, %v1028
    %v1030 = vpop.f32.mrb[0].mxu0
    %1031 = vmatprep.mubr.bf16.mxu0 0
    %1032 = vmatmul.mubr.bf16.gmra.mrb[0].mxu0 %v756
    %v1033 = vpop.f32.mrb[0].mxu0
    %v1034 = vadd.f32 %v789, %v1033
    %v1035 = vpop.f32.mrb[0].mxu0
    %v1036 = vpop.f32.mrb[0].mxu0
    %v1037 = vadd.f32 %v789, %v1036
    %v1038 = vpop.f32.mrb[0].mxu0
    %1039 = vmatprep.mubr.bf16.mxu0 0
    %1040 = vmatmul.mubr.bf16.gmra.mrb[0].mxu0 %v757
    %v1041 = vpop.f32.mrb[0].mxu0
    %v1042 = vadd.f32 %v789, %v1041
    %v1043 = vpop.f32.mrb[0].mxu0
    %v1044 = vpop.f32.mrb[0].mxu0
    %v1045 = vadd.f32 %v789, %v1044
    %v1046 = vpop.f32.mrb[0].mxu0
    %1047 = vmatprep.mubr.bf16.mxu0 0
    %1048 = vmatmul.mubr.bf16.gmra.mrb[0].mxu0 %v758
    %v1049 = vpop.f32.mrb[0].mxu0
    %v1050 = vadd.f32 %v789, %v1049
    %v1051 = vpop.f32.mrb[0].mxu0
    %v1052 = vpop.f32.mrb[0].mxu0
    %v1053 = vadd.f32 %v789, %v1052
    %v1054 = vpop.f32.mrb[0].mxu0
    %1055 = vmatprep.mubr.bf16.mxu0 0
    %1056 = vmatmul.mubr.bf16.gmra.mrb[0].mxu0 %v759
    %v1057 = vpop.f32.mrb[0].mxu0
    %v1058 = vadd.f32 %v789, %v1057
    %v1059 = vpop.f32.mrb[0].mxu0
    %v1060 = vpop.f32.mrb[0].mxu0
    %v1061 = vadd.f32 %v789, %v1060
    %v1062 = vpop.f32.mrb[0].mxu0
    %1063 = vmatprep.mubr.bf16.mxu0 0
    %1064 = vmatmul.mubr.bf16.gmra.mrb[0].mxu0 %v760
    %v1065 = vpop.f32.mrb[0].mxu0
    %v1066 = vadd.f32 %v789, %v1065
    %v1067 = vpop.f32.mrb[0].mxu0
    %v1068 = vpop.f32.mrb[0].mxu0
    %v1069 = vadd.f32 %v789, %v1068
    %v1070 = vpop.f32.mrb[0].mxu0
    %1071 = vmatprep.mubr.bf16.mxu0 0
    %1072 = vmatmul.mubr.bf16.gmra.mrb[0].mxu0 %v761
    %v1073 = vpop.f32.mrb[0].mxu0
    %v1074 = vadd.f32 %v789, %v1073
    %v1075 = vpop.f32.mrb[0].mxu0
    %v1076 = vpop.f32.mrb[0].mxu0
    %v1077 = vadd.f32 %v789, %v1076
    %v1078 = vpop.f32.mrb[0].mxu0
    %1079 = vmatprep.mubr.bf16.mxu0 0
    %1080 = vmatmul.mubr.bf16.gmra.mrb[0].mxu0 %v762
    %v1081 = vpop.f32.mrb[0].mxu0
    %v1082 = vadd.f32 %v789, %v1081
    %v1083 = vpop.f32.mrb[0].mxu0
    %v1084 = vpop.f32.mrb[0].mxu0
    %v1085 = vadd.f32 %v789, %v1084
    %v1086 = vpop.f32.mrb[0].mxu0
    %1087 = vmatprep.mubr.bf16.mxu0 0
    %1088 = vmatmul.mubr.bf16.gmra.mrb[0].mxu0 %v763
    %v1089 = vpop.f32.mrb[0].mxu0
    %v1090 = vadd.f32 %v789, %v1089
    %v1091 = vpop.f32.mrb[0].mxu0
    %v1092 = vpop.f32.mrb[0].mxu0
    %v1093 = vadd.f32 %v789, %v1092
    %v1094 = vpop.f32.mrb[0].mxu0
    %1095 = vmatprep.mubr.bf16.mxu0 0
    %1096 = vmatmul.mubr.bf16.gmra.mrb[0].mxu0 %v764
    %v1097 = vpop.f32.mrb[0].mxu0
    %v1098 = vadd.f32 %v789, %v1097
    %v1099 = vpop.f32.mrb[0].mxu0
    %v1100 = vpop.f32.mrb[0].mxu0
    %v1101 = vadd.f32 %v789, %v1100
    %v1102 = vpop.f32.mrb[0].mxu0
    %1103 = vmatprep.mubr.bf16.mxu0 0
    %1104 = vmatmul.mubr.bf16.gmra.mrb[0].mxu0 %v765
    %v1105 = vpop.f32.mrb[0].mxu0
    %v1106 = vadd.f32 %v789, %v1105
    %v1107 = vpop.f32.mrb[0].mxu0
    %v1108 = vpop.f32.mrb[0].mxu0
    %v1109 = vadd.f32 %v789, %v1108
    %v1110 = vpop.f32.mrb[0].mxu0
    %1111 = vmatprep.mubr.bf16.mxu0 0
    %1112 = vmatmul.mubr.bf16.gmra.mrb[0].mxu0 %v766
    %v1113 = vpop.f32.mrb[0].mxu0
    %v1114 = vadd.f32 %v789, %v1113
    %v1115 = vpop.f32.mrb[0].mxu0
    %v1116 = vpop.f32.mrb[0].mxu0
    %v1117 = vadd.f32 %v789, %v1116
    %v1118 = vpop.f32.mrb[0].mxu0
    %1119 = vmatprep.mubr.bf16.mxu0 0
    %1120 = vmatmul.mubr.bf16.gmra.mrb[0].mxu0 %v767
    %v1121 = vpop.f32.mrb[0].mxu0
    %v1122 = vadd.f32 %v789, %v1121
    %v1123 = vpop.f32.mrb[0].mxu0
    %v1124 = vpop.f32.mrb[0].mxu0
    %v1125 = vadd.f32 %v789, %v1124
    %v1126 = vpop.f32.mrb[0].mxu0
    %1127 = vdwg.mxu0
    %v1128 = vpack.c.bf16 %v877, %v874
    %v1129 = vpack.c.bf16 %v885, %v882
    %v1130 = vpack.c.bf16 %v893, %v890
    %v1131 = vpack.c.bf16 %v901, %v898
    %v1132 = vpack.c.bf16 %v909, %v906
    %v1133 = vpack.c.bf16 %v917, %v914
    %v1134 = vpack.c.bf16 %v925, %v922
    %v1135 = vpack.c.bf16 %v933, %v930
    %v1136 = vpack.c.bf16 %v941, %v938
    %v1137 = vpack.c.bf16 %v949, %v946
    %v1138 = vpack.c.bf16 %v957, %v954
    %v1139 = vpack.c.bf16 %v965, %v962
    %v1140 = vpack.c.bf16 %v973, %v970
    %v1141 = vpack.c.bf16 %v981, %v978
    %v1142 = vpack.c.bf16 %v989, %v986
    %v1143 = vpack.c.bf16 %v997, %v994
    %v1144 = vpack.c.bf16 %v1005, %v1002
    %v1145 = vpack.c.bf16 %v1013, %v1010
    %v1146 = vpack.c.bf16 %v1021, %v1018
    %v1147 = vpack.c.bf16 %v1029, %v1026
    %v1148 = vpack.c.bf16 %v1037, %v1034
    %v1149 = vpack.c.bf16 %v1045, %v1042
    %v1150 = vpack.c.bf16 %v1053, %v1050
    %v1151 = vpack.c.bf16 %v1061, %v1058
    %v1152 = vpack.c.bf16 %v1069, %v1066
    %v1153 = vpack.c.bf16 %v1077, %v1074
    %v1154 = vpack.c.bf16 %v1085, %v1082
    %v1155 = vpack.c.bf16 %v1093, %v1090
    %v1156 = vpack.c.bf16 %v1101, %v1098
    %v1157 = vpack.c.bf16 %v1109, %v1106
    %v1158 = vpack.c.bf16 %v1117, %v1114
    %v1159 = vpack.c.bf16 %v1125, %v1122
    %v1192 = vunpack.c.l.b16 %v1128
    %v1193 = vunpack.c.h.b16 %v1128
    %v1194 = vunpack.c.l.b16 %v1129
    %v1195 = vunpack.c.h.b16 %v1129
    %v1196 = vunpack.c.l.b16 %v1130
    %v1197 = vunpack.c.h.b16 %v1130
    %v1198 = vunpack.c.l.b16 %v1131
    %v1199 = vunpack.c.h.b16 %v1131
    %v1200 = vunpack.c.l.b16 %v1132
    %v1201 = vunpack.c.h.b16 %v1132
    %v1202 = vunpack.c.l.b16 %v1133
    %v1203 = vunpack.c.h.b16 %v1133
    %v1204 = vunpack.c.l.b16 %v1134
    %v1205 = vunpack.c.h.b16 %v1134
    %v1206 = vunpack.c.l.b16 %v1135
    %v1207 = vunpack.c.h.b16 %v1135
    %v1208 = vunpack.c.l.b16 %v1136
    %v1209 = vunpack.c.h.b16 %v1136
    %v1210 = vunpack.c.l.b16 %v1137
    %v1211 = vunpack.c.h.b16 %v1137
    %v1212 = vunpack.c.l.b16 %v1138
    %v1213 = vunpack.c.h.b16 %v1138
    %v1214 = vunpack.c.l.b16 %v1139
    %v1215 = vunpack.c.h.b16 %v1139
    %v1216 = vunpack.c.l.b16 %v1140
    %v1217 = vunpack.c.h.b16 %v1140
    %v1218 = vunpack.c.l.b16 %v1141
    %v1219 = vunpack.c.h.b16 %v1141
    %v1220 = vunpack.c.l.b16 %v1142
    %v1221 = vunpack.c.h.b16 %v1142
    %v1222 = vunpack.c.l.b16 %v1143
    %v1223 = vunpack.c.h.b16 %v1143
    %v1224 = vunpack.c.l.b16 %v1144
    %v1225 = vunpack.c.h.b16 %v1144
    %v1226 = vunpack.c.l.b16 %v1145
    %v1227 = vunpack.c.h.b16 %v1145
    %v1228 = vunpack.c.l.b16 %v1146
    %v1229 = vunpack.c.h.b16 %v1146
    %v1230 = vunpack.c.l.b16 %v1147
    %v1231 = vunpack.c.h.b16 %v1147
    %v1232 = vunpack.c.l.b16 %v1148
    %v1233 = vunpack.c.h.b16 %v1148
    %v1234 = vunpack.c.l.b16 %v1149
    %v1235 = vunpack.c.h.b16 %v1149
    %v1236 = vunpack.c.l.b16 %v1150
    %v1237 = vunpack.c.h.b16 %v1150
    %v1238 = vunpack.c.l.b16 %v1151
    %v1239 = vunpack.c.h.b16 %v1151
    %v1240 = vunpack.c.l.b16 %v1152
    %v1241 = vunpack.c.h.b16 %v1152
    %v1242 = vunpack.c.l.b16 %v1153
    %v1243 = vunpack.c.h.b16 %v1153
    %v1244 = vunpack.c.l.b16 %v1154
    %v1245 = vunpack.c.h.b16 %v1154
    %v1246 = vunpack.c.l.b16 %v1155
    %v1247 = vunpack.c.h.b16 %v1155
    %v1248 = vunpack.c.l.b16 %v1156
    %v1249 = vunpack.c.h.b16 %v1156
    %v1250 = vunpack.c.l.b16 %v1157
    %v1251 = vunpack.c.h.b16 %v1157
    %v1252 = vunpack.c.l.b16 %v1158
    %v1253 = vunpack.c.h.b16 %v1158
    %v1254 = vunpack.c.l.b16 %v1159
    %v1255 = vunpack.c.h.b16 %v1159
    %v1256 = vpack.c.b16 %v1192, %v1192
    %v1257 = vpack.c.b16 %v1193, %v1193
    %v1258 = vpack.c.b16 %v1194, %v1194
    %v1259 = vpack.c.b16 %v1195, %v1195
    %v1260 = vpack.c.b16 %v1196, %v1196
    %v1261 = vpack.c.b16 %v1197, %v1197
    %v1262 = vpack.c.b16 %v1198, %v1198
    %v1263 = vpack.c.b16 %v1199, %v1199
    %v1264 = vpack.c.b16 %v1200, %v1200
    %v1265 = vpack.c.b16 %v1201, %v1201
    %v1266 = vpack.c.b16 %v1202, %v1202
    %v1267 = vpack.c.b16 %v1203, %v1203
    %v1268 = vpack.c.b16 %v1204, %v1204
    %v1269 = vpack.c.b16 %v1205, %v1205
    %v1270 = vpack.c.b16 %v1206, %v1206
    %v1271 = vpack.c.b16 %v1207, %v1207
    %v1272 = vpack.c.b16 %v1208, %v1208
    %v1273 = vpack.c.b16 %v1209, %v1209
    %v1274 = vpack.c.b16 %v1210, %v1210
    %v1275 = vpack.c.b16 %v1211, %v1211
    %v1276 = vpack.c.b16 %v1212, %v1212
    %v1277 = vpack.c.b16 %v1213, %v1213
    %v1278 = vpack.c.b16 %v1214, %v1214
    %v1279 = vpack.c.b16 %v1215, %v1215
    %v1280 = vpack.c.b16 %v1216, %v1216
    %v1281 = vpack.c.b16 %v1217, %v1217
    %v1282 = vpack.c.b16 %v1218, %v1218
    %v1283 = vpack.c.b16 %v1219, %v1219
    %v1284 = vpack.c.b16 %v1220, %v1220
    %v1285 = vpack.c.b16 %v1221, %v1221
    %v1286 = vpack.c.b16 %v1222, %v1222
    %v1287 = vpack.c.b16 %v1223, %v1223
    %v1288 = vpack.c.b16 %v1224, %v1224
    %v1289 = vpack.c.b16 %v1225, %v1225
    %v1290 = vpack.c.b16 %v1226, %v1226
    %v1291 = vpack.c.b16 %v1227, %v1227
    %v1292 = vpack.c.b16 %v1228, %v1228
    %v1293 = vpack.c.b16 %v1229, %v1229
    %v1294 = vpack.c.b16 %v1230, %v1230
    %v1295 = vpack.c.b16 %v1231, %v1231
    %v1296 = vpack.c.b16 %v1232, %v1232
    %v1297 = vpack.c.b16 %v1233, %v1233
    %v1298 = vpack.c.b16 %v1234, %v1234
    %v1299 = vpack.c.b16 %v1235, %v1235
    %v1300 = vpack.c.b16 %v1236, %v1236
    %v1301 = vpack.c.b16 %v1237, %v1237
    %v1302 = vpack.c.b16 %v1238, %v1238
    %v1303 = vpack.c.b16 %v1239, %v1239
    %v1304 = vpack.c.b16 %v1240, %v1240
    %v1305 = vpack.c.b16 %v1241, %v1241
    %v1306 = vpack.c.b16 %v1242, %v1242
    %v1307 = vpack.c.b16 %v1243, %v1243
    %v1308 = vpack.c.b16 %v1244, %v1244
    %v1309 = vpack.c.b16 %v1245, %v1245
    %v1310 = vpack.c.b16 %v1246, %v1246
    %v1311 = vpack.c.b16 %v1247, %v1247
    %v1312 = vpack.c.b16 %v1248, %v1248
    %v1313 = vpack.c.b16 %v1249, %v1249
    %v1314 = vpack.c.b16 %v1250, %v1250
    %v1315 = vpack.c.b16 %v1251, %v1251
    %v1316 = vpack.c.b16 %v1252, %v1252
    %v1317 = vpack.c.b16 %v1253, %v1253
    %v1318 = vpack.c.b16 %v1254, %v1254
    %v1319 = vpack.c.b16 %v1255, %v1255
    %1384 = vst [vmem:[#allocation2] sm:$0xf] %v1256
    %1385 = vst [vmem:[#allocation2 + $0x4] sm:$0xf] %v1257
    %1386 = vst [vmem:[#allocation2 + $0x8] sm:$0xf] %v1258
    %1387 = vst [vmem:[#allocation2 + $0xc] sm:$0xf] %v1259
    %1388 = vst [vmem:[#allocation2 + $0x10] sm:$0xf] %v1260
    %1389 = vst [vmem:[#allocation2 + $0x14] sm:$0xf] %v1261
    %1390 = vst [vmem:[#allocation2 + $0x18] sm:$0xf] %v1262
    %1391 = vst [vmem:[#allocation2 + $0x1c] sm:$0xf] %v1263
    %1392 = vst [vmem:[#allocation2 + $0x20] sm:$0xf] %v1264
    %1393 = vst [vmem:[#allocation2 + $0x24] sm:$0xf] %v1265
    %1394 = vst [vmem:[#allocation2 + $0x28] sm:$0xf] %v1266
    %1395 = vst [vmem:[#allocation2 + $0x2c] sm:$0xf] %v1267
    %1396 = vst [vmem:[#allocation2 + $0x30] sm:$0xf] %v1268
    %1397 = vst [vmem:[#allocation2 + $0x34] sm:$0xf] %v1269
    %1398 = vst [vmem:[#allocation2 + $0x38] sm:$0xf] %v1270
    %1399 = vst [vmem:[#allocation2 + $0x3c] sm:$0xf] %v1271
    %1400 = vst [vmem:[#allocation2 + $0x40] sm:$0xf] %v1272
    %1401 = vst [vmem:[#allocation2 + $0x44] sm:$0xf] %v1273
    %1402 = vst [vmem:[#allocation2 + $0x48] sm:$0xf] %v1274
    %1403 = vst [vmem:[#allocation2 + $0x4c] sm:$0xf] %v1275
    %1404 = vst [vmem:[#allocation2 + $0x50] sm:$0xf] %v1276
    %1405 = vst [vmem:[#allocation2 + $0x54] sm:$0xf] %v1277
    %1406 = vst [vmem:[#allocation2 + $0x58] sm:$0xf] %v1278
    %1407 = vst [vmem:[#allocation2 + $0x5c] sm:$0xf] %v1279
    %1408 = vst [vmem:[#allocation2 + $0x60] sm:$0xf] %v1280
    %1409 = vst [vmem:[#allocation2 + $0x64] sm:$0xf] %v1281
    %1410 = vst [vmem:[#allocation2 + $0x68] sm:$0xf] %v1282
    %1411 = vst [vmem:[#allocation2 + $0x6c] sm:$0xf] %v1283
    %1412 = vst [vmem:[#allocation2 + $0x70] sm:$0xf] %v1284
    %1413 = vst [vmem:[#allocation2 + $0x74] sm:$0xf] %v1285
    %1414 = vst [vmem:[#allocation2 + $0x78] sm:$0xf] %v1286
    %1415 = vst [vmem:[#allocation2 + $0x7c] sm:$0xf] %v1287
    %1416 = vst [vmem:[#allocation2 + $0x80] sm:$0xf] %v1288
    %1417 = vst [vmem:[#allocation2 + $0x84] sm:$0xf] %v1289
    %1418 = vst [vmem:[#allocation2 + $0x88] sm:$0xf] %v1290
    %1419 = vst [vmem:[#allocation2 + $0x8c] sm:$0xf] %v1291
    %1420 = vst [vmem:[#allocation2 + $0x90] sm:$0xf] %v1292
    %1421 = vst [vmem:[#allocation2 + $0x94] sm:$0xf] %v1293
    %1422 = vst [vmem:[#allocation2 + $0x98] sm:$0xf] %v1294
    %1423 = vst [vmem:[#allocation2 + $0x9c] sm:$0xf] %v1295
    %1424 = vst [vmem:[#allocation2 + $0xa0] sm:$0xf] %v1296
    %1425 = vst [vmem:[#allocation2 + $0xa4] sm:$0xf] %v1297
    %1426 = vst [vmem:[#allocation2 + $0xa8] sm:$0xf] %v1298
    %1427 = vst [vmem:[#allocation2 + $0xac] sm:$0xf] %v1299
    %1428 = vst [vmem:[#allocation2 + $0xb0] sm:$0xf] %v1300
    %1429 = vst [vmem:[#allocation2 + $0xb4] sm:$0xf] %v1301
    %1430 = vst [vmem:[#allocation2 + $0xb8] sm:$0xf] %v1302
    %1431 = vst [vmem:[#allocation2 + $0xbc] sm:$0xf] %v1303
    %1432 = vst [vmem:[#allocation2 + $0xc0] sm:$0xf] %v1304
    %1433 = vst [vmem:[#allocation2 + $0xc4] sm:$0xf] %v1305
    %1434 = vst [vmem:[#allocation2 + $0xc8] sm:$0xf] %v1306
    %1435 = vst [vmem:[#allocation2 + $0xcc] sm:$0xf] %v1307
    %1436 = vst [vmem:[#allocation2 + $0xd0] sm:$0xf] %v1308
    %1437 = vst [vmem:[#allocation2 + $0xd4] sm:$0xf] %v1309
    %1438 = vst [vmem:[#allocation2 + $0xd8] sm:$0xf] %v1310
    %1439 = vst [vmem:[#allocation2 + $0xdc] sm:$0xf] %v1311
    %1440 = vst [vmem:[#allocation2 + $0xe0] sm:$0xf] %v1312
    %1441 = vst [vmem:[#allocation2 + $0xe4] sm:$0xf] %v1313
    %1442 = vst [vmem:[#allocation2 + $0xe8] sm:$0xf] %v1314
    %1443 = vst [vmem:[#allocation2 + $0xec] sm:$0xf] %v1315
    %1444 = vst [vmem:[#allocation2 + $0xf0] sm:$0xf] %v1316
    %1445 = vst [vmem:[#allocation2 + $0xf4] sm:$0xf] %v1317
    %1446 = vst [vmem:[#allocation2 + $0xf8] sm:$0xf] %v1318
    %1447 = vst [vmem:[#allocation2 + $0xfc] sm:$0xf] %v1319
    %v1448 = vld [vmem:[%s1] sm:$0xf]
    %v1449 = vld [vmem:[%s1 + $0x4] sm:$0xf]
    %v1450 = vld [vmem:[%s1 + $0x8] sm:$0xf]
    %v1451 = vld [vmem:[%s1 + $0xc] sm:$0xf]
    %v1452 = vld [vmem:[%s1 + $0x10] sm:$0xf]
    %v1453 = vld [vmem:[%s1 + $0x14] sm:$0xf]
    %v1454 = vld [vmem:[%s1 + $0x18] sm:$0xf]
    %v1455 = vld [vmem:[%s1 + $0x1c] sm:$0xf]
    %v1456 = vld [vmem:[%s1 + $0x20] sm:$0xf]
    %v1457 = vld [vmem:[%s1 + $0x24] sm:$0xf]
    %v1458 = vld [vmem:[%s1 + $0x28] sm:$0xf]
    %v1459 = vld [vmem:[%s1 + $0x2c] sm:$0xf]
    %v1460 = vld [vmem:[%s1 + $0x30] sm:$0xf]
    %v1461 = vld [vmem:[%s1 + $0x34] sm:$0xf]
    %v1462 = vld [vmem:[%s1 + $0x38] sm:$0xf]
    %v1463 = vld [vmem:[%s1 + $0x3c] sm:$0xf]
    %v1464 = vld [vmem:[%s1 + $0x40] sm:$0xf]
    %v1465 = vld [vmem:[%s1 + $0x44] sm:$0xf]
    %v1466 = vld [vmem:[%s1 + $0x48] sm:$0xf]
    %v1467 = vld [vmem:[%s1 + $0x4c] sm:$0xf]
    %v1468 = vld [vmem:[%s1 + $0x50] sm:$0xf]
    %v1469 = vld [vmem:[%s1 + $0x54] sm:$0xf]
    %v1470 = vld [vmem:[%s1 + $0x58] sm:$0xf]
    %v1471 = vld [vmem:[%s1 + $0x5c] sm:$0xf]
    %v1472 = vld [vmem:[%s1 + $0x60] sm:$0xf]
    %v1473 = vld [vmem:[%s1 + $0x64] sm:$0xf]
    %v1474 = vld [vmem:[%s1 + $0x68] sm:$0xf]
    %v1475 = vld [vmem:[%s1 + $0x6c] sm:$0xf]
    %v1476 = vld [vmem:[%s1 + $0x70] sm:$0xf]
    %v1477 = vld [vmem:[%s1 + $0x74] sm:$0xf]
    %v1478 = vld [vmem:[%s1 + $0x78] sm:$0xf]
    %v1479 = vld [vmem:[%s1 + $0x7c] sm:$0xf]
    %v1480 = vld [vmem:[%s1 + $0x80] sm:$0xf]
    %v1481 = vld [vmem:[%s1 + $0x84] sm:$0xf]
    %v1482 = vld [vmem:[%s1 + $0x88] sm:$0xf]
    %v1483 = vld [vmem:[%s1 + $0x8c] sm:$0xf]
    %v1484 = vld [vmem:[%s1 + $0x90] sm:$0xf]
    %v1485 = vld [vmem:[%s1 + $0x94] sm:$0xf]
    %v1486 = vld [vmem:[%s1 + $0x98] sm:$0xf]
    %v1487 = vld [vmem:[%s1 + $0x9c] sm:$0xf]
    %v1488 = vld [vmem:[%s1 + $0xa0] sm:$0xf]
    %v1489 = vld [vmem:[%s1 + $0xa4] sm:$0xf]
    %v1490 = vld [vmem:[%s1 + $0xa8] sm:$0xf]
    %v1491 = vld [vmem:[%s1 + $0xac] sm:$0xf]
    %v1492 = vld [vmem:[%s1 + $0xb0] sm:$0xf]
    %v1493 = vld [vmem:[%s1 + $0xb4] sm:$0xf]
    %v1494 = vld [vmem:[%s1 + $0xb8] sm:$0xf]
    %v1495 = vld [vmem:[%s1 + $0xbc] sm:$0xf]
    %v1496 = vld [vmem:[%s1 + $0xc0] sm:$0xf]
    %v1497 = vld [vmem:[%s1 + $0xc4] sm:$0xf]
    %v1498 = vld [vmem:[%s1 + $0xc8] sm:$0xf]
    %v1499 = vld [vmem:[%s1 + $0xcc] sm:$0xf]
    %v1500 = vld [vmem:[%s1 + $0xd0] sm:$0xf]
    %v1501 = vld [vmem:[%s1 + $0xd4] sm:$0xf]
    %v1502 = vld [vmem:[%s1 + $0xd8] sm:$0xf]
    %v1503 = vld [vmem:[%s1 + $0xdc] sm:$0xf]
    %v1504 = vld [vmem:[%s1 + $0xe0] sm:$0xf]
    %v1505 = vld [vmem:[%s1 + $0xe4] sm:$0xf]
    %v1506 = vld [vmem:[%s1 + $0xe8] sm:$0xf]
    %v1507 = vld [vmem:[%s1 + $0xec] sm:$0xf]
    %v1508 = vld [vmem:[%s1 + $0xf0] sm:$0xf]
    %v1509 = vld [vmem:[%s1 + $0xf4] sm:$0xf]
    %v1510 = vld [vmem:[%s1 + $0xf8] sm:$0xf]
    %v1511 = vld [vmem:[%s1 + $0xfc] sm:$0xf]
    %v1512 = vunpack.c.l.bf16 %v1448
    %v1513 = vunpack.c.l.bf16 %v1449
    %v1514 = vunpack.c.l.bf16 %v1450
    %v1515 = vunpack.c.l.bf16 %v1451
    %v1516 = vunpack.c.l.bf16 %v1452
    %v1517 = vunpack.c.l.bf16 %v1453
    %v1518 = vunpack.c.l.bf16 %v1454
    %v1519 = vunpack.c.l.bf16 %v1455
    %v1520 = vunpack.c.l.bf16 %v1456
    %v1521 = vunpack.c.l.bf16 %v1457
    %v1522 = vunpack.c.l.bf16 %v1458
    %v1523 = vunpack.c.l.bf16 %v1459
    %v1524 = vunpack.c.l.bf16 %v1460
    %v1525 = vunpack.c.l.bf16 %v1461
    %v1526 = vunpack.c.l.bf16 %v1462
    %v1527 = vunpack.c.l.bf16 %v1463
    %v1528 = vunpack.c.l.bf16 %v1464
    %v1529 = vunpack.c.l.bf16 %v1465
    %v1530 = vunpack.c.l.bf16 %v1466
    %v1531 = vunpack.c.l.bf16 %v1467
    %v1532 = vunpack.c.l.bf16 %v1468
    %v1533 = vunpack.c.l.bf16 %v1469
    %v1534 = vunpack.c.l.bf16 %v1470
    %v1535 = vunpack.c.l.bf16 %v1471
    %v1536 = vunpack.c.l.bf16 %v1472
    %v1537 = vunpack.c.l.bf16 %v1473
    %v1538 = vunpack.c.l.bf16 %v1474
    %v1539 = vunpack.c.l.bf16 %v1475
    %v1540 = vunpack.c.l.bf16 %v1476
    %v1541 = vunpack.c.l.bf16 %v1477
    %v1542 = vunpack.c.l.bf16 %v1478
    %v1543 = vunpack.c.l.bf16 %v1479
    %v1544 = vunpack.c.l.bf16 %v1480
    %v1545 = vunpack.c.l.bf16 %v1481
    %v1546 = vunpack.c.l.bf16 %v1482
    %v1547 = vunpack.c.l.bf16 %v1483
    %v1548 = vunpack.c.l.bf16 %v1484
    %v1549 = vunpack.c.l.bf16 %v1485
    %v1550 = vunpack.c.l.bf16 %v1486
    %v1551 = vunpack.c.l.bf16 %v1487
    %v1552 = vunpack.c.l.bf16 %v1488
    %v1553 = vunpack.c.l.bf16 %v1489
    %v1554 = vunpack.c.l.bf16 %v1490
    %v1555 = vunpack.c.l.bf16 %v1491
    %v1556 = vunpack.c.l.bf16 %v1492
    %v1557 = vunpack.c.l.bf16 %v1493
    %v1558 = vunpack.c.l.bf16 %v1494
    %v1559 = vunpack.c.l.bf16 %v1495
    %v1560 = vunpack.c.l.bf16 %v1496
    %v1561 = vunpack.c.l.bf16 %v1497
    %v1562 = vunpack.c.l.bf16 %v1498
    %v1563 = vunpack.c.l.bf16 %v1499
    %v1564 = vunpack.c.l.bf16 %v1500
    %v1565 = vunpack.c.l.bf16 %v1501
    %v1566 = vunpack.c.l.bf16 %v1502
    %v1567 = vunpack.c.l.bf16 %v1503
    %v1568 = vunpack.c.l.bf16 %v1504
    %v1569 = vunpack.c.l.bf16 %v1505
    %v1570 = vunpack.c.l.bf16 %v1506
    %v1571 = vunpack.c.l.bf16 %v1507
    %v1572 = vunpack.c.l.bf16 %v1508
    %v1573 = vunpack.c.l.bf16 %v1509
    %v1574 = vunpack.c.l.bf16 %v1510
    %v1575 = vunpack.c.l.bf16 %v1511
    %v1576 = vlaneseq
    %v1577 = vand.u32 %v1576, 127
    %vm1578 = vcmp.lt.s32.totalorder %v1577, 2
    %v1579 = vsel %vm1578, 1, 0
    %v1580 = vcvt.s32.f32 %v1579
    %vm1581 = vcmp.ge.s32.totalorder %v1577, 2
    %vm1582 = vcmp.lt.s32.totalorder %v1577, 4
    %vm1583 = vmand %vm1581, %vm1582
    %v1584 = vsel %vm1583, 1, 0
    %v1585 = vcvt.s32.f32 %v1584
    %v1586 = vand.u32 2147483647, %v874
    %v1587 = vand.u32 2147483647, %v877
    %v1588 = vand.u32 2147483647, %v882
    %v1589 = vand.u32 2147483647, %v885
    %v1590 = vand.u32 2147483647, %v890
    %v1591 = vand.u32 2147483647, %v893
    %v1592 = vand.u32 2147483647, %v898
    %v1593 = vand.u32 2147483647, %v901
    %v1594 = vand.u32 2147483647, %v906
    %v1595 = vand.u32 2147483647, %v909
    %v1596 = vand.u32 2147483647, %v914
    %v1597 = vand.u32 2147483647, %v917
    %v1598 = vand.u32 2147483647, %v922
    %v1599 = vand.u32 2147483647, %v925
    %v1600 = vand.u32 2147483647, %v930
    %v1601 = vand.u32 2147483647, %v933
    %v1602 = vand.u32 2147483647, %v938
    %v1603 = vand.u32 2147483647, %v941
    %v1604 = vand.u32 2147483647, %v946
    %v1605 = vand.u32 2147483647, %v949
    %v1606 = vand.u32 2147483647, %v954
    %v1607 = vand.u32 2147483647, %v957
    %v1608 = vand.u32 2147483647, %v962
    %v1609 = vand.u32 2147483647, %v965
    %v1610 = vand.u32 2147483647, %v970
    %v1611 = vand.u32 2147483647, %v973
    %v1612 = vand.u32 2147483647, %v978
    %v1613 = vand.u32 2147483647, %v981
    %v1614 = vand.u32 2147483647, %v986
    %v1615 = vand.u32 2147483647, %v989
    %v1616 = vand.u32 2147483647, %v994
    %v1617 = vand.u32 2147483647, %v997
    %v1618 = vand.u32 2147483647, %v1002
    %v1619 = vand.u32 2147483647, %v1005
    %v1620 = vand.u32 2147483647, %v1010
    %v1621 = vand.u32 2147483647, %v1013
    %v1622 = vand.u32 2147483647, %v1018
    %v1623 = vand.u32 2147483647, %v1021
    %v1624 = vand.u32 2147483647, %v1026
    %v1625 = vand.u32 2147483647, %v1029
    %v1626 = vand.u32 2147483647, %v1034
    %v1627 = vand.u32 2147483647, %v1037
    %v1628 = vand.u32 2147483647, %v1042
    %v1629 = vand.u32 2147483647, %v1045
    %v1630 = vand.u32 2147483647, %v1050
    %v1631 = vand.u32 2147483647, %v1053
    %v1632 = vand.u32 2147483647, %v1058
    %v1633 = vand.u32 2147483647, %v1061
    %v1634 = vand.u32 2147483647, %v1066
    %v1635 = vand.u32 2147483647, %v1069
    %v1636 = vand.u32 2147483647, %v1074
    %v1637 = vand.u32 2147483647, %v1077
    %v1638 = vand.u32 2147483647, %v1082
    %v1639 = vand.u32 2147483647, %v1085
    %v1640 = vand.u32 2147483647, %v1090
    %v1641 = vand.u32 2147483647, %v1093
    %v1642 = vand.u32 2147483647, %v1098
    %v1643 = vand.u32 2147483647, %v1101
    %v1644 = vand.u32 2147483647, %v1106
    %v1645 = vand.u32 2147483647, %v1109
    %v1646 = vand.u32 2147483647, %v1114
    %v1647 = vand.u32 2147483647, %v1117
    %v1648 = vand.u32 2147483647, %v1122
    %v1649 = vand.u32 2147483647, %v1125
    %v1650 = vsub.f32 0.0, %v1586
    %v1651 = vsub.f32 0.0, %v1587
    %v1652 = vsub.f32 0.0, %v1588
    %v1653 = vsub.f32 0.0, %v1589
    %v1654 = vsub.f32 0.0, %v1590
    %v1655 = vsub.f32 0.0, %v1591
    %v1656 = vsub.f32 0.0, %v1592
    %v1657 = vsub.f32 0.0, %v1593
    %v1658 = vsub.f32 0.0, %v1594
    %v1659 = vsub.f32 0.0, %v1595
    %v1660 = vsub.f32 0.0, %v1596
    %v1661 = vsub.f32 0.0, %v1597
    %v1662 = vsub.f32 0.0, %v1598
    %v1663 = vsub.f32 0.0, %v1599
    %v1664 = vsub.f32 0.0, %v1600
    %v1665 = vsub.f32 0.0, %v1601
    %v1666 = vsub.f32 0.0, %v1602
    %v1667 = vsub.f32 0.0, %v1603
    %v1668 = vsub.f32 0.0, %v1604
    %v1669 = vsub.f32 0.0, %v1605
    %v1670 = vsub.f32 0.0, %v1606
    %v1671 = vsub.f32 0.0, %v1607
    %v1672 = vsub.f32 0.0, %v1608
    %v1673 = vsub.f32 0.0, %v1609
    %v1674 = vsub.f32 0.0, %v1610
    %v1675 = vsub.f32 0.0, %v1611
    %v1676 = vsub.f32 0.0, %v1612
    %v1677 = vsub.f32 0.0, %v1613
    %v1678 = vsub.f32 0.0, %v1614
    %v1679 = vsub.f32 0.0, %v1615
    %v1680 = vsub.f32 0.0, %v1616
    %v1681 = vsub.f32 0.0, %v1617
    %v1682 = vsub.f32 0.0, %v1618
    %v1683 = vsub.f32 0.0, %v1619
    %v1684 = vsub.f32 0.0, %v1620
    %v1685 = vsub.f32 0.0, %v1621
    %v1686 = vsub.f32 0.0, %v1622
    %v1687 = vsub.f32 0.0, %v1623
    %v1688 = vsub.f32 0.0, %v1624
    %v1689 = vsub.f32 0.0, %v1625
    %v1690 = vsub.f32 0.0, %v1626
    %v1691 = vsub.f32 0.0, %v1627
    %v1692 = vsub.f32 0.0, %v1628
    %v1693 = vsub.f32 0.0, %v1629
    %v1694 = vsub.f32 0.0, %v1630
    %v1695 = vsub.f32 0.0, %v1631
    %v1696 = vsub.f32 0.0, %v1632
    %v1697 = vsub.f32 0.0, %v1633
    %v1698 = vsub.f32 0.0, %v1634
    %v1699 = vsub.f32 0.0, %v1635
    %v1700 = vsub.f32 0.0, %v1636
    %v1701 = vsub.f32 0.0, %v1637
    %v1702 = vsub.f32 0.0, %v1638
    %v1703 = vsub.f32 0.0, %v1639
    %v1704 = vsub.f32 0.0, %v1640
    %v1705 = vsub.f32 0.0, %v1641
    %v1706 = vsub.f32 0.0, %v1642
    %v1707 = vsub.f32 0.0, %v1643
    %v1708 = vsub.f32 0.0, %v1644
    %v1709 = vsub.f32 0.0, %v1645
    %v1710 = vsub.f32 0.0, %v1646
    %v1711 = vsub.f32 0.0, %v1647
    %v1712 = vsub.f32 0.0, %v1648
    %v1713 = vsub.f32 0.0, %v1649
    %v1714 = vmul.f32 %v1650, 1.442695
    %v1715 = vpow.pop %v1714
    %v1716 = vmul.f32 %v1651, 1.442695
    %v1717 = vpow.pop %v1716
    %v1718 = vmul.f32 %v1652, 1.442695
    %v1719 = vpow.pop %v1718
    %v1720 = vmul.f32 %v1653, 1.442695
    %v1721 = vpow.pop %v1720
    %v1722 = vmul.f32 %v1654, 1.442695
    %v1723 = vpow.pop %v1722
    %v1724 = vmul.f32 %v1655, 1.442695
    %v1725 = vpow.pop %v1724
    %v1726 = vmul.f32 %v1656, 1.442695
    %v1727 = vpow.pop %v1726
    %v1728 = vmul.f32 %v1657, 1.442695
    %v1729 = vpow.pop %v1728
    %v1730 = vmul.f32 %v1658, 1.442695
    %v1731 = vpow.pop %v1730
    %v1732 = vmul.f32 %v1659, 1.442695
    %v1733 = vpow.pop %v1732
    %v1734 = vmul.f32 %v1660, 1.442695
    %v1735 = vpow.pop %v1734
    %v1736 = vmul.f32 %v1661, 1.442695
    %v1737 = vpow.pop %v1736
    %v1738 = vmul.f32 %v1662, 1.442695
    %v1739 = vpow.pop %v1738
    %v1740 = vmul.f32 %v1663, 1.442695
    %v1741 = vpow.pop %v1740
    %v1742 = vmul.f32 %v1664, 1.442695
    %v1743 = vpow.pop %v1742
    %v1744 = vmul.f32 %v1665, 1.442695
    %v1745 = vpow.pop %v1744
    %v1746 = vmul.f32 %v1666, 1.442695
    %v1747 = vpow.pop %v1746
    %v1748 = vmul.f32 %v1667, 1.442695
    %v1749 = vpow.pop %v1748
    %v1750 = vmul.f32 %v1668, 1.442695
    %v1751 = vpow.pop %v1750
    %v1752 = vmul.f32 %v1669, 1.442695
    %v1753 = vpow.pop %v1752
    %v1754 = vmul.f32 %v1670, 1.442695
    %v1755 = vpow.pop %v1754
    %v1756 = vmul.f32 %v1671, 1.442695
    %v1757 = vpow.pop %v1756
    %v1758 = vmul.f32 %v1672, 1.442695
    %v1759 = vpow.pop %v1758
    %v1760 = vmul.f32 %v1673, 1.442695
    %v1761 = vpow.pop %v1760
    %v1762 = vmul.f32 %v1674, 1.442695
    %v1763 = vpow.pop %v1762
    %v1764 = vmul.f32 %v1675, 1.442695
    %v1765 = vpow.pop %v1764
    %v1766 = vmul.f32 %v1676, 1.442695
    %v1767 = vpow.pop %v1766
    %v1768 = vmul.f32 %v1677, 1.442695
    %v1769 = vpow.pop %v1768
    %v1770 = vmul.f32 %v1678, 1.442695
    %v1771 = vpow.pop %v1770
    %v1772 = vmul.f32 %v1679, 1.442695
    %v1773 = vpow.pop %v1772
    %v1774 = vmul.f32 %v1680, 1.442695
    %v1775 = vpow.pop %v1774
    %v1776 = vmul.f32 %v1681, 1.442695
    %v1777 = vpow.pop %v1776
    %v1778 = vmul.f32 %v1682, 1.442695
    %v1779 = vpow.pop %v1778
    %v1780 = vmul.f32 %v1683, 1.442695
    %v1781 = vpow.pop %v1780
    %v1782 = vmul.f32 %v1684, 1.442695
    %v1783 = vpow.pop %v1782
    %v1784 = vmul.f32 %v1685, 1.442695
    %v1785 = vpow.pop %v1784
    %v1786 = vmul.f32 %v1686, 1.442695
    %v1787 = vpow.pop %v1786
    %v1788 = vmul.f32 %v1687, 1.442695
    %v1789 = vpow.pop %v1788
    %v1790 = vmul.f32 %v1688, 1.442695
    %v1791 = vpow.pop %v1790
    %v1792 = vmul.f32 %v1689, 1.442695
    %v1793 = vpow.pop %v1792
    %v1794 = vmul.f32 %v1690, 1.442695
    %v1795 = vpow.pop %v1794
    %v1796 = vmul.f32 %v1691, 1.442695
    %v1797 = vpow.pop %v1796
    %v1798 = vmul.f32 %v1692, 1.442695
    %v1799 = vpow.pop %v1798
    %v1800 = vmul.f32 %v1693, 1.442695
    %v1801 = vpow.pop %v1800
    %v1802 = vmul.f32 %v1694, 1.442695
    %v1803 = vpow.pop %v1802
    %v1804 = vmul.f32 %v1695, 1.442695
    %v1805 = vpow.pop %v1804
    %v1806 = vmul.f32 %v1696, 1.442695
    %v1807 = vpow.pop %v1806
    %v1808 = vmul.f32 %v1697, 1.442695
    %v1809 = vpow.pop %v1808
    %v1810 = vmul.f32 %v1698, 1.442695
    %v1811 = vpow.pop %v1810
    %v1812 = vmul.f32 %v1699, 1.442695
    %v1813 = vpow.pop %v1812
    %v1814 = vmul.f32 %v1700, 1.442695
    %v1815 = vpow.pop %v1814
    %v1816 = vmul.f32 %v1701, 1.442695
    %v1817 = vpow.pop %v1816
    %v1818 = vmul.f32 %v1702, 1.442695
    %v1819 = vpow.pop %v1818
    %v1820 = vmul.f32 %v1703, 1.442695
    %v1821 = vpow.pop %v1820
    %v1822 = vmul.f32 %v1704, 1.442695
    %v1823 = vpow.pop %v1822
    %v1824 = vmul.f32 %v1705, 1.442695
    %v1825 = vpow.pop %v1824
    %v1826 = vmul.f32 %v1706, 1.442695
    %v1827 = vpow.pop %v1826
    %v1828 = vmul.f32 %v1707, 1.442695
    %v1829 = vpow.pop %v1828
    %v1830 = vmul.f32 %v1708, 1.442695
    %v1831 = vpow.pop %v1830
    %v1832 = vmul.f32 %v1709, 1.442695
    %v1833 = vpow.pop %v1832
    %v1834 = vmul.f32 %v1710, 1.442695
    %v1835 = vpow.pop %v1834
    %v1836 = vmul.f32 %v1711, 1.442695
    %v1837 = vpow.pop %v1836
    %v1838 = vmul.f32 %v1712, 1.442695
    %v1839 = vpow.pop %v1838
    %v1840 = vmul.f32 %v1713, 1.442695
    %v1841 = vpow.pop %v1840
    %v1842 = vadd.f32 %v1715, 1.0
    %v1843 = vadd.f32 %v1717, 1.0
    %v1844 = vadd.f32 %v1719, 1.0
    %v1845 = vadd.f32 %v1721, 1.0
    %v1846 = vadd.f32 %v1723, 1.0
    %v1847 = vadd.f32 %v1725, 1.0
    %v1848 = vadd.f32 %v1727, 1.0
    %v1849 = vadd.f32 %v1729, 1.0
    %v1850 = vadd.f32 %v1731, 1.0
    %v1851 = vadd.f32 %v1733, 1.0
    %v1852 = vadd.f32 %v1735, 1.0
    %v1853 = vadd.f32 %v1737, 1.0
    %v1854 = vadd.f32 %v1739, 1.0
    %v1855 = vadd.f32 %v1741, 1.0
    %v1856 = vadd.f32 %v1743, 1.0
    %v1857 = vadd.f32 %v1745, 1.0
    %v1858 = vadd.f32 %v1747, 1.0
    %v1859 = vadd.f32 %v1749, 1.0
    %v1860 = vadd.f32 %v1751, 1.0
    %v1861 = vadd.f32 %v1753, 1.0
    %v1862 = vadd.f32 %v1755, 1.0
    %v1863 = vadd.f32 %v1757, 1.0
    %v1864 = vadd.f32 %v1759, 1.0
    %v1865 = vadd.f32 %v1761, 1.0
    %v1866 = vadd.f32 %v1763, 1.0
    %v1867 = vadd.f32 %v1765, 1.0
    %v1868 = vadd.f32 %v1767, 1.0
    %v1869 = vadd.f32 %v1769, 1.0
    %v1870 = vadd.f32 %v1771, 1.0
    %v1871 = vadd.f32 %v1773, 1.0
    %v1872 = vadd.f32 %v1775, 1.0
    %v1873 = vadd.f32 %v1777, 1.0
    %v1874 = vadd.f32 %v1779, 1.0
    %v1875 = vadd.f32 %v1781, 1.0
    %v1876 = vadd.f32 %v1783, 1.0
    %v1877 = vadd.f32 %v1785, 1.0
    %v1878 = vadd.f32 %v1787, 1.0
    %v1879 = vadd.f32 %v1789, 1.0
    %v1880 = vadd.f32 %v1791, 1.0
    %v1881 = vadd.f32 %v1793, 1.0
    %v1882 = vadd.f32 %v1795, 1.0
    %v1883 = vadd.f32 %v1797, 1.0
    %v1884 = vadd.f32 %v1799, 1.0
    %v1885 = vadd.f32 %v1801, 1.0
    %v1886 = vadd.f32 %v1803, 1.0
    %v1887 = vadd.f32 %v1805, 1.0
    %v1888 = vadd.f32 %v1807, 1.0
    %v1889 = vadd.f32 %v1809, 1.0
    %v1890 = vadd.f32 %v1811, 1.0
    %v1891 = vadd.f32 %v1813, 1.0
    %v1892 = vadd.f32 %v1815, 1.0
    %v1893 = vadd.f32 %v1817, 1.0
    %v1894 = vadd.f32 %v1819, 1.0
    %v1895 = vadd.f32 %v1821, 1.0
    %v1896 = vadd.f32 %v1823, 1.0
    %v1897 = vadd.f32 %v1825, 1.0
    %v1898 = vadd.f32 %v1827, 1.0
    %v1899 = vadd.f32 %v1829, 1.0
    %v1900 = vadd.f32 %v1831, 1.0
    %v1901 = vadd.f32 %v1833, 1.0
    %v1902 = vadd.f32 %v1835, 1.0
    %v1903 = vadd.f32 %v1837, 1.0
    %v1904 = vadd.f32 %v1839, 1.0
    %v1905 = vadd.f32 %v1841, 1.0
    %v1906 = vlog2.pop %v1842
    %v1907 = vmul.f32 %v1906, 0.6931472
    %v1908 = vlog2.pop %v1843
    %v1909 = vmul.f32 %v1908, 0.6931472
    %v1910 = vlog2.pop %v1844
    %v1911 = vmul.f32 %v1910, 0.6931472
    %v1912 = vlog2.pop %v1845
    %v1913 = vmul.f32 %v1912, 0.6931472
    %v1914 = vlog2.pop %v1846
    %v1915 = vmul.f32 %v1914, 0.6931472
    %v1916 = vlog2.pop %v1847
    %v1917 = vmul.f32 %v1916, 0.6931472
    %v1918 = vlog2.pop %v1848
    %v1919 = vmul.f32 %v1918, 0.6931472
    %v1920 = vlog2.pop %v1849
    %v1921 = vmul.f32 %v1920, 0.6931472
    %v1922 = vlog2.pop %v1850
    %v1923 = vmul.f32 %v1922, 0.6931472
    %v1924 = vlog2.pop %v1851
    %v1925 = vmul.f32 %v1924, 0.6931472
    %v1926 = vlog2.pop %v1852
    %v1927 = vmul.f32 %v1926, 0.6931472
    %v1928 = vlog2.pop %v1853
    %v1929 = vmul.f32 %v1928, 0.6931472
    %v1930 = vlog2.pop %v1854
    %v1931 = vmul.f32 %v1930, 0.6931472
    %v1932 = vlog2.pop %v1855
    %v1933 = vmul.f32 %v1932, 0.6931472
    %v1934 = vlog2.pop %v1856
    %v1935 = vmul.f32 %v1934, 0.6931472
    %v1936 = vlog2.pop %v1857
    %v1937 = vmul.f32 %v1936, 0.6931472
    %v1938 = vlog2.pop %v1858
    %v1939 = vmul.f32 %v1938, 0.6931472
    %v1940 = vlog2.pop %v1859
    %v1941 = vmul.f32 %v1940, 0.6931472
    %v1942 = vlog2.pop %v1860
    %v1943 = vmul.f32 %v1942, 0.6931472
    %v1944 = vlog2.pop %v1861
    %v1945 = vmul.f32 %v1944, 0.6931472
    %v1946 = vlog2.pop %v1862
    %v1947 = vmul.f32 %v1946, 0.6931472
    %v1948 = vlog2.pop %v1863
    %v1949 = vmul.f32 %v1948, 0.6931472
    %v1950 = vlog2.pop %v1864
    %v1951 = vmul.f32 %v1950, 0.6931472
    %v1952 = vlog2.pop %v1865
    %v1953 = vmul.f32 %v1952, 0.6931472
    %v1954 = vlog2.pop %v1866
    %v1955 = vmul.f32 %v1954, 0.6931472
    %v1956 = vlog2.pop %v1867
    %v1957 = vmul.f32 %v1956, 0.6931472
    %v1958 = vlog2.pop %v1868
    %v1959 = vmul.f32 %v1958, 0.6931472
    %v1960 = vlog2.pop %v1869
    %v1961 = vmul.f32 %v1960, 0.6931472
    %v1962 = vlog2.pop %v1870
    %v1963 = vmul.f32 %v1962, 0.6931472
    %v1964 = vlog2.pop %v1871
    %v1965 = vmul.f32 %v1964, 0.6931472
    %v1966 = vlog2.pop %v1872
    %v1967 = vmul.f32 %v1966, 0.6931472
    %v1968 = vlog2.pop %v1873
    %v1969 = vmul.f32 %v1968, 0.6931472
    %v1970 = vlog2.pop %v1874
    %v1971 = vmul.f32 %v1970, 0.6931472
    %v1972 = vlog2.pop %v1875
    %v1973 = vmul.f32 %v1972, 0.6931472
    %v1974 = vlog2.pop %v1876
    %v1975 = vmul.f32 %v1974, 0.6931472
    %v1976 = vlog2.pop %v1877
    %v1977 = vmul.f32 %v1976, 0.6931472
    %v1978 = vlog2.pop %v1878
    %v1979 = vmul.f32 %v1978, 0.6931472
    %v1980 = vlog2.pop %v1879
    %v1981 = vmul.f32 %v1980, 0.6931472
    %v1982 = vlog2.pop %v1880
    %v1983 = vmul.f32 %v1982, 0.6931472
    %v1984 = vlog2.pop %v1881
    %v1985 = vmul.f32 %v1984, 0.6931472
    %v1986 = vlog2.pop %v1882
    %v1987 = vmul.f32 %v1986, 0.6931472
    %v1988 = vlog2.pop %v1883
    %v1989 = vmul.f32 %v1988, 0.6931472
    %v1990 = vlog2.pop %v1884
    %v1991 = vmul.f32 %v1990, 0.6931472
    %v1992 = vlog2.pop %v1885
    %v1993 = vmul.f32 %v1992, 0.6931472
    %v1994 = vlog2.pop %v1886
    %v1995 = vmul.f32 %v1994, 0.6931472
    %v1996 = vlog2.pop %v1887
    %v1997 = vmul.f32 %v1996, 0.6931472
    %v1998 = vlog2.pop %v1888
    %v1999 = vmul.f32 %v1998, 0.6931472
    %v2000 = vlog2.pop %v1889
    %v2001 = vmul.f32 %v2000, 0.6931472
    %v2002 = vlog2.pop %v1890
    %v2003 = vmul.f32 %v2002, 0.6931472
    %v2004 = vlog2.pop %v1891
    %v2005 = vmul.f32 %v2004, 0.6931472
    %v2006 = vlog2.pop %v1892
    %v2007 = vmul.f32 %v2006, 0.6931472
    %v2008 = vlog2.pop %v1893
    %v2009 = vmul.f32 %v2008, 0.6931472
    %v2010 = vlog2.pop %v1894
    %v2011 = vmul.f32 %v2010, 0.6931472
    %v2012 = vlog2.pop %v1895
    %v2013 = vmul.f32 %v2012, 0.6931472
    %v2014 = vlog2.pop %v1896
    %v2015 = vmul.f32 %v2014, 0.6931472
    %v2016 = vlog2.pop %v1897
    %v2017 = vmul.f32 %v2016, 0.6931472
    %v2018 = vlog2.pop %v1898
    %v2019 = vmul.f32 %v2018, 0.6931472
    %v2020 = vlog2.pop %v1899
    %v2021 = vmul.f32 %v2020, 0.6931472
    %v2022 = vlog2.pop %v1900
    %v2023 = vmul.f32 %v2022, 0.6931472
    %v2024 = vlog2.pop %v1901
    %v2025 = vmul.f32 %v2024, 0.6931472
    %v2026 = vlog2.pop %v1902
    %v2027 = vmul.f32 %v2026, 0.6931472
    %v2028 = vlog2.pop %v1903
    %v2029 = vmul.f32 %v2028, 0.6931472
    %v2030 = vlog2.pop %v1904
    %v2031 = vmul.f32 %v2030, 0.6931472
    %v2032 = vlog2.pop %v1905
    %v2033 = vmul.f32 %v2032, 0.6931472
    %v2034 = vmin.f32 %v874, 0.0
    %v2035 = vmin.f32 %v877, 0.0
    %v2036 = vmin.f32 %v882, 0.0
    %v2037 = vmin.f32 %v885, 0.0
    %v2038 = vmin.f32 %v890, 0.0
    %v2039 = vmin.f32 %v893, 0.0
    %v2040 = vmin.f32 %v898, 0.0
    %v2041 = vmin.f32 %v901, 0.0
    %v2042 = vmin.f32 %v906, 0.0
    %v2043 = vmin.f32 %v909, 0.0
    %v2044 = vmin.f32 %v914, 0.0
    %v2045 = vmin.f32 %v917, 0.0
    %v2046 = vmin.f32 %v922, 0.0
    %v2047 = vmin.f32 %v925, 0.0
    %v2048 = vmin.f32 %v930, 0.0
    %v2049 = vmin.f32 %v933, 0.0
    %v2050 = vmin.f32 %v938, 0.0
    %v2051 = vmin.f32 %v941, 0.0
    %v2052 = vmin.f32 %v946, 0.0
    %v2053 = vmin.f32 %v949, 0.0
    %v2054 = vmin.f32 %v954, 0.0
    %v2055 = vmin.f32 %v957, 0.0
    %v2056 = vmin.f32 %v962, 0.0
    %v2057 = vmin.f32 %v965, 0.0
    %v2058 = vmin.f32 %v970, 0.0
    %v2059 = vmin.f32 %v973, 0.0
    %v2060 = vmin.f32 %v978, 0.0
    %v2061 = vmin.f32 %v981, 0.0
    %v2062 = vmin.f32 %v986, 0.0
    %v2063 = vmin.f32 %v989, 0.0
    %v2064 = vmin.f32 %v994, 0.0
    %v2065 = vmin.f32 %v997, 0.0
    %v2066 = vmin.f32 %v1002, 0.0
    %v2067 = vmin.f32 %v1005, 0.0
    %v2068 = vmin.f32 %v1010, 0.0
    %v2069 = vmin.f32 %v1013, 0.0
    %v2070 = vmin.f32 %v1018, 0.0
    %v2071 = vmin.f32 %v1021, 0.0
    %v2072 = vmin.f32 %v1026, 0.0
    %v2073 = vmin.f32 %v1029, 0.0
    %v2074 = vmin.f32 %v1034, 0.0
    %v2075 = vmin.f32 %v1037, 0.0
    %v2076 = vmin.f32 %v1042, 0.0
    %v2077 = vmin.f32 %v1045, 0.0
    %v2078 = vmin.f32 %v1050, 0.0
    %v2079 = vmin.f32 %v1053, 0.0
    %v2080 = vmin.f32 %v1058, 0.0
    %v2081 = vmin.f32 %v1061, 0.0
    %v2082 = vmin.f32 %v1066, 0.0
    %v2083 = vmin.f32 %v1069, 0.0
    %v2084 = vmin.f32 %v1074, 0.0
    %v2085 = vmin.f32 %v1077, 0.0
    %v2086 = vmin.f32 %v1082, 0.0
    %v2087 = vmin.f32 %v1085, 0.0
    %v2088 = vmin.f32 %v1090, 0.0
    %v2089 = vmin.f32 %v1093, 0.0
    %v2090 = vmin.f32 %v1098, 0.0
    %v2091 = vmin.f32 %v1101, 0.0
    %v2092 = vmin.f32 %v1106, 0.0
    %v2093 = vmin.f32 %v1109, 0.0
    %v2094 = vmin.f32 %v1114, 0.0
    %v2095 = vmin.f32 %v1117, 0.0
    %v2096 = vmin.f32 %v1122, 0.0
    %v2097 = vmin.f32 %v1125, 0.0
    %v2098 = vsub.f32 %v2034, %v1907
    %v2099 = vsub.f32 %v2035, %v1909
    %v2100 = vsub.f32 %v2036, %v1911
    %v2101 = vsub.f32 %v2037, %v1913
    %v2102 = vsub.f32 %v2038, %v1915
    %v2103 = vsub.f32 %v2039, %v1917
    %v2104 = vsub.f32 %v2040, %v1919
    %v2105 = vsub.f32 %v2041, %v1921
    %v2106 = vsub.f32 %v2042, %v1923
    %v2107 = vsub.f32 %v2043, %v1925
    %v2108 = vsub.f32 %v2044, %v1927
    %v2109 = vsub.f32 %v2045, %v1929
    %v2110 = vsub.f32 %v2046, %v1931
    %v2111 = vsub.f32 %v2047, %v1933
    %v2112 = vsub.f32 %v2048, %v1935
    %v2113 = vsub.f32 %v2049, %v1937
    %v2114 = vsub.f32 %v2050, %v1939
    %v2115 = vsub.f32 %v2051, %v1941
    %v2116 = vsub.f32 %v2052, %v1943
    %v2117 = vsub.f32 %v2053, %v1945
    %v2118 = vsub.f32 %v2054, %v1947
    %v2119 = vsub.f32 %v2055, %v1949
    %v2120 = vsub.f32 %v2056, %v1951
    %v2121 = vsub.f32 %v2057, %v1953
    %v2122 = vsub.f32 %v2058, %v1955
    %v2123 = vsub.f32 %v2059, %v1957
    %v2124 = vsub.f32 %v2060, %v1959
    %v2125 = vsub.f32 %v2061, %v1961
    %v2126 = vsub.f32 %v2062, %v1963
    %v2127 = vsub.f32 %v2063, %v1965
    %v2128 = vsub.f32 %v2064, %v1967
    %v2129 = vsub.f32 %v2065, %v1969
    %v2130 = vsub.f32 %v2066, %v1971
    %v2131 = vsub.f32 %v2067, %v1973
    %v2132 = vsub.f32 %v2068, %v1975
    %v2133 = vsub.f32 %v2069, %v1977
    %v2134 = vsub.f32 %v2070, %v1979
    %v2135 = vsub.f32 %v2071, %v1981
    %v2136 = vsub.f32 %v2072, %v1983
    %v2137 = vsub.f32 %v2073, %v1985
    %v2138 = vsub.f32 %v2074, %v1987
    %v2139 = vsub.f32 %v2075, %v1989
    %v2140 = vsub.f32 %v2076, %v1991
    %v2141 = vsub.f32 %v2077, %v1993
    %v2142 = vsub.f32 %v2078, %v1995
    %v2143 = vsub.f32 %v2079, %v1997
    %v2144 = vsub.f32 %v2080, %v1999
    %v2145 = vsub.f32 %v2081, %v2001
    %v2146 = vsub.f32 %v2082, %v2003
    %v2147 = vsub.f32 %v2083, %v2005
    %v2148 = vsub.f32 %v2084, %v2007
    %v2149 = vsub.f32 %v2085, %v2009
    %v2150 = vsub.f32 %v2086, %v2011
    %v2151 = vsub.f32 %v2087, %v2013
    %v2152 = vsub.f32 %v2088, %v2015
    %v2153 = vsub.f32 %v2089, %v2017
    %v2154 = vsub.f32 %v2090, %v2019
    %v2155 = vsub.f32 %v2091, %v2021
    %v2156 = vsub.f32 %v2092, %v2023
    %v2157 = vsub.f32 %v2093, %v2025
    %v2158 = vsub.f32 %v2094, %v2027
    %v2159 = vsub.f32 %v2095, %v2029
    %v2160 = vsub.f32 %v2096, %v2031
    %v2161 = vsub.f32 %v2097, %v2033
    %v2162 = vmax.f32 %v874, 0.0
    %v2163 = vmax.f32 %v877, 0.0
    %v2164 = vmax.f32 %v882, 0.0
    %v2165 = vmax.f32 %v885, 0.0
    %v2166 = vmax.f32 %v890, 0.0
    %v2167 = vmax.f32 %v893, 0.0
    %v2168 = vmax.f32 %v898, 0.0
    %v2169 = vmax.f32 %v901, 0.0
    %v2170 = vmax.f32 %v906, 0.0
    %v2171 = vmax.f32 %v909, 0.0
    %v2172 = vmax.f32 %v914, 0.0
    %v2173 = vmax.f32 %v917, 0.0
    %v2174 = vmax.f32 %v922, 0.0
    %v2175 = vmax.f32 %v925, 0.0
    %v2176 = vmax.f32 %v930, 0.0
    %v2177 = vmax.f32 %v933, 0.0
    %v2178 = vmax.f32 %v938, 0.0
    %v2179 = vmax.f32 %v941, 0.0
    %v2180 = vmax.f32 %v946, 0.0
    %v2181 = vmax.f32 %v949, 0.0
    %v2182 = vmax.f32 %v954, 0.0
    %v2183 = vmax.f32 %v957, 0.0
    %v2184 = vmax.f32 %v962, 0.0
    %v2185 = vmax.f32 %v965, 0.0
    %v2186 = vmax.f32 %v970, 0.0
    %v2187 = vmax.f32 %v973, 0.0
    %v2188 = vmax.f32 %v978, 0.0
    %v2189 = vmax.f32 %v981, 0.0
    %v2190 = vmax.f32 %v986, 0.0
    %v2191 = vmax.f32 %v989, 0.0
    %v2192 = vmax.f32 %v994, 0.0
    %v2193 = vmax.f32 %v997, 0.0
    %v2194 = vmax.f32 %v1002, 0.0
    %v2195 = vmax.f32 %v1005, 0.0
    %v2196 = vmax.f32 %v1010, 0.0
    %v2197 = vmax.f32 %v1013, 0.0
    %v2198 = vmax.f32 %v1018, 0.0
    %v2199 = vmax.f32 %v1021, 0.0
    %v2200 = vmax.f32 %v1026, 0.0
    %v2201 = vmax.f32 %v1029, 0.0
    %v2202 = vmax.f32 %v1034, 0.0
    %v2203 = vmax.f32 %v1037, 0.0
    %v2204 = vmax.f32 %v1042, 0.0
    %v2205 = vmax.f32 %v1045, 0.0
    %v2206 = vmax.f32 %v1050, 0.0
    %v2207 = vmax.f32 %v1053, 0.0
    %v2208 = vmax.f32 %v1058, 0.0
    %v2209 = vmax.f32 %v1061, 0.0
    %v2210 = vmax.f32 %v1066, 0.0
    %v2211 = vmax.f32 %v1069, 0.0
    %v2212 = vmax.f32 %v1074, 0.0
    %v2213 = vmax.f32 %v1077, 0.0
    %v2214 = vmax.f32 %v1082, 0.0
    %v2215 = vmax.f32 %v1085, 0.0
    %v2216 = vmax.f32 %v1090, 0.0
    %v2217 = vmax.f32 %v1093, 0.0
    %v2218 = vmax.f32 %v1098, 0.0
    %v2219 = vmax.f32 %v1101, 0.0
    %v2220 = vmax.f32 %v1106, 0.0
    %v2221 = vmax.f32 %v1109, 0.0
    %v2222 = vmax.f32 %v1114, 0.0
    %v2223 = vmax.f32 %v1117, 0.0
    %v2224 = vmax.f32 %v1122, 0.0
    %v2225 = vmax.f32 %v1125, 0.0
    %v2226 = vsub.f32 0.0, %v2162
    %v2227 = vsub.f32 0.0, %v2163
    %v2228 = vsub.f32 0.0, %v2164
    %v2229 = vsub.f32 0.0, %v2165
    %v2230 = vsub.f32 0.0, %v2166
    %v2231 = vsub.f32 0.0, %v2167
    %v2232 = vsub.f32 0.0, %v2168
    %v2233 = vsub.f32 0.0, %v2169
    %v2234 = vsub.f32 0.0, %v2170
    %v2235 = vsub.f32 0.0, %v2171
    %v2236 = vsub.f32 0.0, %v2172
    %v2237 = vsub.f32 0.0, %v2173
    %v2238 = vsub.f32 0.0, %v2174
    %v2239 = vsub.f32 0.0, %v2175
    %v2240 = vsub.f32 0.0, %v2176
    %v2241 = vsub.f32 0.0, %v2177
    %v2242 = vsub.f32 0.0, %v2178
    %v2243 = vsub.f32 0.0, %v2179
    %v2244 = vsub.f32 0.0, %v2180
    %v2245 = vsub.f32 0.0, %v2181
    %v2246 = vsub.f32 0.0, %v2182
    %v2247 = vsub.f32 0.0, %v2183
    %v2248 = vsub.f32 0.0, %v2184
    %v2249 = vsub.f32 0.0, %v2185
    %v2250 = vsub.f32 0.0, %v2186
    %v2251 = vsub.f32 0.0, %v2187
    %v2252 = vsub.f32 0.0, %v2188
    %v2253 = vsub.f32 0.0, %v2189
    %v2254 = vsub.f32 0.0, %v2190
    %v2255 = vsub.f32 0.0, %v2191
    %v2256 = vsub.f32 0.0, %v2192
    %v2257 = vsub.f32 0.0, %v2193
    %v2258 = vsub.f32 0.0, %v2194
    %v2259 = vsub.f32 0.0, %v2195
    %v2260 = vsub.f32 0.0, %v2196
    %v2261 = vsub.f32 0.0, %v2197
    %v2262 = vsub.f32 0.0, %v2198
    %v2263 = vsub.f32 0.0, %v2199
    %v2264 = vsub.f32 0.0, %v2200
    %v2265 = vsub.f32 0.0, %v2201
    %v2266 = vsub.f32 0.0, %v2202
    %v2267 = vsub.f32 0.0, %v2203
    %v2268 = vsub.f32 0.0, %v2204
    %v2269 = vsub.f32 0.0, %v2205
    %v2270 = vsub.f32 0.0, %v2206
    %v2271 = vsub.f32 0.0, %v2207
    %v2272 = vsub.f32 0.0, %v2208
    %v2273 = vsub.f32 0.0, %v2209
    %v2274 = vsub.f32 0.0, %v2210
    %v2275 = vsub.f32 0.0, %v2211
    %v2276 = vsub.f32 0.0, %v2212
    %v2277 = vsub.f32 0.0, %v2213
    %v2278 = vsub.f32 0.0, %v2214
    %v2279 = vsub.f32 0.0, %v2215
    %v2280 = vsub.f32 0.0, %v2216
    %v2281 = vsub.f32 0.0, %v2217
    %v2282 = vsub.f32 0.0, %v2218
    %v2283 = vsub.f32 0.0, %v2219
    %v2284 = vsub.f32 0.0, %v2220
    %v2285 = vsub.f32 0.0, %v2221
    %v2286 = vsub.f32 0.0, %v2222
    %v2287 = vsub.f32 0.0, %v2223
    %v2288 = vsub.f32 0.0, %v2224
    %v2289 = vsub.f32 0.0, %v2225
    %v2290 = vsub.f32 %v2226, %v1907
    %v2291 = vsub.f32 %v2227, %v1909
    %v2292 = vsub.f32 %v2228, %v1911
    %v2293 = vsub.f32 %v2229, %v1913
    %v2294 = vsub.f32 %v2230, %v1915
    %v2295 = vsub.f32 %v2231, %v1917
    %v2296 = vsub.f32 %v2232, %v1919
    %v2297 = vsub.f32 %v2233, %v1921
    %v2298 = vsub.f32 %v2234, %v1923
    %v2299 = vsub.f32 %v2235, %v1925
    %v2300 = vsub.f32 %v2236, %v1927
    %v2301 = vsub.f32 %v2237, %v1929
    %v2302 = vsub.f32 %v2238, %v1931
    %v2303 = vsub.f32 %v2239, %v1933
    %v2304 = vsub.f32 %v2240, %v1935
    %v2305 = vsub.f32 %v2241, %v1937
    %v2306 = vsub.f32 %v2242, %v1939
    %v2307 = vsub.f32 %v2243, %v1941
    %v2308 = vsub.f32 %v2244, %v1943
    %v2309 = vsub.f32 %v2245, %v1945
    %v2310 = vsub.f32 %v2246, %v1947
    %v2311 = vsub.f32 %v2247, %v1949
    %v2312 = vsub.f32 %v2248, %v1951
    %v2313 = vsub.f32 %v2249, %v1953
    %v2314 = vsub.f32 %v2250, %v1955
    %v2315 = vsub.f32 %v2251, %v1957
    %v2316 = vsub.f32 %v2252, %v1959
    %v2317 = vsub.f32 %v2253, %v1961
    %v2318 = vsub.f32 %v2254, %v1963
    %v2319 = vsub.f32 %v2255, %v1965
    %v2320 = vsub.f32 %v2256, %v1967
    %v2321 = vsub.f32 %v2257, %v1969
    %v2322 = vsub.f32 %v2258, %v1971
    %v2323 = vsub.f32 %v2259, %v1973
    %v2324 = vsub.f32 %v2260, %v1975
    %v2325 = vsub.f32 %v2261, %v1977
    %v2326 = vsub.f32 %v2262, %v1979
    %v2327 = vsub.f32 %v2263, %v1981
    %v2328 = vsub.f32 %v2264, %v1983
    %v2329 = vsub.f32 %v2265, %v1985
    %v2330 = vsub.f32 %v2266, %v1987
    %v2331 = vsub.f32 %v2267, %v1989
    %v2332 = vsub.f32 %v2268, %v1991
    %v2333 = vsub.f32 %v2269, %v1993
    %v2334 = vsub.f32 %v2270, %v1995
    %v2335 = vsub.f32 %v2271, %v1997
    %v2336 = vsub.f32 %v2272, %v1999
    %v2337 = vsub.f32 %v2273, %v2001
    %v2338 = vsub.f32 %v2274, %v2003
    %v2339 = vsub.f32 %v2275, %v2005
    %v2340 = vsub.f32 %v2276, %v2007
    %v2341 = vsub.f32 %v2277, %v2009
    %v2342 = vsub.f32 %v2278, %v2011
    %v2343 = vsub.f32 %v2279, %v2013
    %v2344 = vsub.f32 %v2280, %v2015
    %v2345 = vsub.f32 %v2281, %v2017
    %v2346 = vsub.f32 %v2282, %v2019
    %v2347 = vsub.f32 %v2283, %v2021
    %v2348 = vsub.f32 %v2284, %v2023
    %v2349 = vsub.f32 %v2285, %v2025
    %v2350 = vsub.f32 %v2286, %v2027
    %v2351 = vsub.f32 %v2287, %v2029
    %v2352 = vsub.f32 %v2288, %v2031
    %v2353 = vsub.f32 %v2289, %v2033
    %v2354 = vmul.f32 %v2098, 1.442695
    %v2355 = vpow.pop %v2354
    %v2356 = vmul.f32 %v2099, 1.442695
    %v2357 = vpow.pop %v2356
    %v2358 = vmul.f32 %v2100, 1.442695
    %v2359 = vpow.pop %v2358
    %v2360 = vmul.f32 %v2101, 1.442695
    %v2361 = vpow.pop %v2360
    %v2362 = vmul.f32 %v2102, 1.442695
    %v2363 = vpow.pop %v2362
    %v2364 = vmul.f32 %v2103, 1.442695
    %v2365 = vpow.pop %v2364
    %v2366 = vmul.f32 %v2104, 1.442695
    %v2367 = vpow.pop %v2366
    %v2368 = vmul.f32 %v2105, 1.442695
    %v2369 = vpow.pop %v2368
    %v2370 = vmul.f32 %v2106, 1.442695
    %v2371 = vpow.pop %v2370
    %v2372 = vmul.f32 %v2107, 1.442695
    %v2373 = vpow.pop %v2372
    %v2374 = vmul.f32 %v2108, 1.442695
    %v2375 = vpow.pop %v2374
    %v2376 = vmul.f32 %v2109, 1.442695
    %v2377 = vpow.pop %v2376
    %v2378 = vmul.f32 %v2110, 1.442695
    %v2379 = vpow.pop %v2378
    %v2380 = vmul.f32 %v2111, 1.442695
    %v2381 = vpow.pop %v2380
    %v2382 = vmul.f32 %v2112, 1.442695
    %v2383 = vpow.pop %v2382
    %v2384 = vmul.f32 %v2113, 1.442695
    %v2385 = vpow.pop %v2384
    %v2386 = vmul.f32 %v2114, 1.442695
    %v2387 = vpow.pop %v2386
    %v2388 = vmul.f32 %v2115, 1.442695
    %v2389 = vpow.pop %v2388
    %v2390 = vmul.f32 %v2116, 1.442695
    %v2391 = vpow.pop %v2390
    %v2392 = vmul.f32 %v2117, 1.442695
    %v2393 = vpow.pop %v2392
    %v2394 = vmul.f32 %v2118, 1.442695
    %v2395 = vpow.pop %v2394
    %v2396 = vmul.f32 %v2119, 1.442695
    %v2397 = vpow.pop %v2396
    %v2398 = vmul.f32 %v2120, 1.442695
    %v2399 = vpow.pop %v2398
    %v2400 = vmul.f32 %v2121, 1.442695
    %v2401 = vpow.pop %v2400
    %v2402 = vmul.f32 %v2122, 1.442695
    %v2403 = vpow.pop %v2402
    %v2404 = vmul.f32 %v2123, 1.442695
    %v2405 = vpow.pop %v2404
    %v2406 = vmul.f32 %v2124, 1.442695
    %v2407 = vpow.pop %v2406
    %v2408 = vmul.f32 %v2125, 1.442695
    %v2409 = vpow.pop %v2408
    %v2410 = vmul.f32 %v2126, 1.442695
    %v2411 = vpow.pop %v2410
    %v2412 = vmul.f32 %v2127, 1.442695
    %v2413 = vpow.pop %v2412
    %v2414 = vmul.f32 %v2128, 1.442695
    %v2415 = vpow.pop %v2414
    %v2416 = vmul.f32 %v2129, 1.442695
    %v2417 = vpow.pop %v2416
    %v2418 = vmul.f32 %v2130, 1.442695
    %v2419 = vpow.pop %v2418
    %v2420 = vmul.f32 %v2131, 1.442695
    %v2421 = vpow.pop %v2420
    %v2422 = vmul.f32 %v2132, 1.442695
    %v2423 = vpow.pop %v2422
    %v2424 = vmul.f32 %v2133, 1.442695
    %v2425 = vpow.pop %v2424
    %v2426 = vmul.f32 %v2134, 1.442695
    %v2427 = vpow.pop %v2426
    %v2428 = vmul.f32 %v2135, 1.442695
    %v2429 = vpow.pop %v2428
    %v2430 = vmul.f32 %v2136, 1.442695
    %v2431 = vpow.pop %v2430
    %v2432 = vmul.f32 %v2137, 1.442695
    %v2433 = vpow.pop %v2432
    %v2434 = vmul.f32 %v2138, 1.442695
    %v2435 = vpow.pop %v2434
    %v2436 = vmul.f32 %v2139, 1.442695
    %v2437 = vpow.pop %v2436
    %v2438 = vmul.f32 %v2140, 1.442695
    %v2439 = vpow.pop %v2438
    %v2440 = vmul.f32 %v2141, 1.442695
    %v2441 = vpow.pop %v2440
    %v2442 = vmul.f32 %v2142, 1.442695
    %v2443 = vpow.pop %v2442
    %v2444 = vmul.f32 %v2143, 1.442695
    %v2445 = vpow.pop %v2444
    %v2446 = vmul.f32 %v2144, 1.442695
    %v2447 = vpow.pop %v2446
    %v2448 = vmul.f32 %v2145, 1.442695
    %v2449 = vpow.pop %v2448
    %v2450 = vmul.f32 %v2146, 1.442695
    %v2451 = vpow.pop %v2450
    %v2452 = vmul.f32 %v2147, 1.442695
    %v2453 = vpow.pop %v2452
    %v2454 = vmul.f32 %v2148, 1.442695
    %v2455 = vpow.pop %v2454
    %v2456 = vmul.f32 %v2149, 1.442695
    %v2457 = vpow.pop %v2456
    %v2458 = vmul.f32 %v2150, 1.442695
    %v2459 = vpow.pop %v2458
    %v2460 = vmul.f32 %v2151, 1.442695
    %v2461 = vpow.pop %v2460
    %v2462 = vmul.f32 %v2152, 1.442695
    %v2463 = vpow.pop %v2462
    %v2464 = vmul.f32 %v2153, 1.442695
    %v2465 = vpow.pop %v2464
    %v2466 = vmul.f32 %v2154, 1.442695
    %v2467 = vpow.pop %v2466
    %v2468 = vmul.f32 %v2155, 1.442695
    %v2469 = vpow.pop %v2468
    %v2470 = vmul.f32 %v2156, 1.442695
    %v2471 = vpow.pop %v2470
    %v2472 = vmul.f32 %v2157, 1.442695
    %v2473 = vpow.pop %v2472
    %v2474 = vmul.f32 %v2158, 1.442695
    %v2475 = vpow.pop %v2474
    %v2476 = vmul.f32 %v2159, 1.442695
    %v2477 = vpow.pop %v2476
    %v2478 = vmul.f32 %v2160, 1.442695
    %v2479 = vpow.pop %v2478
    %v2480 = vmul.f32 %v2161, 1.442695
    %v2481 = vpow.pop %v2480
    %vm2482 = vcmp.ge.f32.partialorder %v1512, 1.0
    %vm2483 = vcmp.ge.f32.partialorder %v1513, 1.0
    %vm2484 = vcmp.ge.f32.partialorder %v1514, 1.0
    %vm2485 = vcmp.ge.f32.partialorder %v1515, 1.0
    %vm2486 = vcmp.ge.f32.partialorder %v1516, 1.0
    %vm2487 = vcmp.ge.f32.partialorder %v1517, 1.0
    %vm2488 = vcmp.ge.f32.partialorder %v1518, 1.0
    %vm2489 = vcmp.ge.f32.partialorder %v1519, 1.0
    %vm2490 = vcmp.ge.f32.partialorder %v1520, 1.0
    %vm2491 = vcmp.ge.f32.partialorder %v1521, 1.0
    %vm2492 = vcmp.ge.f32.partialorder %v1522, 1.0
    %vm2493 = vcmp.ge.f32.partialorder %v1523, 1.0
    %vm2494 = vcmp.ge.f32.partialorder %v1524, 1.0
    %vm2495 = vcmp.ge.f32.partialorder %v1525, 1.0
    %vm2496 = vcmp.ge.f32.partialorder %v1526, 1.0
    %vm2497 = vcmp.ge.f32.partialorder %v1527, 1.0
    %vm2498 = vcmp.ge.f32.partialorder %v1528, 1.0
    %vm2499 = vcmp.ge.f32.partialorder %v1529, 1.0
    %vm2500 = vcmp.ge.f32.partialorder %v1530, 1.0
    %vm2501 = vcmp.ge.f32.partialorder %v1531, 1.0
    %vm2502 = vcmp.ge.f32.partialorder %v1532, 1.0
    %vm2503 = vcmp.ge.f32.partialorder %v1533, 1.0
    %vm2504 = vcmp.ge.f32.partialorder %v1534, 1.0
    %vm2505 = vcmp.ge.f32.partialorder %v1535, 1.0
    %vm2506 = vcmp.ge.f32.partialorder %v1536, 1.0
    %vm2507 = vcmp.ge.f32.partialorder %v1537, 1.0
    %vm2508 = vcmp.ge.f32.partialorder %v1538, 1.0
    %vm2509 = vcmp.ge.f32.partialorder %v1539, 1.0
    %vm2510 = vcmp.ge.f32.partialorder %v1540, 1.0
    %vm2511 = vcmp.ge.f32.partialorder %v1541, 1.0
    %vm2512 = vcmp.ge.f32.partialorder %v1542, 1.0
    %vm2513 = vcmp.ge.f32.partialorder %v1543, 1.0
    %vm2514 = vcmp.ge.f32.partialorder %v1544, 1.0
    %vm2515 = vcmp.ge.f32.partialorder %v1545, 1.0
    %vm2516 = vcmp.ge.f32.partialorder %v1546, 1.0
    %vm2517 = vcmp.ge.f32.partialorder %v1547, 1.0
    %vm2518 = vcmp.ge.f32.partialorder %v1548, 1.0
    %vm2519 = vcmp.ge.f32.partialorder %v1549, 1.0
    %vm2520 = vcmp.ge.f32.partialorder %v1550, 1.0
    %vm2521 = vcmp.ge.f32.partialorder %v1551, 1.0
    %vm2522 = vcmp.ge.f32.partialorder %v1552, 1.0
    %vm2523 = vcmp.ge.f32.partialorder %v1553, 1.0
    %vm2524 = vcmp.ge.f32.partialorder %v1554, 1.0
    %vm2525 = vcmp.ge.f32.partialorder %v1555, 1.0
    %vm2526 = vcmp.ge.f32.partialorder %v1556, 1.0
    %vm2527 = vcmp.ge.f32.partialorder %v1557, 1.0
    %vm2528 = vcmp.ge.f32.partialorder %v1558, 1.0
    %vm2529 = vcmp.ge.f32.partialorder %v1559, 1.0
    %vm2530 = vcmp.ge.f32.partialorder %v1560, 1.0
    %vm2531 = vcmp.ge.f32.partialorder %v1561, 1.0
    %vm2532 = vcmp.ge.f32.partialorder %v1562, 1.0
    %vm2533 = vcmp.ge.f32.partialorder %v1563, 1.0
    %vm2534 = vcmp.ge.f32.partialorder %v1564, 1.0
    %vm2535 = vcmp.ge.f32.partialorder %v1565, 1.0
    %vm2536 = vcmp.ge.f32.partialorder %v1566, 1.0
    %vm2537 = vcmp.ge.f32.partialorder %v1567, 1.0
    %vm2538 = vcmp.ge.f32.partialorder %v1568, 1.0
    %vm2539 = vcmp.ge.f32.partialorder %v1569, 1.0
    %vm2540 = vcmp.ge.f32.partialorder %v1570, 1.0
    %vm2541 = vcmp.ge.f32.partialorder %v1571, 1.0
    %vm2542 = vcmp.ge.f32.partialorder %v1572, 1.0
    %vm2543 = vcmp.ge.f32.partialorder %v1573, 1.0
    %vm2544 = vcmp.ge.f32.partialorder %v1574, 1.0
    %vm2545 = vcmp.ge.f32.partialorder %v1575, 1.0
    %vm2546 = vmand %vm2482, %vm1578
    %vm2547 = vmand %vm2483, %vm1578
    %vm2548 = vmand %vm2484, %vm1578
    %vm2549 = vmand %vm2485, %vm1578
    %vm2550 = vmand %vm2486, %vm1578
    %vm2551 = vmand %vm2487, %vm1578
    %vm2552 = vmand %vm2488, %vm1578
    %vm2553 = vmand %vm2489, %vm1578
    %vm2554 = vmand %vm2490, %vm1578
    %vm2555 = vmand %vm2491, %vm1578
    %vm2556 = vmand %vm2492, %vm1578
    %vm2557 = vmand %vm2493, %vm1578
    %vm2558 = vmand %vm2494, %vm1578
    %vm2559 = vmand %vm2495, %vm1578
    %vm2560 = vmand %vm2496, %vm1578
    %vm2561 = vmand %vm2497, %vm1578
    %vm2562 = vmand %vm2498, %vm1578
    %vm2563 = vmand %vm2499, %vm1578
    %vm2564 = vmand %vm2500, %vm1578
    %vm2565 = vmand %vm2501, %vm1578
    %vm2566 = vmand %vm2502, %vm1578
    %vm2567 = vmand %vm2503, %vm1578
    %vm2568 = vmand %vm2504, %vm1578
    %vm2569 = vmand %vm2505, %vm1578
    %vm2570 = vmand %vm2506, %vm1578
    %vm2571 = vmand %vm2507, %vm1578
    %vm2572 = vmand %vm2508, %vm1578
    %vm2573 = vmand %vm2509, %vm1578
    %vm2574 = vmand %vm2510, %vm1578
    %vm2575 = vmand %vm2511, %vm1578
    %vm2576 = vmand %vm2512, %vm1578
    %vm2577 = vmand %vm2513, %vm1578
    %vm2578 = vmand %vm2514, %vm1578
    %vm2579 = vmand %vm2515, %vm1578
    %vm2580 = vmand %vm2516, %vm1578
    %vm2581 = vmand %vm2517, %vm1578
    %vm2582 = vmand %vm2518, %vm1578
    %vm2583 = vmand %vm2519, %vm1578
    %vm2584 = vmand %vm2520, %vm1578
    %vm2585 = vmand %vm2521, %vm1578
    %vm2586 = vmand %vm2522, %vm1578
    %vm2587 = vmand %vm2523, %vm1578
    %vm2588 = vmand %vm2524, %vm1578
    %vm2589 = vmand %vm2525, %vm1578
    %vm2590 = vmand %vm2526, %vm1578
    %vm2591 = vmand %vm2527, %vm1578
    %vm2592 = vmand %vm2528, %vm1578
    %vm2593 = vmand %vm2529, %vm1578
    %vm2594 = vmand %vm2530, %vm1578
    %vm2595 = vmand %vm2531, %vm1578
    %vm2596 = vmand %vm2532, %vm1578
    %vm2597 = vmand %vm2533, %vm1578
    %vm2598 = vmand %vm2534, %vm1578
    %vm2599 = vmand %vm2535, %vm1578
    %vm2600 = vmand %vm2536, %vm1578
    %vm2601 = vmand %vm2537, %vm1578
    %vm2602 = vmand %vm2538, %vm1578
    %vm2603 = vmand %vm2539, %vm1578
    %vm2604 = vmand %vm2540, %vm1578
    %vm2605 = vmand %vm2541, %vm1578
    %vm2606 = vmand %vm2542, %vm1578
    %vm2607 = vmand %vm2543, %vm1578
    %vm2608 = vmand %vm2544, %vm1578
    %vm2609 = vmand %vm2545, %vm1578
    %v2610 = vsel %vm2546, 1.0, 0.0
    %v2611 = vsel %vm2547, 1.0, 0.0
    %v2612 = vsel %vm2548, 1.0, 0.0
    %v2613 = vsel %vm2549, 1.0, 0.0
    %v2614 = vsel %vm2550, 1.0, 0.0
    %v2615 = vsel %vm2551, 1.0, 0.0
    %v2616 = vsel %vm2552, 1.0, 0.0
    %v2617 = vsel %vm2553, 1.0, 0.0
    %v2618 = vsel %vm2554, 1.0, 0.0
    %v2619 = vsel %vm2555, 1.0, 0.0
    %v2620 = vsel %vm2556, 1.0, 0.0
    %v2621 = vsel %vm2557, 1.0, 0.0
    %v2622 = vsel %vm2558, 1.0, 0.0
    %v2623 = vsel %vm2559, 1.0, 0.0
    %v2624 = vsel %vm2560, 1.0, 0.0
    %v2625 = vsel %vm2561, 1.0, 0.0
    %v2626 = vsel %vm2562, 1.0, 0.0
    %v2627 = vsel %vm2563, 1.0, 0.0
    %v2628 = vsel %vm2564, 1.0, 0.0
    %v2629 = vsel %vm2565, 1.0, 0.0
    %v2630 = vsel %vm2566, 1.0, 0.0
    %v2631 = vsel %vm2567, 1.0, 0.0
    %v2632 = vsel %vm2568, 1.0, 0.0
    %v2633 = vsel %vm2569, 1.0, 0.0
    %v2634 = vsel %vm2570, 1.0, 0.0
    %v2635 = vsel %vm2571, 1.0, 0.0
    %v2636 = vsel %vm2572, 1.0, 0.0
    %v2637 = vsel %vm2573, 1.0, 0.0
    %v2638 = vsel %vm2574, 1.0, 0.0
    %v2639 = vsel %vm2575, 1.0, 0.0
    %v2640 = vsel %vm2576, 1.0, 0.0
    %v2641 = vsel %vm2577, 1.0, 0.0
    %v2642 = vsel %vm2578, 1.0, 0.0
    %v2643 = vsel %vm2579, 1.0, 0.0
    %v2644 = vsel %vm2580, 1.0, 0.0
    %v2645 = vsel %vm2581, 1.0, 0.0
    %v2646 = vsel %vm2582, 1.0, 0.0
    %v2647 = vsel %vm2583, 1.0, 0.0
    %v2648 = vsel %vm2584, 1.0, 0.0
    %v2649 = vsel %vm2585, 1.0, 0.0
    %v2650 = vsel %vm2586, 1.0, 0.0
    %v2651 = vsel %vm2587, 1.0, 0.0
    %v2652 = vsel %vm2588, 1.0, 0.0
    %v2653 = vsel %vm2589, 1.0, 0.0
    %v2654 = vsel %vm2590, 1.0, 0.0
    %v2655 = vsel %vm2591, 1.0, 0.0
    %v2656 = vsel %vm2592, 1.0, 0.0
    %v2657 = vsel %vm2593, 1.0, 0.0
    %v2658 = vsel %vm2594, 1.0, 0.0
    %v2659 = vsel %vm2595, 1.0, 0.0
    %v2660 = vsel %vm2596, 1.0, 0.0
    %v2661 = vsel %vm2597, 1.0, 0.0
    %v2662 = vsel %vm2598, 1.0, 0.0
    %v2663 = vsel %vm2599, 1.0, 0.0
    %v2664 = vsel %vm2600, 1.0, 0.0
    %v2665 = vsel %vm2601, 1.0, 0.0
    %v2666 = vsel %vm2602, 1.0, 0.0
    %v2667 = vsel %vm2603, 1.0, 0.0
    %v2668 = vsel %vm2604, 1.0, 0.0
    %v2669 = vsel %vm2605, 1.0, 0.0
    %v2670 = vsel %vm2606, 1.0, 0.0
    %v2671 = vsel %vm2607, 1.0, 0.0
    %v2672 = vsel %vm2608, 1.0, 0.0
    %v2673 = vsel %vm2609, 1.0, 0.0
    %v2674 = vsub.f32 %v1580, %v2610
    %v2675 = vsub.f32 %v1580, %v2611
    %v2676 = vsub.f32 %v1580, %v2612
    %v2677 = vsub.f32 %v1580, %v2613
    %v2678 = vsub.f32 %v1580, %v2614
    %v2679 = vsub.f32 %v1580, %v2615
    %v2680 = vsub.f32 %v1580, %v2616
    %v2681 = vsub.f32 %v1580, %v2617
    %v2682 = vsub.f32 %v1580, %v2618
    %v2683 = vsub.f32 %v1580, %v2619
    %v2684 = vsub.f32 %v1580, %v2620
    %v2685 = vsub.f32 %v1580, %v2621
    %v2686 = vsub.f32 %v1580, %v2622
    %v2687 = vsub.f32 %v1580, %v2623
    %v2688 = vsub.f32 %v1580, %v2624
    %v2689 = vsub.f32 %v1580, %v2625
    %v2690 = vsub.f32 %v1580, %v2626
    %v2691 = vsub.f32 %v1580, %v2627
    %v2692 = vsub.f32 %v1580, %v2628
    %v2693 = vsub.f32 %v1580, %v2629
    %v2694 = vsub.f32 %v1580, %v2630
    %v2695 = vsub.f32 %v1580, %v2631
    %v2696 = vsub.f32 %v1580, %v2632
    %v2697 = vsub.f32 %v1580, %v2633
    %v2698 = vsub.f32 %v1580, %v2634
    %v2699 = vsub.f32 %v1580, %v2635
    %v2700 = vsub.f32 %v1580, %v2636
    %v2701 = vsub.f32 %v1580, %v2637
    %v2702 = vsub.f32 %v1580, %v2638
    %v2703 = vsub.f32 %v1580, %v2639
    %v2704 = vsub.f32 %v1580, %v2640
    %v2705 = vsub.f32 %v1580, %v2641
    %v2706 = vsub.f32 %v1580, %v2642
    %v2707 = vsub.f32 %v1580, %v2643
    %v2708 = vsub.f32 %v1580, %v2644
    %v2709 = vsub.f32 %v1580, %v2645
    %v2710 = vsub.f32 %v1580, %v2646
    %v2711 = vsub.f32 %v1580, %v2647
    %v2712 = vsub.f32 %v1580, %v2648
    %v2713 = vsub.f32 %v1580, %v2649
    %v2714 = vsub.f32 %v1580, %v2650
    %v2715 = vsub.f32 %v1580, %v2651
    %v2716 = vsub.f32 %v1580, %v2652
    %v2717 = vsub.f32 %v1580, %v2653
    %v2718 = vsub.f32 %v1580, %v2654
    %v2719 = vsub.f32 %v1580, %v2655
    %v2720 = vsub.f32 %v1580, %v2656
    %v2721 = vsub.f32 %v1580, %v2657
    %v2722 = vsub.f32 %v1580, %v2658
    %v2723 = vsub.f32 %v1580, %v2659
    %v2724 = vsub.f32 %v1580, %v2660
    %v2725 = vsub.f32 %v1580, %v2661
    %v2726 = vsub.f32 %v1580, %v2662
    %v2727 = vsub.f32 %v1580, %v2663
    %v2728 = vsub.f32 %v1580, %v2664
    %v2729 = vsub.f32 %v1580, %v2665
    %v2730 = vsub.f32 %v1580, %v2666
    %v2731 = vsub.f32 %v1580, %v2667
    %v2732 = vsub.f32 %v1580, %v2668
    %v2733 = vsub.f32 %v1580, %v2669
    %v2734 = vsub.f32 %v1580, %v2670
    %v2735 = vsub.f32 %v1580, %v2671
    %v2736 = vsub.f32 %v1580, %v2672
    %v2737 = vsub.f32 %v1580, %v2673
    %v2738 = vsub.f32 1.0, %v1512
    %v2739 = vsub.f32 1.0, %v1513
    %v2740 = vsub.f32 1.0, %v1514
    %v2741 = vsub.f32 1.0, %v1515
    %v2742 = vsub.f32 1.0, %v1516
    %v2743 = vsub.f32 1.0, %v1517
    %v2744 = vsub.f32 1.0, %v1518
    %v2745 = vsub.f32 1.0, %v1519
    %v2746 = vsub.f32 1.0, %v1520
    %v2747 = vsub.f32 1.0, %v1521
    %v2748 = vsub.f32 1.0, %v1522
    %v2749 = vsub.f32 1.0, %v1523
    %v2750 = vsub.f32 1.0, %v1524
    %v2751 = vsub.f32 1.0, %v1525
    %v2752 = vsub.f32 1.0, %v1526
    %v2753 = vsub.f32 1.0, %v1527
    %v2754 = vsub.f32 1.0, %v1528
    %v2755 = vsub.f32 1.0, %v1529
    %v2756 = vsub.f32 1.0, %v1530
    %v2757 = vsub.f32 1.0, %v1531
    %v2758 = vsub.f32 1.0, %v1532
    %v2759 = vsub.f32 1.0, %v1533
    %v2760 = vsub.f32 1.0, %v1534
    %v2761 = vsub.f32 1.0, %v1535
    %v2762 = vsub.f32 1.0, %v1536
    %v2763 = vsub.f32 1.0, %v1537
    %v2764 = vsub.f32 1.0, %v1538
    %v2765 = vsub.f32 1.0, %v1539
    %v2766 = vsub.f32 1.0, %v1540
    %v2767 = vsub.f32 1.0, %v1541
    %v2768 = vsub.f32 1.0, %v1542
    %v2769 = vsub.f32 1.0, %v1543
    %v2770 = vsub.f32 1.0, %v1544
    %v2771 = vsub.f32 1.0, %v1545
    %v2772 = vsub.f32 1.0, %v1546
    %v2773 = vsub.f32 1.0, %v1547
    %v2774 = vsub.f32 1.0, %v1548
    %v2775 = vsub.f32 1.0, %v1549
    %v2776 = vsub.f32 1.0, %v1550
    %v2777 = vsub.f32 1.0, %v1551
    %v2778 = vsub.f32 1.0, %v1552
    %v2779 = vsub.f32 1.0, %v1553
    %v2780 = vsub.f32 1.0, %v1554
    %v2781 = vsub.f32 1.0, %v1555
    %v2782 = vsub.f32 1.0, %v1556
    %v2783 = vsub.f32 1.0, %v1557
    %v2784 = vsub.f32 1.0, %v1558
    %v2785 = vsub.f32 1.0, %v1559
    %v2786 = vsub.f32 1.0, %v1560
    %v2787 = vsub.f32 1.0, %v1561
    %v2788 = vsub.f32 1.0, %v1562
    %v2789 = vsub.f32 1.0, %v1563
    %v2790 = vsub.f32 1.0, %v1564
    %v2791 = vsub.f32 1.0, %v1565
    %v2792 = vsub.f32 1.0, %v1566
    %v2793 = vsub.f32 1.0, %v1567
    %v2794 = vsub.f32 1.0, %v1568
    %v2795 = vsub.f32 1.0, %v1569
    %v2796 = vsub.f32 1.0, %v1570
    %v2797 = vsub.f32 1.0, %v1571
    %v2798 = vsub.f32 1.0, %v1572
    %v2799 = vsub.f32 1.0, %v1573
    %v2800 = vsub.f32 1.0, %v1574
    %v2801 = vsub.f32 1.0, %v1575
    %v2802 = vmul.f32 %v2738, %v2738
    %v2803 = vmul.f32 %v2739, %v2739
    %v2804 = vmul.f32 %v2740, %v2740
    %v2805 = vmul.f32 %v2741, %v2741
    %v2806 = vmul.f32 %v2742, %v2742
    %v2807 = vmul.f32 %v2743, %v2743
    %v2808 = vmul.f32 %v2744, %v2744
    %v2809 = vmul.f32 %v2745, %v2745
    %v2810 = vmul.f32 %v2746, %v2746
    %v2811 = vmul.f32 %v2747, %v2747
    %v2812 = vmul.f32 %v2748, %v2748
    %v2813 = vmul.f32 %v2749, %v2749
    %v2814 = vmul.f32 %v2750, %v2750
    %v2815 = vmul.f32 %v2751, %v2751
    %v2816 = vmul.f32 %v2752, %v2752
    %v2817 = vmul.f32 %v2753, %v2753
    %v2818 = vmul.f32 %v2754, %v2754
    %v2819 = vmul.f32 %v2755, %v2755
    %v2820 = vmul.f32 %v2756, %v2756
    %v2821 = vmul.f32 %v2757, %v2757
    %v2822 = vmul.f32 %v2758, %v2758
    %v2823 = vmul.f32 %v2759, %v2759
    %v2824 = vmul.f32 %v2760, %v2760
    %v2825 = vmul.f32 %v2761, %v2761
    %v2826 = vmul.f32 %v2762, %v2762
    %v2827 = vmul.f32 %v2763, %v2763
    %v2828 = vmul.f32 %v2764, %v2764
    %v2829 = vmul.f32 %v2765, %v2765
    %v2830 = vmul.f32 %v2766, %v2766
    %v2831 = vmul.f32 %v2767, %v2767
    %v2832 = vmul.f32 %v2768, %v2768
    %v2833 = vmul.f32 %v2769, %v2769
    %v2834 = vmul.f32 %v2770, %v2770
    %v2835 = vmul.f32 %v2771, %v2771
    %v2836 = vmul.f32 %v2772, %v2772
    %v2837 = vmul.f32 %v2773, %v2773
    %v2838 = vmul.f32 %v2774, %v2774
    %v2839 = vmul.f32 %v2775, %v2775
    %v2840 = vmul.f32 %v2776, %v2776
    %v2841 = vmul.f32 %v2777, %v2777
    %v2842 = vmul.f32 %v2778, %v2778
    %v2843 = vmul.f32 %v2779, %v2779
    %v2844 = vmul.f32 %v2780, %v2780
    %v2845 = vmul.f32 %v2781, %v2781
    %v2846 = vmul.f32 %v2782, %v2782
    %v2847 = vmul.f32 %v2783, %v2783
    %v2848 = vmul.f32 %v2784, %v2784
    %v2849 = vmul.f32 %v2785, %v2785
    %v2850 = vmul.f32 %v2786, %v2786
    %v2851 = vmul.f32 %v2787, %v2787
    %v2852 = vmul.f32 %v2788, %v2788
    %v2853 = vmul.f32 %v2789, %v2789
    %v2854 = vmul.f32 %v2790, %v2790
    %v2855 = vmul.f32 %v2791, %v2791
    %v2856 = vmul.f32 %v2792, %v2792
    %v2857 = vmul.f32 %v2793, %v2793
    %v2858 = vmul.f32 %v2794, %v2794
    %v2859 = vmul.f32 %v2795, %v2795
    %v2860 = vmul.f32 %v2796, %v2796
    %v2861 = vmul.f32 %v2797, %v2797
    %v2862 = vmul.f32 %v2798, %v2798
    %v2863 = vmul.f32 %v2799, %v2799
    %v2864 = vmul.f32 %v2800, %v2800
    %v2865 = vmul.f32 %v2801, %v2801
    %v2866 = vmul.f32 %v2802, %v2802
    %v2867 = vmul.f32 %v2803, %v2803
    %v2868 = vmul.f32 %v2804, %v2804
    %v2869 = vmul.f32 %v2805, %v2805
    %v2870 = vmul.f32 %v2806, %v2806
    %v2871 = vmul.f32 %v2807, %v2807
    %v2872 = vmul.f32 %v2808, %v2808
    %v2873 = vmul.f32 %v2809, %v2809
    %v2874 = vmul.f32 %v2810, %v2810
    %v2875 = vmul.f32 %v2811, %v2811
    %v2876 = vmul.f32 %v2812, %v2812
    %v2877 = vmul.f32 %v2813, %v2813
    %v2878 = vmul.f32 %v2814, %v2814
    %v2879 = vmul.f32 %v2815, %v2815
    %v2880 = vmul.f32 %v2816, %v2816
    %v2881 = vmul.f32 %v2817, %v2817
    %v2882 = vmul.f32 %v2818, %v2818
    %v2883 = vmul.f32 %v2819, %v2819
    %v2884 = vmul.f32 %v2820, %v2820
    %v2885 = vmul.f32 %v2821, %v2821
    %v2886 = vmul.f32 %v2822, %v2822
    %v2887 = vmul.f32 %v2823, %v2823
    %v2888 = vmul.f32 %v2824, %v2824
    %v2889 = vmul.f32 %v2825, %v2825
    %v2890 = vmul.f32 %v2826, %v2826
    %v2891 = vmul.f32 %v2827, %v2827
    %v2892 = vmul.f32 %v2828, %v2828
    %v2893 = vmul.f32 %v2829, %v2829
    %v2894 = vmul.f32 %v2830, %v2830
    %v2895 = vmul.f32 %v2831, %v2831
    %v2896 = vmul.f32 %v2832, %v2832
    %v2897 = vmul.f32 %v2833, %v2833
    %v2898 = vmul.f32 %v2834, %v2834
    %v2899 = vmul.f32 %v2835, %v2835
    %v2900 = vmul.f32 %v2836, %v2836
    %v2901 = vmul.f32 %v2837, %v2837
    %v2902 = vmul.f32 %v2838, %v2838
    %v2903 = vmul.f32 %v2839, %v2839
    %v2904 = vmul.f32 %v2840, %v2840
    %v2905 = vmul.f32 %v2841, %v2841
    %v2906 = vmul.f32 %v2842, %v2842
    %v2907 = vmul.f32 %v2843, %v2843
    %v2908 = vmul.f32 %v2844, %v2844
    %v2909 = vmul.f32 %v2845, %v2845
    %v2910 = vmul.f32 %v2846, %v2846
    %v2911 = vmul.f32 %v2847, %v2847
    %v2912 = vmul.f32 %v2848, %v2848
    %v2913 = vmul.f32 %v2849, %v2849
    %v2914 = vmul.f32 %v2850, %v2850
    %v2915 = vmul.f32 %v2851, %v2851
    %v2916 = vmul.f32 %v2852, %v2852
    %v2917 = vmul.f32 %v2853, %v2853
    %v2918 = vmul.f32 %v2854, %v2854
    %v2919 = vmul.f32 %v2855, %v2855
    %v2920 = vmul.f32 %v2856, %v2856
    %v2921 = vmul.f32 %v2857, %v2857
    %v2922 = vmul.f32 %v2858, %v2858
    %v2923 = vmul.f32 %v2859, %v2859
    %v2924 = vmul.f32 %v2860, %v2860
    %v2925 = vmul.f32 %v2861, %v2861
    %v2926 = vmul.f32 %v2862, %v2862
    %v2927 = vmul.f32 %v2863, %v2863
    %v2928 = vmul.f32 %v2864, %v2864
    %v2929 = vmul.f32 %v2865, %v2865
    %v2930 = vsub.f32 1.0, %v2355
    %v2931 = vsub.f32 1.0, %v2357
    %v2932 = vsub.f32 1.0, %v2359
    %v2933 = vsub.f32 1.0, %v2361
    %v2934 = vsub.f32 1.0, %v2363
    %v2935 = vsub.f32 1.0, %v2365
    %v2936 = vsub.f32 1.0, %v2367
    %v2937 = vsub.f32 1.0, %v2369
    %v2938 = vsub.f32 1.0, %v2371
    %v2939 = vsub.f32 1.0, %v2373
    %v2940 = vsub.f32 1.0, %v2375
    %v2941 = vsub.f32 1.0, %v2377
    %v2942 = vsub.f32 1.0, %v2379
    %v2943 = vsub.f32 1.0, %v2381
    %v2944 = vsub.f32 1.0, %v2383
    %v2945 = vsub.f32 1.0, %v2385
    %v2946 = vsub.f32 1.0, %v2387
    %v2947 = vsub.f32 1.0, %v2389
    %v2948 = vsub.f32 1.0, %v2391
    %v2949 = vsub.f32 1.0, %v2393
    %v2950 = vsub.f32 1.0, %v2395
    %v2951 = vsub.f32 1.0, %v2397
    %v2952 = vsub.f32 1.0, %v2399
    %v2953 = vsub.f32 1.0, %v2401
    %v2954 = vsub.f32 1.0, %v2403
    %v2955 = vsub.f32 1.0, %v2405
    %v2956 = vsub.f32 1.0, %v2407
    %v2957 = vsub.f32 1.0, %v2409
    %v2958 = vsub.f32 1.0, %v2411
    %v2959 = vsub.f32 1.0, %v2413
    %v2960 = vsub.f32 1.0, %v2415
    %v2961 = vsub.f32 1.0, %v2417
    %v2962 = vsub.f32 1.0, %v2419
    %v2963 = vsub.f32 1.0, %v2421
    %v2964 = vsub.f32 1.0, %v2423
    %v2965 = vsub.f32 1.0, %v2425
    %v2966 = vsub.f32 1.0, %v2427
    %v2967 = vsub.f32 1.0, %v2429
    %v2968 = vsub.f32 1.0, %v2431
    %v2969 = vsub.f32 1.0, %v2433
    %v2970 = vsub.f32 1.0, %v2435
    %v2971 = vsub.f32 1.0, %v2437
    %v2972 = vsub.f32 1.0, %v2439
    %v2973 = vsub.f32 1.0, %v2441
    %v2974 = vsub.f32 1.0, %v2443
    %v2975 = vsub.f32 1.0, %v2445
    %v2976 = vsub.f32 1.0, %v2447
    %v2977 = vsub.f32 1.0, %v2449
    %v2978 = vsub.f32 1.0, %v2451
    %v2979 = vsub.f32 1.0, %v2453
    %v2980 = vsub.f32 1.0, %v2455
    %v2981 = vsub.f32 1.0, %v2457
    %v2982 = vsub.f32 1.0, %v2459
    %v2983 = vsub.f32 1.0, %v2461
    %v2984 = vsub.f32 1.0, %v2463
    %v2985 = vsub.f32 1.0, %v2465
    %v2986 = vsub.f32 1.0, %v2467
    %v2987 = vsub.f32 1.0, %v2469
    %v2988 = vsub.f32 1.0, %v2471
    %v2989 = vsub.f32 1.0, %v2473
    %v2990 = vsub.f32 1.0, %v2475
    %v2991 = vsub.f32 1.0, %v2477
    %v2992 = vsub.f32 1.0, %v2479
    %v2993 = vsub.f32 1.0, %v2481
    %v2994 = vmul.f32 %v2098, %v2930
    %v2995 = vmul.f32 %v2099, %v2931
    %v2996 = vmul.f32 %v2100, %v2932
    %v2997 = vmul.f32 %v2101, %v2933
    %v2998 = vmul.f32 %v2102, %v2934
    %v2999 = vmul.f32 %v2103, %v2935
    %v3000 = vmul.f32 %v2104, %v2936
    %v3001 = vmul.f32 %v2105, %v2937
    %v3002 = vmul.f32 %v2106, %v2938
    %v3003 = vmul.f32 %v2107, %v2939
    %v3004 = vmul.f32 %v2108, %v2940
    %v3005 = vmul.f32 %v2109, %v2941
    %v3006 = vmul.f32 %v2110, %v2942
    %v3007 = vmul.f32 %v2111, %v2943
    %v3008 = vmul.f32 %v2112, %v2944
    %v3009 = vmul.f32 %v2113, %v2945
    %v3010 = vmul.f32 %v2114, %v2946
    %v3011 = vmul.f32 %v2115, %v2947
    %v3012 = vmul.f32 %v2116, %v2948
    %v3013 = vmul.f32 %v2117, %v2949
    %v3014 = vmul.f32 %v2118, %v2950
    %v3015 = vmul.f32 %v2119, %v2951
    %v3016 = vmul.f32 %v2120, %v2952
    %v3017 = vmul.f32 %v2121, %v2953
    %v3018 = vmul.f32 %v2122, %v2954
    %v3019 = vmul.f32 %v2123, %v2955
    %v3020 = vmul.f32 %v2124, %v2956
    %v3021 = vmul.f32 %v2125, %v2957
    %v3022 = vmul.f32 %v2126, %v2958
    %v3023 = vmul.f32 %v2127, %v2959
    %v3024 = vmul.f32 %v2128, %v2960
    %v3025 = vmul.f32 %v2129, %v2961
    %v3026 = vmul.f32 %v2130, %v2962
    %v3027 = vmul.f32 %v2131, %v2963
    %v3028 = vmul.f32 %v2132, %v2964
    %v3029 = vmul.f32 %v2133, %v2965
    %v3030 = vmul.f32 %v2134, %v2966
    %v3031 = vmul.f32 %v2135, %v2967
    %v3032 = vmul.f32 %v2136, %v2968
    %v3033 = vmul.f32 %v2137, %v2969
    %v3034 = vmul.f32 %v2138, %v2970
    %v3035 = vmul.f32 %v2139, %v2971
    %v3036 = vmul.f32 %v2140, %v2972
    %v3037 = vmul.f32 %v2141, %v2973
    %v3038 = vmul.f32 %v2142, %v2974
    %v3039 = vmul.f32 %v2143, %v2975
    %v3040 = vmul.f32 %v2144, %v2976
    %v3041 = vmul.f32 %v2145, %v2977
    %v3042 = vmul.f32 %v2146, %v2978
    %v3043 = vmul.f32 %v2147, %v2979
    %v3044 = vmul.f32 %v2148, %v2980
    %v3045 = vmul.f32 %v2149, %v2981
    %v3046 = vmul.f32 %v2150, %v2982
    %v3047 = vmul.f32 %v2151, %v2983
    %v3048 = vmul.f32 %v2152, %v2984
    %v3049 = vmul.f32 %v2153, %v2985
    %v3050 = vmul.f32 %v2154, %v2986
    %v3051 = vmul.f32 %v2155, %v2987
    %v3052 = vmul.f32 %v2156, %v2988
    %v3053 = vmul.f32 %v2157, %v2989
    %v3054 = vmul.f32 %v2158, %v2990
    %v3055 = vmul.f32 %v2159, %v2991
    %v3056 = vmul.f32 %v2160, %v2992
    %v3057 = vmul.f32 %v2161, %v2993
    %v3058 = vmul.f32 %v2994, %v2930
    %v3059 = vmul.f32 %v2995, %v2931
    %v3060 = vmul.f32 %v2996, %v2932
    %v3061 = vmul.f32 %v2997, %v2933
    %v3062 = vmul.f32 %v2998, %v2934
    %v3063 = vmul.f32 %v2999, %v2935
    %v3064 = vmul.f32 %v3000, %v2936
    %v3065 = vmul.f32 %v3001, %v2937
    %v3066 = vmul.f32 %v3002, %v2938
    %v3067 = vmul.f32 %v3003, %v2939
    %v3068 = vmul.f32 %v3004, %v2940
    %v3069 = vmul.f32 %v3005, %v2941
    %v3070 = vmul.f32 %v3006, %v2942
    %v3071 = vmul.f32 %v3007, %v2943
    %v3072 = vmul.f32 %v3008, %v2944
    %v3073 = vmul.f32 %v3009, %v2945
    %v3074 = vmul.f32 %v3010, %v2946
    %v3075 = vmul.f32 %v3011, %v2947
    %v3076 = vmul.f32 %v3012, %v2948
    %v3077 = vmul.f32 %v3013, %v2949
    %v3078 = vmul.f32 %v3014, %v2950
    %v3079 = vmul.f32 %v3015, %v2951
    %v3080 = vmul.f32 %v3016, %v2952
    %v3081 = vmul.f32 %v3017, %v2953
    %v3082 = vmul.f32 %v3018, %v2954
    %v3083 = vmul.f32 %v3019, %v2955
    %v3084 = vmul.f32 %v3020, %v2956
    %v3085 = vmul.f32 %v3021, %v2957
    %v3086 = vmul.f32 %v3022, %v2958
    %v3087 = vmul.f32 %v3023, %v2959
    %v3088 = vmul.f32 %v3024, %v2960
    %v3089 = vmul.f32 %v3025, %v2961
    %v3090 = vmul.f32 %v3026, %v2962
    %v3091 = vmul.f32 %v3027, %v2963
    %v3092 = vmul.f32 %v3028, %v2964
    %v3093 = vmul.f32 %v3029, %v2965
    %v3094 = vmul.f32 %v3030, %v2966
    %v3095 = vmul.f32 %v3031, %v2967
    %v3096 = vmul.f32 %v3032, %v2968
    %v3097 = vmul.f32 %v3033, %v2969
    %v3098 = vmul.f32 %v3034, %v2970
    %v3099 = vmul.f32 %v3035, %v2971
    %v3100 = vmul.f32 %v3036, %v2972
    %v3101 = vmul.f32 %v3037, %v2973
    %v3102 = vmul.f32 %v3038, %v2974
    %v3103 = vmul.f32 %v3039, %v2975
    %v3104 = vmul.f32 %v3040, %v2976
    %v3105 = vmul.f32 %v3041, %v2977
    %v3106 = vmul.f32 %v3042, %v2978
    %v3107 = vmul.f32 %v3043, %v2979
    %v3108 = vmul.f32 %v3044, %v2980
    %v3109 = vmul.f32 %v3045, %v2981
    %v3110 = vmul.f32 %v3046, %v2982
    %v3111 = vmul.f32 %v3047, %v2983
    %v3112 = vmul.f32 %v3048, %v2984
    %v3113 = vmul.f32 %v3049, %v2985
    %v3114 = vmul.f32 %v3050, %v2986
    %v3115 = vmul.f32 %v3051, %v2987
    %v3116 = vmul.f32 %v3052, %v2988
    %v3117 = vmul.f32 %v3053, %v2989
    %v3118 = vmul.f32 %v3054, %v2990
    %v3119 = vmul.f32 %v3055, %v2991
    %v3120 = vmul.f32 %v3056, %v2992
    %v3121 = vmul.f32 %v3057, %v2993
    %v3122 = vmul.f32 %v3058, %v2610
    %v3123 = vmul.f32 %v3059, %v2611
    %v3124 = vmul.f32 %v3060, %v2612
    %v3125 = vmul.f32 %v3061, %v2613
    %v3126 = vmul.f32 %v3062, %v2614
    %v3127 = vmul.f32 %v3063, %v2615
    %v3128 = vmul.f32 %v3064, %v2616
    %v3129 = vmul.f32 %v3065, %v2617
    %v3130 = vmul.f32 %v3066, %v2618
    %v3131 = vmul.f32 %v3067, %v2619
    %v3132 = vmul.f32 %v3068, %v2620
    %v3133 = vmul.f32 %v3069, %v2621
    %v3134 = vmul.f32 %v3070, %v2622
    %v3135 = vmul.f32 %v3071, %v2623
    %v3136 = vmul.f32 %v3072, %v2624
    %v3137 = vmul.f32 %v3073, %v2625
    %v3138 = vmul.f32 %v3074, %v2626
    %v3139 = vmul.f32 %v3075, %v2627
    %v3140 = vmul.f32 %v3076, %v2628
    %v3141 = vmul.f32 %v3077, %v2629
    %v3142 = vmul.f32 %v3078, %v2630
    %v3143 = vmul.f32 %v3079, %v2631
    %v3144 = vmul.f32 %v3080, %v2632
    %v3145 = vmul.f32 %v3081, %v2633
    %v3146 = vmul.f32 %v3082, %v2634
    %v3147 = vmul.f32 %v3083, %v2635
    %v3148 = vmul.f32 %v3084, %v2636
    %v3149 = vmul.f32 %v3085, %v2637
    %v3150 = vmul.f32 %v3086, %v2638
    %v3151 = vmul.f32 %v3087, %v2639
    %v3152 = vmul.f32 %v3088, %v2640
    %v3153 = vmul.f32 %v3089, %v2641
    %v3154 = vmul.f32 %v3090, %v2642
    %v3155 = vmul.f32 %v3091, %v2643
    %v3156 = vmul.f32 %v3092, %v2644
    %v3157 = vmul.f32 %v3093, %v2645
    %v3158 = vmul.f32 %v3094, %v2646
    %v3159 = vmul.f32 %v3095, %v2647
    %v3160 = vmul.f32 %v3096, %v2648
    %v3161 = vmul.f32 %v3097, %v2649
    %v3162 = vmul.f32 %v3098, %v2650
    %v3163 = vmul.f32 %v3099, %v2651
    %v3164 = vmul.f32 %v3100, %v2652
    %v3165 = vmul.f32 %v3101, %v2653
    %v3166 = vmul.f32 %v3102, %v2654
    %v3167 = vmul.f32 %v3103, %v2655
    %v3168 = vmul.f32 %v3104, %v2656
    %v3169 = vmul.f32 %v3105, %v2657
    %v3170 = vmul.f32 %v3106, %v2658
    %v3171 = vmul.f32 %v3107, %v2659
    %v3172 = vmul.f32 %v3108, %v2660
    %v3173 = vmul.f32 %v3109, %v2661
    %v3174 = vmul.f32 %v3110, %v2662
    %v3175 = vmul.f32 %v3111, %v2663
    %v3176 = vmul.f32 %v3112, %v2664
    %v3177 = vmul.f32 %v3113, %v2665
    %v3178 = vmul.f32 %v3114, %v2666
    %v3179 = vmul.f32 %v3115, %v2667
    %v3180 = vmul.f32 %v3116, %v2668
    %v3181 = vmul.f32 %v3117, %v2669
    %v3182 = vmul.f32 %v3118, %v2670
    %v3183 = vmul.f32 %v3119, %v2671
    %v3184 = vmul.f32 %v3120, %v2672
    %v3185 = vmul.f32 %v3121, %v2673
    %v3186 = vmul.f32 %v2290, %v2355
    %v3187 = vmul.f32 %v2291, %v2357
    %v3188 = vmul.f32 %v2292, %v2359
    %v3189 = vmul.f32 %v2293, %v2361
    %v3190 = vmul.f32 %v2294, %v2363
    %v3191 = vmul.f32 %v2295, %v2365
    %v3192 = vmul.f32 %v2296, %v2367
    %v3193 = vmul.f32 %v2297, %v2369
    %v3194 = vmul.f32 %v2298, %v2371
    %v3195 = vmul.f32 %v2299, %v2373
    %v3196 = vmul.f32 %v2300, %v2375
    %v3197 = vmul.f32 %v2301, %v2377
    %v3198 = vmul.f32 %v2302, %v2379
    %v3199 = vmul.f32 %v2303, %v2381
    %v3200 = vmul.f32 %v2304, %v2383
    %v3201 = vmul.f32 %v2305, %v2385
    %v3202 = vmul.f32 %v2306, %v2387
    %v3203 = vmul.f32 %v2307, %v2389
    %v3204 = vmul.f32 %v2308, %v2391
    %v3205 = vmul.f32 %v2309, %v2393
    %v3206 = vmul.f32 %v2310, %v2395
    %v3207 = vmul.f32 %v2311, %v2397
    %v3208 = vmul.f32 %v2312, %v2399
    %v3209 = vmul.f32 %v2313, %v2401
    %v3210 = vmul.f32 %v2314, %v2403
    %v3211 = vmul.f32 %v2315, %v2405
    %v3212 = vmul.f32 %v2316, %v2407
    %v3213 = vmul.f32 %v2317, %v2409
    %v3214 = vmul.f32 %v2318, %v2411
    %v3215 = vmul.f32 %v2319, %v2413
    %v3216 = vmul.f32 %v2320, %v2415
    %v3217 = vmul.f32 %v2321, %v2417
    %v3218 = vmul.f32 %v2322, %v2419
    %v3219 = vmul.f32 %v2323, %v2421
    %v3220 = vmul.f32 %v2324, %v2423
    %v3221 = vmul.f32 %v2325, %v2425
    %v3222 = vmul.f32 %v2326, %v2427
    %v3223 = vmul.f32 %v2327, %v2429
    %v3224 = vmul.f32 %v2328, %v2431
    %v3225 = vmul.f32 %v2329, %v2433
    %v3226 = vmul.f32 %v2330, %v2435
    %v3227 = vmul.f32 %v2331, %v2437
    %v3228 = vmul.f32 %v2332, %v2439
    %v3229 = vmul.f32 %v2333, %v2441
    %v3230 = vmul.f32 %v2334, %v2443
    %v3231 = vmul.f32 %v2335, %v2445
    %v3232 = vmul.f32 %v2336, %v2447
    %v3233 = vmul.f32 %v2337, %v2449
    %v3234 = vmul.f32 %v2338, %v2451
    %v3235 = vmul.f32 %v2339, %v2453
    %v3236 = vmul.f32 %v2340, %v2455
    %v3237 = vmul.f32 %v2341, %v2457
    %v3238 = vmul.f32 %v2342, %v2459
    %v3239 = vmul.f32 %v2343, %v2461
    %v3240 = vmul.f32 %v2344, %v2463
    %v3241 = vmul.f32 %v2345, %v2465
    %v3242 = vmul.f32 %v2346, %v2467
    %v3243 = vmul.f32 %v2347, %v2469
    %v3244 = vmul.f32 %v2348, %v2471
    %v3245 = vmul.f32 %v2349, %v2473
    %v3246 = vmul.f32 %v2350, %v2475
    %v3247 = vmul.f32 %v2351, %v2477
    %v3248 = vmul.f32 %v2352, %v2479
    %v3249 = vmul.f32 %v2353, %v2481
    %v3250 = vmul.f32 %v3186, %v2355
    %v3251 = vmul.f32 %v3187, %v2357
    %v3252 = vmul.f32 %v3188, %v2359
    %v3253 = vmul.f32 %v3189, %v2361
    %v3254 = vmul.f32 %v3190, %v2363
    %v3255 = vmul.f32 %v3191, %v2365
    %v3256 = vmul.f32 %v3192, %v2367
    %v3257 = vmul.f32 %v3193, %v2369
    %v3258 = vmul.f32 %v3194, %v2371
    %v3259 = vmul.f32 %v3195, %v2373
    %v3260 = vmul.f32 %v3196, %v2375
    %v3261 = vmul.f32 %v3197, %v2377
    %v3262 = vmul.f32 %v3198, %v2379
    %v3263 = vmul.f32 %v3199, %v2381
    %v3264 = vmul.f32 %v3200, %v2383
    %v3265 = vmul.f32 %v3201, %v2385
    %v3266 = vmul.f32 %v3202, %v2387
    %v3267 = vmul.f32 %v3203, %v2389
    %v3268 = vmul.f32 %v3204, %v2391
    %v3269 = vmul.f32 %v3205, %v2393
    %v3270 = vmul.f32 %v3206, %v2395
    %v3271 = vmul.f32 %v3207, %v2397
    %v3272 = vmul.f32 %v3208, %v2399
    %v3273 = vmul.f32 %v3209, %v2401
    %v3274 = vmul.f32 %v3210, %v2403
    %v3275 = vmul.f32 %v3211, %v2405
    %v3276 = vmul.f32 %v3212, %v2407
    %v3277 = vmul.f32 %v3213, %v2409
    %v3278 = vmul.f32 %v3214, %v2411
    %v3279 = vmul.f32 %v3215, %v2413
    %v3280 = vmul.f32 %v3216, %v2415
    %v3281 = vmul.f32 %v3217, %v2417
    %v3282 = vmul.f32 %v3218, %v2419
    %v3283 = vmul.f32 %v3219, %v2421
    %v3284 = vmul.f32 %v3220, %v2423
    %v3285 = vmul.f32 %v3221, %v2425
    %v3286 = vmul.f32 %v3222, %v2427
    %v3287 = vmul.f32 %v3223, %v2429
    %v3288 = vmul.f32 %v3224, %v2431
    %v3289 = vmul.f32 %v3225, %v2433
    %v3290 = vmul.f32 %v3226, %v2435
    %v3291 = vmul.f32 %v3227, %v2437
    %v3292 = vmul.f32 %v3228, %v2439
    %v3293 = vmul.f32 %v3229, %v2441
    %v3294 = vmul.f32 %v3230, %v2443
    %v3295 = vmul.f32 %v3231, %v2445
    %v3296 = vmul.f32 %v3232, %v2447
    %v3297 = vmul.f32 %v3233, %v2449
    %v3298 = vmul.f32 %v3234, %v2451
    %v3299 = vmul.f32 %v3235, %v2453
    %v3300 = vmul.f32 %v3236, %v2455
    %v3301 = vmul.f32 %v3237, %v2457
    %v3302 = vmul.f32 %v3238, %v2459
    %v3303 = vmul.f32 %v3239, %v2461
    %v3304 = vmul.f32 %v3240, %v2463
    %v3305 = vmul.f32 %v3241, %v2465
    %v3306 = vmul.f32 %v3242, %v2467
    %v3307 = vmul.f32 %v3243, %v2469
    %v3308 = vmul.f32 %v3244, %v2471
    %v3309 = vmul.f32 %v3245, %v2473
    %v3310 = vmul.f32 %v3246, %v2475
    %v3311 = vmul.f32 %v3247, %v2477
    %v3312 = vmul.f32 %v3248, %v2479
    %v3313 = vmul.f32 %v3249, %v2481
    %v3314 = vmul.f32 %v3250, %v2866
    %v3315 = vmul.f32 %v3251, %v2867
    %v3316 = vmul.f32 %v3252, %v2868
    %v3317 = vmul.f32 %v3253, %v2869
    %v3318 = vmul.f32 %v3254, %v2870
    %v3319 = vmul.f32 %v3255, %v2871
    %v3320 = vmul.f32 %v3256, %v2872
    %v3321 = vmul.f32 %v3257, %v2873
    %v3322 = vmul.f32 %v3258, %v2874
    %v3323 = vmul.f32 %v3259, %v2875
    %v3324 = vmul.f32 %v3260, %v2876
    %v3325 = vmul.f32 %v3261, %v2877
    %v3326 = vmul.f32 %v3262, %v2878
    %v3327 = vmul.f32 %v3263, %v2879
    %v3328 = vmul.f32 %v3264, %v2880
    %v3329 = vmul.f32 %v3265, %v2881
    %v3330 = vmul.f32 %v3266, %v2882
    %v3331 = vmul.f32 %v3267, %v2883
    %v3332 = vmul.f32 %v3268, %v2884
    %v3333 = vmul.f32 %v3269, %v2885
    %v3334 = vmul.f32 %v3270, %v2886
    %v3335 = vmul.f32 %v3271, %v2887
    %v3336 = vmul.f32 %v3272, %v2888
    %v3337 = vmul.f32 %v3273, %v2889
    %v3338 = vmul.f32 %v3274, %v2890
    %v3339 = vmul.f32 %v3275, %v2891
    %v3340 = vmul.f32 %v3276, %v2892
    %v3341 = vmul.f32 %v3277, %v2893
    %v3342 = vmul.f32 %v3278, %v2894
    %v3343 = vmul.f32 %v3279, %v2895
    %v3344 = vmul.f32 %v3280, %v2896
    %v3345 = vmul.f32 %v3281, %v2897
    %v3346 = vmul.f32 %v3282, %v2898
    %v3347 = vmul.f32 %v3283, %v2899
    %v3348 = vmul.f32 %v3284, %v2900
    %v3349 = vmul.f32 %v3285, %v2901
    %v3350 = vmul.f32 %v3286, %v2902
    %v3351 = vmul.f32 %v3287, %v2903
    %v3352 = vmul.f32 %v3288, %v2904
    %v3353 = vmul.f32 %v3289, %v2905
    %v3354 = vmul.f32 %v3290, %v2906
    %v3355 = vmul.f32 %v3291, %v2907
    %v3356 = vmul.f32 %v3292, %v2908
    %v3357 = vmul.f32 %v3293, %v2909
    %v3358 = vmul.f32 %v3294, %v2910
    %v3359 = vmul.f32 %v3295, %v2911
    %v3360 = vmul.f32 %v3296, %v2912
    %v3361 = vmul.f32 %v3297, %v2913
    %v3362 = vmul.f32 %v3298, %v2914
    %v3363 = vmul.f32 %v3299, %v2915
    %v3364 = vmul.f32 %v3300, %v2916
    %v3365 = vmul.f32 %v3301, %v2917
    %v3366 = vmul.f32 %v3302, %v2918
    %v3367 = vmul.f32 %v3303, %v2919
    %v3368 = vmul.f32 %v3304, %v2920
    %v3369 = vmul.f32 %v3305, %v2921
    %v3370 = vmul.f32 %v3306, %v2922
    %v3371 = vmul.f32 %v3307, %v2923
    %v3372 = vmul.f32 %v3308, %v2924
    %v3373 = vmul.f32 %v3309, %v2925
    %v3374 = vmul.f32 %v3310, %v2926
    %v3375 = vmul.f32 %v3311, %v2927
    %v3376 = vmul.f32 %v3312, %v2928
    %v3377 = vmul.f32 %v3313, %v2929
    %v3378 = vmul.f32 %v3314, %v2674
    %v3379 = vmul.f32 %v3315, %v2675
    %v3380 = vmul.f32 %v3316, %v2676
    %v3381 = vmul.f32 %v3317, %v2677
    %v3382 = vmul.f32 %v3318, %v2678
    %v3383 = vmul.f32 %v3319, %v2679
    %v3384 = vmul.f32 %v3320, %v2680
    %v3385 = vmul.f32 %v3321, %v2681
    %v3386 = vmul.f32 %v3322, %v2682
    %v3387 = vmul.f32 %v3323, %v2683
    %v3388 = vmul.f32 %v3324, %v2684
    %v3389 = vmul.f32 %v3325, %v2685
    %v3390 = vmul.f32 %v3326, %v2686
    %v3391 = vmul.f32 %v3327, %v2687
    %v3392 = vmul.f32 %v3328, %v2688
    %v3393 = vmul.f32 %v3329, %v2689
    %v3394 = vmul.f32 %v3330, %v2690
    %v3395 = vmul.f32 %v3331, %v2691
    %v3396 = vmul.f32 %v3332, %v2692
    %v3397 = vmul.f32 %v3333, %v2693
    %v3398 = vmul.f32 %v3334, %v2694
    %v3399 = vmul.f32 %v3335, %v2695
    %v3400 = vmul.f32 %v3336, %v2696
    %v3401 = vmul.f32 %v3337, %v2697
    %v3402 = vmul.f32 %v3338, %v2698
    %v3403 = vmul.f32 %v3339, %v2699
    %v3404 = vmul.f32 %v3340, %v2700
    %v3405 = vmul.f32 %v3341, %v2701
    %v3406 = vmul.f32 %v3342, %v2702
    %v3407 = vmul.f32 %v3343, %v2703
    %v3408 = vmul.f32 %v3344, %v2704
    %v3409 = vmul.f32 %v3345, %v2705
    %v3410 = vmul.f32 %v3346, %v2706
    %v3411 = vmul.f32 %v3347, %v2707
    %v3412 = vmul.f32 %v3348, %v2708
    %v3413 = vmul.f32 %v3349, %v2709
    %v3414 = vmul.f32 %v3350, %v2710
    %v3415 = vmul.f32 %v3351, %v2711
    %v3416 = vmul.f32 %v3352, %v2712
    %v3417 = vmul.f32 %v3353, %v2713
    %v3418 = vmul.f32 %v3354, %v2714
    %v3419 = vmul.f32 %v3355, %v2715
    %v3420 = vmul.f32 %v3356, %v2716
    %v3421 = vmul.f32 %v3357, %v2717
    %v3422 = vmul.f32 %v3358, %v2718
    %v3423 = vmul.f32 %v3359, %v2719
    %v3424 = vmul.f32 %v3360, %v2720
    %v3425 = vmul.f32 %v3361, %v2721
    %v3426 = vmul.f32 %v3362, %v2722
    %v3427 = vmul.f32 %v3363, %v2723
    %v3428 = vmul.f32 %v3364, %v2724
    %v3429 = vmul.f32 %v3365, %v2725
    %v3430 = vmul.f32 %v3366, %v2726
    %v3431 = vmul.f32 %v3367, %v2727
    %v3432 = vmul.f32 %v3368, %v2728
    %v3433 = vmul.f32 %v3369, %v2729
    %v3434 = vmul.f32 %v3370, %v2730
    %v3435 = vmul.f32 %v3371, %v2731
    %v3436 = vmul.f32 %v3372, %v2732
    %v3437 = vmul.f32 %v3373, %v2733
    %v3438 = vmul.f32 %v3374, %v2734
    %v3439 = vmul.f32 %v3375, %v2735
    %v3440 = vmul.f32 %v3376, %v2736
    %v3441 = vmul.f32 %v3377, %v2737
    %v3442 = vadd.f32 %v3122, %v3378
    %v3443 = vadd.f32 %v3123, %v3379
    %v3444 = vadd.f32 %v3124, %v3380
    %v3445 = vadd.f32 %v3125, %v3381
    %v3446 = vadd.f32 %v3126, %v3382
    %v3447 = vadd.f32 %v3127, %v3383
    %v3448 = vadd.f32 %v3128, %v3384
    %v3449 = vadd.f32 %v3129, %v3385
    %v3450 = vadd.f32 %v3130, %v3386
    %v3451 = vadd.f32 %v3131, %v3387
    %v3452 = vadd.f32 %v3132, %v3388
    %v3453 = vadd.f32 %v3133, %v3389
    %v3454 = vadd.f32 %v3134, %v3390
    %v3455 = vadd.f32 %v3135, %v3391
    %v3456 = vadd.f32 %v3136, %v3392
    %v3457 = vadd.f32 %v3137, %v3393
    %v3458 = vadd.f32 %v3138, %v3394
    %v3459 = vadd.f32 %v3139, %v3395
    %v3460 = vadd.f32 %v3140, %v3396
    %v3461 = vadd.f32 %v3141, %v3397
    %v3462 = vadd.f32 %v3142, %v3398
    %v3463 = vadd.f32 %v3143, %v3399
    %v3464 = vadd.f32 %v3144, %v3400
    %v3465 = vadd.f32 %v3145, %v3401
    %v3466 = vadd.f32 %v3146, %v3402
    %v3467 = vadd.f32 %v3147, %v3403
    %v3468 = vadd.f32 %v3148, %v3404
    %v3469 = vadd.f32 %v3149, %v3405
    %v3470 = vadd.f32 %v3150, %v3406
    %v3471 = vadd.f32 %v3151, %v3407
    %v3472 = vadd.f32 %v3152, %v3408
    %v3473 = vadd.f32 %v3153, %v3409
    %v3474 = vadd.f32 %v3154, %v3410
    %v3475 = vadd.f32 %v3155, %v3411
    %v3476 = vadd.f32 %v3156, %v3412
    %v3477 = vadd.f32 %v3157, %v3413
    %v3478 = vadd.f32 %v3158, %v3414
    %v3479 = vadd.f32 %v3159, %v3415
    %v3480 = vadd.f32 %v3160, %v3416
    %v3481 = vadd.f32 %v3161, %v3417
    %v3482 = vadd.f32 %v3162, %v3418
    %v3483 = vadd.f32 %v3163, %v3419
    %v3484 = vadd.f32 %v3164, %v3420
    %v3485 = vadd.f32 %v3165, %v3421
    %v3486 = vadd.f32 %v3166, %v3422
    %v3487 = vadd.f32 %v3167, %v3423
    %v3488 = vadd.f32 %v3168, %v3424
    %v3489 = vadd.f32 %v3169, %v3425
    %v3490 = vadd.f32 %v3170, %v3426
    %v3491 = vadd.f32 %v3171, %v3427
    %v3492 = vadd.f32 %v3172, %v3428
    %v3493 = vadd.f32 %v3173, %v3429
    %v3494 = vadd.f32 %v3174, %v3430
    %v3495 = vadd.f32 %v3175, %v3431
    %v3496 = vadd.f32 %v3176, %v3432
    %v3497 = vadd.f32 %v3177, %v3433
    %v3498 = vadd.f32 %v3178, %v3434
    %v3499 = vadd.f32 %v3179, %v3435
    %v3500 = vadd.f32 %v3180, %v3436
    %v3501 = vadd.f32 %v3181, %v3437
    %v3502 = vadd.f32 %v3182, %v3438
    %v3503 = vadd.f32 %v3183, %v3439
    %v3504 = vadd.f32 %v3184, %v3440
    %v3505 = vadd.f32 %v3185, %v3441
    %v3506 = vsub.f32 0.0, %v3442
    %v3507 = vsub.f32 0.0, %v3443
    %v3508 = vsub.f32 0.0, %v3444
    %v3509 = vsub.f32 0.0, %v3445
    %v3510 = vsub.f32 0.0, %v3446
    %v3511 = vsub.f32 0.0, %v3447
    %v3512 = vsub.f32 0.0, %v3448
    %v3513 = vsub.f32 0.0, %v3449
    %v3514 = vsub.f32 0.0, %v3450
    %v3515 = vsub.f32 0.0, %v3451
    %v3516 = vsub.f32 0.0, %v3452
    %v3517 = vsub.f32 0.0, %v3453
    %v3518 = vsub.f32 0.0, %v3454
    %v3519 = vsub.f32 0.0, %v3455
    %v3520 = vsub.f32 0.0, %v3456
    %v3521 = vsub.f32 0.0, %v3457
    %v3522 = vsub.f32 0.0, %v3458
    %v3523 = vsub.f32 0.0, %v3459
    %v3524 = vsub.f32 0.0, %v3460
    %v3525 = vsub.f32 0.0, %v3461
    %v3526 = vsub.f32 0.0, %v3462
    %v3527 = vsub.f32 0.0, %v3463
    %v3528 = vsub.f32 0.0, %v3464
    %v3529 = vsub.f32 0.0, %v3465
    %v3530 = vsub.f32 0.0, %v3466
    %v3531 = vsub.f32 0.0, %v3467
    %v3532 = vsub.f32 0.0, %v3468
    %v3533 = vsub.f32 0.0, %v3469
    %v3534 = vsub.f32 0.0, %v3470
    %v3535 = vsub.f32 0.0, %v3471
    %v3536 = vsub.f32 0.0, %v3472
    %v3537 = vsub.f32 0.0, %v3473
    %v3538 = vsub.f32 0.0, %v3474
    %v3539 = vsub.f32 0.0, %v3475
    %v3540 = vsub.f32 0.0, %v3476
    %v3541 = vsub.f32 0.0, %v3477
    %v3542 = vsub.f32 0.0, %v3478
    %v3543 = vsub.f32 0.0, %v3479
    %v3544 = vsub.f32 0.0, %v3480
    %v3545 = vsub.f32 0.0, %v3481
    %v3546 = vsub.f32 0.0, %v3482
    %v3547 = vsub.f32 0.0, %v3483
    %v3548 = vsub.f32 0.0, %v3484
    %v3549 = vsub.f32 0.0, %v3485
    %v3550 = vsub.f32 0.0, %v3486
    %v3551 = vsub.f32 0.0, %v3487
    %v3552 = vsub.f32 0.0, %v3488
    %v3553 = vsub.f32 0.0, %v3489
    %v3554 = vsub.f32 0.0, %v3490
    %v3555 = vsub.f32 0.0, %v3491
    %v3556 = vsub.f32 0.0, %v3492
    %v3557 = vsub.f32 0.0, %v3493
    %v3558 = vsub.f32 0.0, %v3494
    %v3559 = vsub.f32 0.0, %v3495
    %v3560 = vsub.f32 0.0, %v3496
    %v3561 = vsub.f32 0.0, %v3497
    %v3562 = vsub.f32 0.0, %v3498
    %v3563 = vsub.f32 0.0, %v3499
    %v3564 = vsub.f32 0.0, %v3500
    %v3565 = vsub.f32 0.0, %v3501
    %v3566 = vsub.f32 0.0, %v3502
    %v3567 = vsub.f32 0.0, %v3503
    %v3568 = vsub.f32 0.0, %v3504
    %v3569 = vsub.f32 0.0, %v3505
    %v3570 = vld [vmem:[%s2] sm:$0xff]
    %v3571 = vld [vmem:[%s2 + $0x8] sm:$0xff]
    %v3572 = vld [vmem:[%s2 + $0x10] sm:$0xff]
    %v3573 = vld [vmem:[%s2 + $0x18] sm:$0xff]
    %v3574 = vld [vmem:[%s2 + $0x20] sm:$0xff]
    %v3575 = vld [vmem:[%s2 + $0x28] sm:$0xff]
    %v3576 = vld [vmem:[%s2 + $0x30] sm:$0xff]
    %v3577 = vld [vmem:[%s2 + $0x38] sm:$0xff]
    %v3578 = vld [vmem:[%s2 + $0x40] sm:$0xff]
    %v3579 = vld [vmem:[%s2 + $0x48] sm:$0xff]
    %v3580 = vld [vmem:[%s2 + $0x50] sm:$0xff]
    %v3581 = vld [vmem:[%s2 + $0x58] sm:$0xff]
    %v3582 = vld [vmem:[%s2 + $0x60] sm:$0xff]
    %v3583 = vld [vmem:[%s2 + $0x68] sm:$0xff]
    %v3584 = vld [vmem:[%s2 + $0x70] sm:$0xff]
    %v3585 = vld [vmem:[%s2 + $0x78] sm:$0xff]
    %v3586 = vld [vmem:[%s2 + $0x80] sm:$0xff]
    %v3587 = vld [vmem:[%s2 + $0x88] sm:$0xff]
    %v3588 = vld [vmem:[%s2 + $0x90] sm:$0xff]
    %v3589 = vld [vmem:[%s2 + $0x98] sm:$0xff]
    %v3590 = vld [vmem:[%s2 + $0xa0] sm:$0xff]
    %v3591 = vld [vmem:[%s2 + $0xa8] sm:$0xff]
    %v3592 = vld [vmem:[%s2 + $0xb0] sm:$0xff]
    %v3593 = vld [vmem:[%s2 + $0xb8] sm:$0xff]
    %v3594 = vld [vmem:[%s2 + $0xc0] sm:$0xff]
    %v3595 = vld [vmem:[%s2 + $0xc8] sm:$0xff]
    %v3596 = vld [vmem:[%s2 + $0xd0] sm:$0xff]
    %v3597 = vld [vmem:[%s2 + $0xd8] sm:$0xff]
    %v3598 = vld [vmem:[%s2 + $0xe0] sm:$0xff]
    %v3599 = vld [vmem:[%s2 + $0xe8] sm:$0xff]
    %v3600 = vld [vmem:[%s2 + $0xf0] sm:$0xff]
    %v3601 = vld [vmem:[%s2 + $0xf8] sm:$0xff]
    %v3602 = vld [vmem:[%s2 + $0x100] sm:$0xff]
    %v3603 = vld [vmem:[%s2 + $0x108] sm:$0xff]
    %v3604 = vld [vmem:[%s2 + $0x110] sm:$0xff]
    %v3605 = vld [vmem:[%s2 + $0x118] sm:$0xff]
    %v3606 = vld [vmem:[%s2 + $0x120] sm:$0xff]
    %v3607 = vld [vmem:[%s2 + $0x128] sm:$0xff]
    %v3608 = vld [vmem:[%s2 + $0x130] sm:$0xff]
    %v3609 = vld [vmem:[%s2 + $0x138] sm:$0xff]
    %v3610 = vld [vmem:[%s2 + $0x140] sm:$0xff]
    %v3611 = vld [vmem:[%s2 + $0x148] sm:$0xff]
    %v3612 = vld [vmem:[%s2 + $0x150] sm:$0xff]
    %v3613 = vld [vmem:[%s2 + $0x158] sm:$0xff]
    %v3614 = vld [vmem:[%s2 + $0x160] sm:$0xff]
    %v3615 = vld [vmem:[%s2 + $0x168] sm:$0xff]
    %v3616 = vld [vmem:[%s2 + $0x170] sm:$0xff]
    %v3617 = vld [vmem:[%s2 + $0x178] sm:$0xff]
    %v3618 = vld [vmem:[%s2 + $0x180] sm:$0xff]
    %v3619 = vld [vmem:[%s2 + $0x188] sm:$0xff]
    %v3620 = vld [vmem:[%s2 + $0x190] sm:$0xff]
    %v3621 = vld [vmem:[%s2 + $0x198] sm:$0xff]
    %v3622 = vld [vmem:[%s2 + $0x1a0] sm:$0xff]
    %v3623 = vld [vmem:[%s2 + $0x1a8] sm:$0xff]
    %v3624 = vld [vmem:[%s2 + $0x1b0] sm:$0xff]
    %v3625 = vld [vmem:[%s2 + $0x1b8] sm:$0xff]
    %v3626 = vld [vmem:[%s2 + $0x1c0] sm:$0xff]
    %v3627 = vld [vmem:[%s2 + $0x1c8] sm:$0xff]
    %v3628 = vld [vmem:[%s2 + $0x1d0] sm:$0xff]
    %v3629 = vld [vmem:[%s2 + $0x1d8] sm:$0xff]
    %v3630 = vld [vmem:[%s2 + $0x1e0] sm:$0xff]
    %v3631 = vld [vmem:[%s2 + $0x1e8] sm:$0xff]
    %v3632 = vld [vmem:[%s2 + $0x1f0] sm:$0xff]
    %v3633 = vld [vmem:[%s2 + $0x1f8] sm:$0xff]
    %3635 = vset.pattern.permute.xlu0 0
    %3636 = vperm.xlu0 %3635, %v3570
    %v3637 = vpop.permute.xlu0 %3636
    %3640 = vset.pattern.permute.xlu0 0
    %3641 = vperm.xlu0 %3640, %v3571
    %v3642 = vpop.permute.xlu0 %3641
    %3645 = vset.pattern.permute.xlu0 0
    %3646 = vperm.xlu0 %3645, %v3572
    %v3647 = vpop.permute.xlu0 %3646
    %3650 = vset.pattern.permute.xlu0 0
    %3651 = vperm.xlu0 %3650, %v3573
    %v3652 = vpop.permute.xlu0 %3651
    %3655 = vset.pattern.permute.xlu0 0
    %3656 = vperm.xlu0 %3655, %v3574
    %v3657 = vpop.permute.xlu0 %3656
    %3660 = vset.pattern.permute.xlu0 0
    %3661 = vperm.xlu0 %3660, %v3575
    %v3662 = vpop.permute.xlu0 %3661
    %3665 = vset.pattern.permute.xlu0 0
    %3666 = vperm.xlu0 %3665, %v3576
    %v3667 = vpop.permute.xlu0 %3666
    %3670 = vset.pattern.permute.xlu0 0
    %3671 = vperm.xlu0 %3670, %v3577
    %v3672 = vpop.permute.xlu0 %3671
    %3675 = vset.pattern.permute.xlu0 0
    %3676 = vperm.xlu0 %3675, %v3578
    %v3677 = vpop.permute.xlu0 %3676
    %3680 = vset.pattern.permute.xlu0 0
    %3681 = vperm.xlu0 %3680, %v3579
    %v3682 = vpop.permute.xlu0 %3681
    %3685 = vset.pattern.permute.xlu0 0
    %3686 = vperm.xlu0 %3685, %v3580
    %v3687 = vpop.permute.xlu0 %3686
    %3690 = vset.pattern.permute.xlu0 0
    %3691 = vperm.xlu0 %3690, %v3581
    %v3692 = vpop.permute.xlu0 %3691
    %3695 = vset.pattern.permute.xlu0 0
    %3696 = vperm.xlu0 %3695, %v3582
    %v3697 = vpop.permute.xlu0 %3696
    %3700 = vset.pattern.permute.xlu0 0
    %3701 = vperm.xlu0 %3700, %v3583
    %v3702 = vpop.permute.xlu0 %3701
    %3705 = vset.pattern.permute.xlu0 0
    %3706 = vperm.xlu0 %3705, %v3584
    %v3707 = vpop.permute.xlu0 %3706
    %3710 = vset.pattern.permute.xlu0 0
    %3711 = vperm.xlu0 %3710, %v3585
    %v3712 = vpop.permute.xlu0 %3711
    %3715 = vset.pattern.permute.xlu0 0
    %3716 = vperm.xlu0 %3715, %v3586
    %v3717 = vpop.permute.xlu0 %3716
    %3720 = vset.pattern.permute.xlu0 0
    %3721 = vperm.xlu0 %3720, %v3587
    %v3722 = vpop.permute.xlu0 %3721
    %3725 = vset.pattern.permute.xlu0 0
    %3726 = vperm.xlu0 %3725, %v3588
    %v3727 = vpop.permute.xlu0 %3726
    %3730 = vset.pattern.permute.xlu0 0
    %3731 = vperm.xlu0 %3730, %v3589
    %v3732 = vpop.permute.xlu0 %3731
    %3735 = vset.pattern.permute.xlu0 0
    %3736 = vperm.xlu0 %3735, %v3590
    %v3737 = vpop.permute.xlu0 %3736
    %3740 = vset.pattern.permute.xlu0 0
    %3741 = vperm.xlu0 %3740, %v3591
    %v3742 = vpop.permute.xlu0 %3741
    %3745 = vset.pattern.permute.xlu0 0
    %3746 = vperm.xlu0 %3745, %v3592
    %v3747 = vpop.permute.xlu0 %3746
    %3750 = vset.pattern.permute.xlu0 0
    %3751 = vperm.xlu0 %3750, %v3593
    %v3752 = vpop.permute.xlu0 %3751
    %3755 = vset.pattern.permute.xlu0 0
    %3756 = vperm.xlu0 %3755, %v3594
    %v3757 = vpop.permute.xlu0 %3756
    %3760 = vset.pattern.permute.xlu0 0
    %3761 = vperm.xlu0 %3760, %v3595
    %v3762 = vpop.permute.xlu0 %3761
    %3765 = vset.pattern.permute.xlu0 0
    %3766 = vperm.xlu0 %3765, %v3596
    %v3767 = vpop.permute.xlu0 %3766
    %3770 = vset.pattern.permute.xlu0 0
    %3771 = vperm.xlu0 %3770, %v3597
    %v3772 = vpop.permute.xlu0 %3771
    %3775 = vset.pattern.permute.xlu0 0
    %3776 = vperm.xlu0 %3775, %v3598
    %v3777 = vpop.permute.xlu0 %3776
    %3780 = vset.pattern.permute.xlu0 0
    %3781 = vperm.xlu0 %3780, %v3599
    %v3782 = vpop.permute.xlu0 %3781
    %3785 = vset.pattern.permute.xlu0 0
    %3786 = vperm.xlu0 %3785, %v3600
    %v3787 = vpop.permute.xlu0 %3786
    %3790 = vset.pattern.permute.xlu0 0
    %3791 = vperm.xlu0 %3790, %v3601
    %v3792 = vpop.permute.xlu0 %3791
    %3795 = vset.pattern.permute.xlu0 0
    %3796 = vperm.xlu0 %3795, %v3602
    %v3797 = vpop.permute.xlu0 %3796
    %3800 = vset.pattern.permute.xlu0 0
    %3801 = vperm.xlu0 %3800, %v3603
    %v3802 = vpop.permute.xlu0 %3801
    %3805 = vset.pattern.permute.xlu0 0
    %3806 = vperm.xlu0 %3805, %v3604
    %v3807 = vpop.permute.xlu0 %3806
    %3810 = vset.pattern.permute.xlu0 0
    %3811 = vperm.xlu0 %3810, %v3605
    %v3812 = vpop.permute.xlu0 %3811
    %3815 = vset.pattern.permute.xlu0 0
    %3816 = vperm.xlu0 %3815, %v3606
    %v3817 = vpop.permute.xlu0 %3816
    %3820 = vset.pattern.permute.xlu0 0
    %3821 = vperm.xlu0 %3820, %v3607
    %v3822 = vpop.permute.xlu0 %3821
    %3825 = vset.pattern.permute.xlu0 0
    %3826 = vperm.xlu0 %3825, %v3608
    %v3827 = vpop.permute.xlu0 %3826
    %3830 = vset.pattern.permute.xlu0 0
    %3831 = vperm.xlu0 %3830, %v3609
    %v3832 = vpop.permute.xlu0 %3831
    %3835 = vset.pattern.permute.xlu0 0
    %3836 = vperm.xlu0 %3835, %v3610
    %v3837 = vpop.permute.xlu0 %3836
    %3840 = vset.pattern.permute.xlu0 0
    %3841 = vperm.xlu0 %3840, %v3611
    %v3842 = vpop.permute.xlu0 %3841
    %3845 = vset.pattern.permute.xlu0 0
    %3846 = vperm.xlu0 %3845, %v3612
    %v3847 = vpop.permute.xlu0 %3846
    %3850 = vset.pattern.permute.xlu0 0
    %3851 = vperm.xlu0 %3850, %v3613
    %v3852 = vpop.permute.xlu0 %3851
    %3855 = vset.pattern.permute.xlu0 0
    %3856 = vperm.xlu0 %3855, %v3614
    %v3857 = vpop.permute.xlu0 %3856
    %3860 = vset.pattern.permute.xlu0 0
    %3861 = vperm.xlu0 %3860, %v3615
    %v3862 = vpop.permute.xlu0 %3861
    %3865 = vset.pattern.permute.xlu0 0
    %3866 = vperm.xlu0 %3865, %v3616
    %v3867 = vpop.permute.xlu0 %3866
    %3870 = vset.pattern.permute.xlu0 0
    %3871 = vperm.xlu0 %3870, %v3617
    %v3872 = vpop.permute.xlu0 %3871
    %3875 = vset.pattern.permute.xlu0 0
    %3876 = vperm.xlu0 %3875, %v3618
    %v3877 = vpop.permute.xlu0 %3876
    %3880 = vset.pattern.permute.xlu0 0
    %3881 = vperm.xlu0 %3880, %v3619
    %v3882 = vpop.permute.xlu0 %3881
    %3885 = vset.pattern.permute.xlu0 0
    %3886 = vperm.xlu0 %3885, %v3620
    %v3887 = vpop.permute.xlu0 %3886
    %3890 = vset.pattern.permute.xlu0 0
    %3891 = vperm.xlu0 %3890, %v3621
    %v3892 = vpop.permute.xlu0 %3891
    %3895 = vset.pattern.permute.xlu0 0
    %3896 = vperm.xlu0 %3895, %v3622
    %v3897 = vpop.permute.xlu0 %3896
    %3900 = vset.pattern.permute.xlu0 0
    %3901 = vperm.xlu0 %3900, %v3623
    %v3902 = vpop.permute.xlu0 %3901
    %3905 = vset.pattern.permute.xlu0 0
    %3906 = vperm.xlu0 %3905, %v3624
    %v3907 = vpop.permute.xlu0 %3906
    %3910 = vset.pattern.permute.xlu0 0
    %3911 = vperm.xlu0 %3910, %v3625
    %v3912 = vpop.permute.xlu0 %3911
    %3915 = vset.pattern.permute.xlu0 0
    %3916 = vperm.xlu0 %3915, %v3626
    %v3917 = vpop.permute.xlu0 %3916
    %3920 = vset.pattern.permute.xlu0 0
    %3921 = vperm.xlu0 %3920, %v3627
    %v3922 = vpop.permute.xlu0 %3921
    %3925 = vset.pattern.permute.xlu0 0
    %3926 = vperm.xlu0 %3925, %v3628
    %v3927 = vpop.permute.xlu0 %3926
    %3930 = vset.pattern.permute.xlu0 0
    %3931 = vperm.xlu0 %3930, %v3629
    %v3932 = vpop.permute.xlu0 %3931
    %3935 = vset.pattern.permute.xlu0 0
    %3936 = vperm.xlu0 %3935, %v3630
    %v3937 = vpop.permute.xlu0 %3936
    %3940 = vset.pattern.permute.xlu0 0
    %3941 = vperm.xlu0 %3940, %v3631
    %v3942 = vpop.permute.xlu0 %3941
    %3945 = vset.pattern.permute.xlu0 0
    %3946 = vperm.xlu0 %3945, %v3632
    %v3947 = vpop.permute.xlu0 %3946
    %3950 = vset.pattern.permute.xlu0 0
    %3951 = vperm.xlu0 %3950, %v3633
    %v3952 = vpop.permute.xlu0 %3951
    %v3954 = vmul.f32 %v3637, %v1585
    %v3955 = vmul.f32 %v3642, %v1585
    %v3956 = vmul.f32 %v3647, %v1585
    %v3957 = vmul.f32 %v3652, %v1585
    %v3958 = vmul.f32 %v3657, %v1585
    %v3959 = vmul.f32 %v3662, %v1585
    %v3960 = vmul.f32 %v3667, %v1585
    %v3961 = vmul.f32 %v3672, %v1585
    %v3962 = vmul.f32 %v3677, %v1585
    %v3963 = vmul.f32 %v3682, %v1585
    %v3964 = vmul.f32 %v3687, %v1585
    %v3965 = vmul.f32 %v3692, %v1585
    %v3966 = vmul.f32 %v3697, %v1585
    %v3967 = vmul.f32 %v3702, %v1585
    %v3968 = vmul.f32 %v3707, %v1585
    %v3969 = vmul.f32 %v3712, %v1585
    %v3970 = vmul.f32 %v3717, %v1585
    %v3971 = vmul.f32 %v3722, %v1585
    %v3972 = vmul.f32 %v3727, %v1585
    %v3973 = vmul.f32 %v3732, %v1585
    %v3974 = vmul.f32 %v3737, %v1585
    %v3975 = vmul.f32 %v3742, %v1585
    %v3976 = vmul.f32 %v3747, %v1585
    %v3977 = vmul.f32 %v3752, %v1585
    %v3978 = vmul.f32 %v3757, %v1585
    %v3979 = vmul.f32 %v3762, %v1585
    %v3980 = vmul.f32 %v3767, %v1585
    %v3981 = vmul.f32 %v3772, %v1585
    %v3982 = vmul.f32 %v3777, %v1585
    %v3983 = vmul.f32 %v3782, %v1585
    %v3984 = vmul.f32 %v3787, %v1585
    %v3985 = vmul.f32 %v3792, %v1585
    %v3986 = vmul.f32 %v3797, %v1585
    %v3987 = vmul.f32 %v3802, %v1585
    %v3988 = vmul.f32 %v3807, %v1585
    %v3989 = vmul.f32 %v3812, %v1585
    %v3990 = vmul.f32 %v3817, %v1585
    %v3991 = vmul.f32 %v3822, %v1585
    %v3992 = vmul.f32 %v3827, %v1585
    %v3993 = vmul.f32 %v3832, %v1585
    %v3994 = vmul.f32 %v3837, %v1585
    %v3995 = vmul.f32 %v3842, %v1585
    %v3996 = vmul.f32 %v3847, %v1585
    %v3997 = vmul.f32 %v3852, %v1585
    %v3998 = vmul.f32 %v3857, %v1585
    %v3999 = vmul.f32 %v3862, %v1585
    %v4000 = vmul.f32 %v3867, %v1585
    %v4001 = vmul.f32 %v3872, %v1585
    %v4002 = vmul.f32 %v3877, %v1585
    %v4003 = vmul.f32 %v3882, %v1585
    %v4004 = vmul.f32 %v3887, %v1585
    %v4005 = vmul.f32 %v3892, %v1585
    %v4006 = vmul.f32 %v3897, %v1585
    %v4007 = vmul.f32 %v3902, %v1585
    %v4008 = vmul.f32 %v3907, %v1585
    %v4009 = vmul.f32 %v3912, %v1585
    %v4010 = vmul.f32 %v3917, %v1585
    %v4011 = vmul.f32 %v3922, %v1585
    %v4012 = vmul.f32 %v3927, %v1585
    %v4013 = vmul.f32 %v3932, %v1585
    %v4014 = vmul.f32 %v3937, %v1585
    %v4015 = vmul.f32 %v3942, %v1585
    %v4016 = vmul.f32 %v3947, %v1585
    %v4017 = vmul.f32 %v3952, %v1585
    %v4018 = vsub.f32 %v874, %v1512
    %v4019 = vsub.f32 %v877, %v1513
    %v4020 = vsub.f32 %v882, %v1514
    %v4021 = vsub.f32 %v885, %v1515
    %v4022 = vsub.f32 %v890, %v1516
    %v4023 = vsub.f32 %v893, %v1517
    %v4024 = vsub.f32 %v898, %v1518
    %v4025 = vsub.f32 %v901, %v1519
    %v4026 = vsub.f32 %v906, %v1520
    %v4027 = vsub.f32 %v909, %v1521
    %v4028 = vsub.f32 %v914, %v1522
    %v4029 = vsub.f32 %v917, %v1523
    %v4030 = vsub.f32 %v922, %v1524
    %v4031 = vsub.f32 %v925, %v1525
    %v4032 = vsub.f32 %v930, %v1526
    %v4033 = vsub.f32 %v933, %v1527
    %v4034 = vsub.f32 %v938, %v1528
    %v4035 = vsub.f32 %v941, %v1529
    %v4036 = vsub.f32 %v946, %v1530
    %v4037 = vsub.f32 %v949, %v1531
    %v4038 = vsub.f32 %v954, %v1532
    %v4039 = vsub.f32 %v957, %v1533
    %v4040 = vsub.f32 %v962, %v1534
    %v4041 = vsub.f32 %v965, %v1535
    %v4042 = vsub.f32 %v970, %v1536
    %v4043 = vsub.f32 %v973, %v1537
    %v4044 = vsub.f32 %v978, %v1538
    %v4045 = vsub.f32 %v981, %v1539
    %v4046 = vsub.f32 %v986, %v1540
    %v4047 = vsub.f32 %v989, %v1541
    %v4048 = vsub.f32 %v994, %v1542
    %v4049 = vsub.f32 %v997, %v1543
    %v4050 = vsub.f32 %v1002, %v1544
    %v4051 = vsub.f32 %v1005, %v1545
    %v4052 = vsub.f32 %v1010, %v1546
    %v4053 = vsub.f32 %v1013, %v1547
    %v4054 = vsub.f32 %v1018, %v1548
    %v4055 = vsub.f32 %v1021, %v1549
    %v4056 = vsub.f32 %v1026, %v1550
    %v4057 = vsub.f32 %v1029, %v1551
    %v4058 = vsub.f32 %v1034, %v1552
    %v4059 = vsub.f32 %v1037, %v1553
    %v4060 = vsub.f32 %v1042, %v1554
    %v4061 = vsub.f32 %v1045, %v1555
    %v4062 = vsub.f32 %v1050, %v1556
    %v4063 = vsub.f32 %v1053, %v1557
    %v4064 = vsub.f32 %v1058, %v1558
    %v4065 = vsub.f32 %v1061, %v1559
    %v4066 = vsub.f32 %v1066, %v1560
    %v4067 = vsub.f32 %v1069, %v1561
    %v4068 = vsub.f32 %v1074, %v1562
    %v4069 = vsub.f32 %v1077, %v1563
    %v4070 = vsub.f32 %v1082, %v1564
    %v4071 = vsub.f32 %v1085, %v1565
    %v4072 = vsub.f32 %v1090, %v1566
    %v4073 = vsub.f32 %v1093, %v1567
    %v4074 = vsub.f32 %v1098, %v1568
    %v4075 = vsub.f32 %v1101, %v1569
    %v4076 = vsub.f32 %v1106, %v1570
    %v4077 = vsub.f32 %v1109, %v1571
    %v4078 = vsub.f32 %v1114, %v1572
    %v4079 = vsub.f32 %v1117, %v1573
    %v4080 = vsub.f32 %v1122, %v1574
    %v4081 = vsub.f32 %v1125, %v1575
    %v4082 = vand.u32 2147483647, %v4018
    %v4083 = vand.u32 2147483647, %v4019
    %v4084 = vand.u32 2147483647, %v4020
    %v4085 = vand.u32 2147483647, %v4021
    %v4086 = vand.u32 2147483647, %v4022
    %v4087 = vand.u32 2147483647, %v4023
    %v4088 = vand.u32 2147483647, %v4024
    %v4089 = vand.u32 2147483647, %v4025
    %v4090 = vand.u32 2147483647, %v4026
    %v4091 = vand.u32 2147483647, %v4027
    %v4092 = vand.u32 2147483647, %v4028
    %v4093 = vand.u32 2147483647, %v4029
    %v4094 = vand.u32 2147483647, %v4030
    %v4095 = vand.u32 2147483647, %v4031
    %v4096 = vand.u32 2147483647, %v4032
    %v4097 = vand.u32 2147483647, %v4033
    %v4098 = vand.u32 2147483647, %v4034
    %v4099 = vand.u32 2147483647, %v4035
    %v4100 = vand.u32 2147483647, %v4036
    %v4101 = vand.u32 2147483647, %v4037
    %v4102 = vand.u32 2147483647, %v4038
    %v4103 = vand.u32 2147483647, %v4039
    %v4104 = vand.u32 2147483647, %v4040
    %v4105 = vand.u32 2147483647, %v4041
    %v4106 = vand.u32 2147483647, %v4042
    %v4107 = vand.u32 2147483647, %v4043
    %v4108 = vand.u32 2147483647, %v4044
    %v4109 = vand.u32 2147483647, %v4045
    %v4110 = vand.u32 2147483647, %v4046
    %v4111 = vand.u32 2147483647, %v4047
    %v4112 = vand.u32 2147483647, %v4048
    %v4113 = vand.u32 2147483647, %v4049
    %v4114 = vand.u32 2147483647, %v4050
    %v4115 = vand.u32 2147483647, %v4051
    %v4116 = vand.u32 2147483647, %v4052
    %v4117 = vand.u32 2147483647, %v4053
    %v4118 = vand.u32 2147483647, %v4054
    %v4119 = vand.u32 2147483647, %v4055
    %v4120 = vand.u32 2147483647, %v4056
    %v4121 = vand.u32 2147483647, %v4057
    %v4122 = vand.u32 2147483647, %v4058
    %v4123 = vand.u32 2147483647, %v4059
    %v4124 = vand.u32 2147483647, %v4060
    %v4125 = vand.u32 2147483647, %v4061
    %v4126 = vand.u32 2147483647, %v4062
    %v4127 = vand.u32 2147483647, %v4063
    %v4128 = vand.u32 2147483647, %v4064
    %v4129 = vand.u32 2147483647, %v4065
    %v4130 = vand.u32 2147483647, %v4066
    %v4131 = vand.u32 2147483647, %v4067
    %v4132 = vand.u32 2147483647, %v4068
    %v4133 = vand.u32 2147483647, %v4069
    %v4134 = vand.u32 2147483647, %v4070
    %v4135 = vand.u32 2147483647, %v4071
    %v4136 = vand.u32 2147483647, %v4072
    %v4137 = vand.u32 2147483647, %v4073
    %v4138 = vand.u32 2147483647, %v4074
    %v4139 = vand.u32 2147483647, %v4075
    %v4140 = vand.u32 2147483647, %v4076
    %v4141 = vand.u32 2147483647, %v4077
    %v4142 = vand.u32 2147483647, %v4078
    %v4143 = vand.u32 2147483647, %v4079
    %v4144 = vand.u32 2147483647, %v4080
    %v4145 = vand.u32 2147483647, %v4081
    %v4146 = vmul.f32 %v4082, %v3954
    %v4147 = vmul.f32 %v4083, %v3955
    %v4148 = vmul.f32 %v4084, %v3956
    %v4149 = vmul.f32 %v4085, %v3957
    %v4150 = vmul.f32 %v4086, %v3958
    %v4151 = vmul.f32 %v4087, %v3959
    %v4152 = vmul.f32 %v4088, %v3960
    %v4153 = vmul.f32 %v4089, %v3961
    %v4154 = vmul.f32 %v4090, %v3962
    %v4155 = vmul.f32 %v4091, %v3963
    %v4156 = vmul.f32 %v4092, %v3964
    %v4157 = vmul.f32 %v4093, %v3965
    %v4158 = vmul.f32 %v4094, %v3966
    %v4159 = vmul.f32 %v4095, %v3967
    %v4160 = vmul.f32 %v4096, %v3968
    %v4161 = vmul.f32 %v4097, %v3969
    %v4162 = vmul.f32 %v4098, %v3970
    %v4163 = vmul.f32 %v4099, %v3971
    %v4164 = vmul.f32 %v4100, %v3972
    %v4165 = vmul.f32 %v4101, %v3973
    %v4166 = vmul.f32 %v4102, %v3974
    %v4167 = vmul.f32 %v4103, %v3975
    %v4168 = vmul.f32 %v4104, %v3976
    %v4169 = vmul.f32 %v4105, %v3977
    %v4170 = vmul.f32 %v4106, %v3978
    %v4171 = vmul.f32 %v4107, %v3979
    %v4172 = vmul.f32 %v4108, %v3980
    %v4173 = vmul.f32 %v4109, %v3981
    %v4174 = vmul.f32 %v4110, %v3982
    %v4175 = vmul.f32 %v4111, %v3983
    %v4176 = vmul.f32 %v4112, %v3984
    %v4177 = vmul.f32 %v4113, %v3985
    %v4178 = vmul.f32 %v4114, %v3986
    %v4179 = vmul.f32 %v4115, %v3987
    %v4180 = vmul.f32 %v4116, %v3988
    %v4181 = vmul.f32 %v4117, %v3989
    %v4182 = vmul.f32 %v4118, %v3990
    %v4183 = vmul.f32 %v4119, %v3991
    %v4184 = vmul.f32 %v4120, %v3992
    %v4185 = vmul.f32 %v4121, %v3993
    %v4186 = vmul.f32 %v4122, %v3994
    %v4187 = vmul.f32 %v4123, %v3995
    %v4188 = vmul.f32 %v4124, %v3996
    %v4189 = vmul.f32 %v4125, %v3997
    %v4190 = vmul.f32 %v4126, %v3998
    %v4191 = vmul.f32 %v4127, %v3999
    %v4192 = vmul.f32 %v4128, %v4000
    %v4193 = vmul.f32 %v4129, %v4001
    %v4194 = vmul.f32 %v4130, %v4002
    %v4195 = vmul.f32 %v4131, %v4003
    %v4196 = vmul.f32 %v4132, %v4004
    %v4197 = vmul.f32 %v4133, %v4005
    %v4198 = vmul.f32 %v4134, %v4006
    %v4199 = vmul.f32 %v4135, %v4007
    %v4200 = vmul.f32 %v4136, %v4008
    %v4201 = vmul.f32 %v4137, %v4009
    %v4202 = vmul.f32 %v4138, %v4010
    %v4203 = vmul.f32 %v4139, %v4011
    %v4204 = vmul.f32 %v4140, %v4012
    %v4205 = vmul.f32 %v4141, %v4013
    %v4206 = vmul.f32 %v4142, %v4014
    %v4207 = vmul.f32 %v4143, %v4015
    %v4208 = vmul.f32 %v4144, %v4016
    %v4209 = vmul.f32 %v4145, %v4017
    %v4210 = vadd.f32 %v3506, %v3507
    %v4211 = vadd.f32 %v4210, %v3508
    %v4212 = vadd.f32 %v4211, %v3509
    %v4213 = vadd.f32 %v4212, %v3510
    %v4214 = vadd.f32 %v4213, %v3511
    %v4215 = vadd.f32 %v4214, %v3512
    %v4216 = vadd.f32 %v4215, %v3513
    %v4217 = vadd.f32 %v4216, %v3514
    %v4218 = vadd.f32 %v4217, %v3515
    %v4219 = vadd.f32 %v4218, %v3516
    %v4220 = vadd.f32 %v4219, %v3517
    %v4221 = vadd.f32 %v4220, %v3518
    %v4222 = vadd.f32 %v4221, %v3519
    %v4223 = vadd.f32 %v4222, %v3520
    %v4224 = vadd.f32 %v4223, %v3521
    %v4225 = vadd.f32 %v4224, %v3522
    %v4226 = vadd.f32 %v4225, %v3523
    %v4227 = vadd.f32 %v4226, %v3524
    %v4228 = vadd.f32 %v4227, %v3525
    %v4229 = vadd.f32 %v4228, %v3526
    %v4230 = vadd.f32 %v4229, %v3527
    %v4231 = vadd.f32 %v4230, %v3528
    %v4232 = vadd.f32 %v4231, %v3529
    %v4233 = vadd.f32 %v4232, %v3530
    %v4234 = vadd.f32 %v4233, %v3531
    %v4235 = vadd.f32 %v4234, %v3532
    %v4236 = vadd.f32 %v4235, %v3533
    %v4237 = vadd.f32 %v4236, %v3534
    %v4238 = vadd.f32 %v4237, %v3535
    %v4239 = vadd.f32 %v4238, %v3536
    %v4240 = vadd.f32 %v4239, %v3537
    %v4241 = vadd.f32 %v4240, %v3538
    %v4242 = vadd.f32 %v4241, %v3539
    %v4243 = vadd.f32 %v4242, %v3540
    %v4244 = vadd.f32 %v4243, %v3541
    %v4245 = vadd.f32 %v4244, %v3542
    %v4246 = vadd.f32 %v4245, %v3543
    %v4247 = vadd.f32 %v4246, %v3544
    %v4248 = vadd.f32 %v4247, %v3545
    %v4249 = vadd.f32 %v4248, %v3546
    %v4250 = vadd.f32 %v4249, %v3547
    %v4251 = vadd.f32 %v4250, %v3548
    %v4252 = vadd.f32 %v4251, %v3549
    %v4253 = vadd.f32 %v4252, %v3550
    %v4254 = vadd.f32 %v4253, %v3551
    %v4255 = vadd.f32 %v4254, %v3552
    %v4256 = vadd.f32 %v4255, %v3553
    %v4257 = vadd.f32 %v4256, %v3554
    %v4258 = vadd.f32 %v4257, %v3555
    %v4259 = vadd.f32 %v4258, %v3556
    %v4260 = vadd.f32 %v4259, %v3557
    %v4261 = vadd.f32 %v4260, %v3558
    %v4262 = vadd.f32 %v4261, %v3559
    %v4263 = vadd.f32 %v4262, %v3560
    %v4264 = vadd.f32 %v4263, %v3561
    %v4265 = vadd.f32 %v4264, %v3562
    %v4266 = vadd.f32 %v4265, %v3563
    %v4267 = vadd.f32 %v4266, %v3564
    %v4268 = vadd.f32 %v4267, %v3565
    %v4269 = vadd.f32 %v4268, %v3566
    %v4270 = vadd.f32 %v4269, %v3567
    %v4271 = vadd.f32 %v4270, %v3568
    %v4272 = vadd.f32 %v4271, %v3569
    %v4273 = vrot.slane %v4272, 4
    %v4274 = vadd.f32 %v4272, %v4273
    %v4275 = vrot.slane %v4274, 2
    %v4276 = vadd.f32 %v4274, %v4275
    %v4277 = vrot.slane %v4276, 1
    %v4278 = vadd.f32 %v4276, %v4277
    %v4279 = vadd.f32 %v4146, %v4147
    %v4280 = vadd.f32 %v4279, %v4148
    %v4281 = vadd.f32 %v4280, %v4149
    %v4282 = vadd.f32 %v4281, %v4150
    %v4283 = vadd.f32 %v4282, %v4151
    %v4284 = vadd.f32 %v4283, %v4152
    %v4285 = vadd.f32 %v4284, %v4153
    %v4286 = vadd.f32 %v4285, %v4154
    %v4287 = vadd.f32 %v4286, %v4155
    %v4288 = vadd.f32 %v4287, %v4156
    %v4289 = vadd.f32 %v4288, %v4157
    %v4290 = vadd.f32 %v4289, %v4158
    %v4291 = vadd.f32 %v4290, %v4159
    %v4292 = vadd.f32 %v4291, %v4160
    %v4293 = vadd.f32 %v4292, %v4161
    %v4294 = vadd.f32 %v4293, %v4162
    %v4295 = vadd.f32 %v4294, %v4163
    %v4296 = vadd.f32 %v4295, %v4164
    %v4297 = vadd.f32 %v4296, %v4165
    %v4298 = vadd.f32 %v4297, %v4166
    %v4299 = vadd.f32 %v4298, %v4167
    %v4300 = vadd.f32 %v4299, %v4168
    %v4301 = vadd.f32 %v4300, %v4169
    %v4302 = vadd.f32 %v4301, %v4170
    %v4303 = vadd.f32 %v4302, %v4171
    %v4304 = vadd.f32 %v4303, %v4172
    %v4305 = vadd.f32 %v4304, %v4173
    %v4306 = vadd.f32 %v4305, %v4174
    %v4307 = vadd.f32 %v4306, %v4175
    %v4308 = vadd.f32 %v4307, %v4176
    %v4309 = vadd.f32 %v4308, %v4177
    %v4310 = vadd.f32 %v4309, %v4178
    %v4311 = vadd.f32 %v4310, %v4179
    %v4312 = vadd.f32 %v4311, %v4180
    %v4313 = vadd.f32 %v4312, %v4181
    %v4314 = vadd.f32 %v4313, %v4182
    %v4315 = vadd.f32 %v4314, %v4183
    %v4316 = vadd.f32 %v4315, %v4184
    %v4317 = vadd.f32 %v4316, %v4185
    %v4318 = vadd.f32 %v4317, %v4186
    %v4319 = vadd.f32 %v4318, %v4187
    %v4320 = vadd.f32 %v4319, %v4188
    %v4321 = vadd.f32 %v4320, %v4189
    %v4322 = vadd.f32 %v4321, %v4190
    %v4323 = vadd.f32 %v4322, %v4191
    %v4324 = vadd.f32 %v4323, %v4192
    %v4325 = vadd.f32 %v4324, %v4193
    %v4326 = vadd.f32 %v4325, %v4194
    %v4327 = vadd.f32 %v4326, %v4195
    %v4328 = vadd.f32 %v4327, %v4196
    %v4329 = vadd.f32 %v4328, %v4197
    %v4330 = vadd.f32 %v4329, %v4198
    %v4331 = vadd.f32 %v4330, %v4199
    %v4332 = vadd.f32 %v4331, %v4200
    %v4333 = vadd.f32 %v4332, %v4201
    %v4334 = vadd.f32 %v4333, %v4202
    %v4335 = vadd.f32 %v4334, %v4203
    %v4336 = vadd.f32 %v4335, %v4204
    %v4337 = vadd.f32 %v4336, %v4205
    %v4338 = vadd.f32 %v4337, %v4206
    %v4339 = vadd.f32 %v4338, %v4207
    %v4340 = vadd.f32 %v4339, %v4208
    %v4341 = vadd.f32 %v4340, %v4209
    %v4342 = vrot.slane %v4341, 4
    %v4343 = vadd.f32 %v4341, %v4342
    %v4344 = vrot.slane %v4343, 2
    %v4345 = vadd.f32 %v4343, %v4344
    %v4346 = vrot.slane %v4345, 1
    %v4347 = vadd.f32 %v4345, %v4346
    %vm4348 = vcmask 1040384
    %v4349 = vsel %vm4348, %v4278, %v4347
    %v4350 = vsel %vm379, %v4349, 0.0
    %4351 = vst [vmem:[#allocation4] sm:$0xff] %v4350
    // Predicated region
    $region30: #{tpu_custom_call.1} parent=1 // pred_check
      _
    $region31: #{tpu_custom_call.1} parent=1 // pred_check_branch
      %4353 = sbr.rel (0) target = $region33
    $region32: #{tpu_custom_call.1} parent=1 // pred_region
      %s4355 = ssub.s32 4096, 4096
      %4356 = vsyncadd [#allocation3], %s4355
      %s4357 = sshll.u32 [#allocation2], 4
      %s4358 = int_to_ptr.vmem [resolvable:$true] %s4357
      %4363 = dma.vmem_to_hbm [thread:$0]  %s4358, 4096, %s7, [#allocation3], 64, 64, 4
    $region33: #{tpu_custom_call.1} parent=1 // pred_fallthru
      _
    // Predicated region
    $region34: #{tpu_custom_call.1} parent=1 // pred_check
      _
    $region35: #{tpu_custom_call.1} parent=1 // pred_check_branch
      %4365 = sbr.rel (0) target = $region37
    $region36: #{tpu_custom_call.1} parent=1 // pred_region
      %s4367 = ssub.s32 128, 128
      %4368 = vsyncadd [#allocation5], %s4367
      %s4370 = sshll.u32 [#allocation4], 4
      %s4371 = int_to_ptr.vmem [resolvable:$true] %s4370
      %4373 = dma.vmem_to_hbm [thread:$0]  %s4371, 128, %s8, [#allocation5]
    $region37: #{tpu_custom_call.1} parent=1 // pred_fallthru
      _
    // Predicated region
    $region38: #{tpu_custom_call.1} parent=1 // pred_check
      _
    $region39: #{tpu_custom_call.1} parent=1 // pred_check_branch
      %4375 = sbr.rel (0) target = $region41
    $region40: #{tpu_custom_call.1} parent=1 // pred_region
      %4376 = dma.done [#allocation3], 4096
    $region41: #{tpu_custom_call.1} parent=1 // pred_fallthru
      _
    // Predicated region
    $region42: #{tpu_custom_call.1} parent=1 // pred_check
      _
    $region43: #{tpu_custom_call.1} parent=1 // pred_check_branch
      %4378 = sbr.rel (0) target = $region45
    $region44: #{tpu_custom_call.1} parent=1 // pred_region
      %4379 = dma.done [#allocation5], 128
    $region45: #{tpu_custom_call.1} parent=1 // pred_fallthru
      _
    %4380 = vsyncpa [#allocation3], 1
    %4381 = vsyncpa [#allocation5], 1

</llo_original>
